<compile_context>
chip_gen: v7x
topology: tpu7x:2x2x1
jax: 0.10.0
libtpu: 0.0.40
codegen_flags: <defaults>
</compile_context>

<pallas_src>
import functools
import numpy as np

import jax
import jax.numpy as jnp
from jax.experimental import pallas as pl
from jax.experimental.pallas import tpu as pltpu


LEAKY_SLOPE = 0.2
BN_EPS = 1e-5


def _detect_vmem_bytes():
    """Physical VMEM per TensorCore; conservative default if undetectable."""
    try:
        info = pltpu.get_tpu_info()
        for name in ("vmem_capacity_bytes", "vmem_size_bytes", "vmem_bytes"):
            v = getattr(info, name, None)
            if v:
                return int(v)
    except Exception:
        pass
    return 64 * 1024 * 1024      # v7x per-TC VMEM (smallest of v5e/v6e/v7x)


_VMEM_PHYS = _detect_vmem_bytes()
VMEM_LIMIT_BYTES = min(int(_VMEM_PHYS * 0.75), 100 * 1024 * 1024)
TILE_VMEM_BUDGET = min(int(_VMEM_PHYS * 0.42), 64 * 1024 * 1024)
MAX_W_TILE_BYTES = 8 * 1024 * 1024     # per-buffer weight-tile cap (v7x-safe)


# ----------------------------------------------------------------------------
# Generic Pallas kernels: out = leaky_relu((x @ w) * scale + shift, 0.2)
# ----------------------------------------------------------------------------
def _matmul_acc_kernel(x_ref, w_ref, scale_ref, shift_ref, o_ref, acc_ref):
    k = pl.program_id(2)

    @pl.when(k == 0)
    def _():
        acc_ref[...] = jnp.zeros_like(acc_ref)

    acc_ref[...] += jnp.dot(x_ref[...], w_ref[...],
                            preferred_element_type=jnp.float32)

    @pl.when(k == pl.num_programs(2) - 1)
    def _():
        y = acc_ref[...] * scale_ref[...] + shift_ref[...]
        o_ref[...] = jnp.where(y >= 0, y, LEAKY_SLOPE * y).astype(o_ref.dtype)


def _matmul_single_kernel(x_ref, w_ref, scale_ref, shift_ref, o_ref):
    # Fast path (K grid == 1): no zero-fill / read-back of an acc scratch.
    y = jnp.dot(x_ref[...], w_ref[...], preferred_element_type=jnp.float32)
    y = y * scale_ref[...] + shift_ref[...]
    o_ref[...] = jnp.where(y >= 0, y, LEAKY_SLOPE * y).astype(o_ref.dtype)


def _pick_divisor(dim, candidates):
    for c in candidates:
        if c <= dim and dim % c == 0:
            return c
    return dim


def _choose_tiles(M, K, N, max_w_tile_bytes):
    """Joint VMEM-budget tile choice (bf16 operands, f32 accumulator)."""
    tm = _pick_divisor(M, [1024, 512, 256, 128, 64, 32, 16, 8])
    tn = _pick_divisor(N, [512, 384, 256, 128]) if N >= 128 else N
    # Give the second TensorCore (v7x) work when M and N would otherwise be a
    # single block (late encoders / FCs).  Neutral on single-TC v5e/v6e.
    if M // tm == 1 and N // tn == 1 and N >= 256 and (N // 2) % 128 == 0:
        tn = N // 2

    def vmem_bytes(tk):
        # 2x double-buffered bf16 x / w / out tiles + f32 acc + scale/shift.
        return (2 * tm * tk * 2 + 2 * tk * tn * 2 + 2 * tm * tn * 2
                + tm * tn * 4 + 8 * tn * 4)

    def w_tile_ok(tk):
        return tk * tn * 2 <= max_w_tile_bytes

    if vmem_bytes(K) <= TILE_VMEM_BUDGET and w_tile_ok(K):
        return tm, tn, K
    tk = None
    for c in range((K // 128) * 128, 0, -128):
        if K % c == 0 and vmem_bytes(c) <= TILE_VMEM_BUDGET and w_tile_ok(c):
            tk = c
            break
    if tk is None:
        tk = 128 if K % 128 == 0 else K
    return tm, tn, tk


def matmul_affine_lrelu(x, w, scale, shift, out_dtype=jnp.bfloat16,
                        max_w_tile_bytes=MAX_W_TILE_BYTES):
    """x: (M, K)  w: (K, N)  scale/shift: (N,)  ->  (M, N) out_dtype."""
    x = x.astype(jnp.bfloat16)
    w = w.astype(jnp.bfloat16)
    M, K = x.shape
    K2, N = w.shape
    assert K == K2
    tm, tn, tk = _choose_tiles(M, K, N, max_w_tile_bytes)
    scale2 = scale.reshape(1, N).astype(jnp.float32)
    shift2 = shift.reshape(1, N).astype(jnp.float32)
    nk = K // tk

    if nk == 1:
        return pl.pallas_call(
            _matmul_single_kernel,
            out_shape=jax.ShapeDtypeStruct((M, N), out_dtype),
            grid_spec=pltpu.PrefetchScalarGridSpec(
                num_scalar_prefetch=0,
                grid=(M // tm, N // tn),
                in_specs=[
                    pl.BlockSpec((tm, tk), lambda i, j: (i, 0)),
                    pl.BlockSpec((tk, tn), lambda i, j: (0, j)),
                    pl.BlockSpec((1, tn), lambda i, j: (0, j)),
                    pl.BlockSpec((1, tn), lambda i, j: (0, j)),
                ],
                out_specs=pl.BlockSpec((tm, tn), lambda i, j: (i, j)),
            ),
            compiler_params=pltpu.CompilerParams(
                dimension_semantics=("parallel", "parallel"),
                vmem_limit_bytes=VMEM_LIMIT_BYTES,
            ),
        )(x, w, scale2, shift2)

    return pl.pallas_call(
        _matmul_acc_kernel,
        out_shape=jax.ShapeDtypeStruct((M, N), out_dtype),
        grid_spec=pltpu.PrefetchScalarGridSpec(
            num_scalar_prefetch=0,
            grid=(M // tm, N // tn, nk),
            in_specs=[
                pl.BlockSpec((tm, tk), lambda i, j, k: (i, k)),
                pl.BlockSpec((tk, tn), lambda i, j, k: (k, j)),
                pl.BlockSpec((1, tn), lambda i, j, k: (0, j)),
                pl.BlockSpec((1, tn), lambda i, j, k: (0, j)),
            ],
            out_specs=pl.BlockSpec((tm, tn), lambda i, j, k: (i, j)),
            scratch_shapes=[pltpu.VMEM((tm, tn), jnp.float32)],
        ),
        compiler_params=pltpu.CompilerParams(
            dimension_semantics=("parallel", "parallel", "arbitrary"),
            vmem_limit_bytes=VMEM_LIMIT_BYTES,
        ),
    )(x, w, scale2, shift2)


# ----------------------------------------------------------------------------
# Fused conv kernel: Conv2d(3x3, pad=1, stride=(2, sw)) + BN(inference) + LReLU.
#
# The padded activation is reshaped (free) to (N, OH+1, 2, Ws, Cin) row pairs.
# Per grid step the kernel sees T pairs (main) + 1 pair (halo = the next even
# padded row needed by the kh==2 taps of the last output row).  Tap (kh, kw):
#   kh==0 -> even rows  xm[:, 0]         kh==1 -> odd rows  xm[:, 1]
#   kh==2 -> even rows of pairs 1..T-1 (+ halo pair for the last output row)
# Column offsets col_off[kw] select the kw window (for stride_w==2 the slab is
# column-parity packed so all three windows stay contiguous).
# ----------------------------------------------------------------------------
def _conv_down_kernel(xm_ref, xh_ref, w_ref, scale_ref, shift_ref, o_ref,
                      acc_ref, *, T, OW, cin, col_off):
    # xm_ref: (T, 2, Ws, cin)   xh_ref: (1, 2, Ws, cin)
    # w_ref : (9*cin, cout) in (kh, kw, cin) row order
    # acc_ref: (T*OW, cout) f32 scratch
    def wtap(i, j):
        base = (3 * i + j) * cin
        return w_ref[base:base + cin, :]

    # kh == 0 (even rows 2t) and kh == 1 (odd rows 2t+1): fully inside the block.
    for i in (0, 1):
        s = None
        for j in range(3):
            src = xm_ref[:, i, pl.ds(col_off[j], OW), :].reshape(T * OW, cin)
            d = jnp.dot(src, wtap(i, j), preferred_element_type=jnp.float32)
            s = d if s is None else s + d
        if i == 0:
            acc_ref[...] = s
        else:
            acc_ref[...] += s

    # kh == 2 (even rows 2t+2): pairs 1..T-1 of this block ...
    if T > 1:
        s = None
        for j in range(3):
            src = xm_ref[pl.ds(1, T - 1), 0, pl.ds(col_off[j], OW), :]
            src = src.reshape((T - 1) * OW, cin)
            d = jnp.dot(src, wtap(2, j), preferred_element_type=jnp.float32)
            s = d if s is None else s + d
        acc_ref[pl.ds(0, (T - 1) * OW), :] += s
    # ... plus the halo pair's even row for the last output row of the block.
    s = None
    for j in range(3):
        src = xh_ref[0, 0, pl.ds(col_off[j], OW), :]
        d = jnp.dot(src, wtap(2, j), preferred_element_type=jnp.float32)
        s = d if s is None else s + d
    acc_ref[pl.ds((T - 1) * OW, OW), :] += s

    y = acc_ref[...] * scale_ref[...] + shift_ref[...]
    y = jnp.where(y >= 0, y, LEAKY_SLOPE * y)
    o_ref[...] = y.astype(o_ref.dtype)


def conv3x3_down_bn_lrelu(x, w, scale, shift, stride_w):
    """Fused Conv2d(3x3, pad=1, stride=(2, stride_w)) + folded BN + LeakyReLU(0.2).

    x: (N, H, W, Cin) NHWC (H even, W % stride_w == 0), w: (9*Cin, Cout).
    Returns (N, H//2, W//stride_w, Cout) bf16.
    """
    x = x.astype(jnp.bfloat16)
    w = w.astype(jnp.bfloat16)
    N, H, W, C = x.shape
    Cout = w.shape[1]
    assert w.shape[0] == 9 * C
    assert H % 2 == 0 and W % stride_w == 0
    OH, OW = H // 2, W // stride_w
    Ws = W + 2

    cands = [t for t in (64, 32, 16, 8, 4, 2, 1) if t <= max(OH // 2, 1)]
    T = _pick_divisor(OH, cands)
    assert OH % T == 0
    NB = OH // T

    # Pad once (the only extra XLA pass for stride_w == 1).
    xp = jnp.pad(x, ((0, 0), (1, 1), (1, 1), (0, 0)))       # (N, 2*OH+2, W+2, C)
    if stride_w == 1:
        slab = xp
        col_off = (0, 1, 2)
    else:
        # Column-parity pack (one cheap pass over this small layer's activation)
        # so the stride-2 kw windows become contiguous slices of the slab.
        slab = jnp.concatenate([xp[:, :, 0::2, :], xp[:, :, 1::2, :]], axis=2)
        col_off = (0, OW + 1, 1)
    slab = slab.reshape(N, OH + 1, 2, Ws, C)                 # free: row pairs

    scale2 = scale.reshape(1, Cout).astype(jnp.float32)
    shift2 = shift.reshape(1, Cout).astype(jnp.float32)

    kern = functools.partial(_conv_down_kernel, T=T, OW=OW, cin=C,
                             col_off=col_off)
    out = pl.pallas_call(
        kern,
        out_shape=jax.ShapeDtypeStruct((N * NB, T * OW, Cout), jnp.bfloat16),
        grid_spec=pltpu.PrefetchScalarGridSpec(
            num_scalar_prefetch=0,
            grid=(N, NB),
            in_specs=[
                # main: T padded-row pairs [T*b, T*(b+1))
                pl.BlockSpec((pl.Squeezed(), T, 2, Ws, C),
                             lambda n, b: (n, b, 0, 0, 0)),
                # halo: pair T*(b+1) (its even row feeds the last kh==2 tap)
                pl.BlockSpec((pl.Squeezed(), 1, 2, Ws, C),
                             lambda n, b: (n, T * (b + 1), 0, 0, 0)),
                pl.BlockSpec((9 * C, Cout), lambda n, b: (0, 0)),
                pl.BlockSpec((1, Cout), lambda n, b: (0, 0)),
                pl.BlockSpec((1, Cout), lambda n, b: (0, 0)),
            ],
            out_specs=pl.BlockSpec((pl.Squeezed(), T * OW, Cout),
                                   lambda n, b: (n * NB + b, 0, 0)),
            scratch_shapes=[pltpu.VMEM((T * OW, Cout), jnp.float32)],
        ),
        compiler_params=pltpu.CompilerParams(
            dimension_semantics=("parallel", "parallel"),
            vmem_limit_bytes=VMEM_LIMIT_BYTES,
        ),
    )(slab, slab, w, scale2, shift2)
    return out.reshape(N, OH, OW, Cout)


# ----------------------------------------------------------------------------
# Glue: im2col (pad + strided slicing only), NHWC.  Only used for the small
# late layers (enc5-enc8) where the patch tensor is a few MiB in bf16.
# Column order is (kh, kw, cin), matching w reshaped from (KH, KW, Cin, Cout).
# ----------------------------------------------------------------------------
def im2col(x_nhwc, ksize, stride, padding):
    kh, kw = ksize
    sh, sw = stride
    ph, pw = padding
    n, h, w, c = x_nhwc.shape
    xp = jnp.pad(x_nhwc, ((0, 0), (ph, ph), (pw, pw), (0, 0)))
    oh = (h + 2 * ph - kh) // sh + 1
    ow = (w + 2 * pw - kw) // sw + 1
    cols = []
    for i in range(kh):
        for j in range(kw):
            cols.append(xp[:, i:i + (oh - 1) * sh + 1:sh,
                           j:j + (ow - 1) * sw + 1:sw, :])
    patches = jnp.concatenate(cols, axis=-1)           # (N, OH, OW, KH*KW*C)
    return patches.reshape(n * oh * ow, kh * kw * c), (n, oh, ow)


# ----------------------------------------------------------------------------
# Architecture (exactly the PyTorch module's shapes)
#   (Cin, Cout, kernel, padding, stride)
# ----------------------------------------------------------------------------
CONV_CFG = [
    (64,    64, (3, 3), (1, 1), (2, 1)),   # enc1  (fused conv kernel)
    (64,   128, (3, 3), (1, 1), (2, 1)),   # enc2  (fused conv kernel)
    (128,  128, (3, 3), (1, 1), (2, 1)),   # enc3  (fused conv kernel)
    (128,  256, (3, 3), (1, 1), (2, 2)),   # enc4  (fused conv kernel)
    (256,  512, (3, 3), (1, 1), (2, 2)),   # enc5  (im2col + matmul kernel)
    (512,  512, (3, 3), (1, 1), (2, 2)),   # enc6
    (512, 1024, (3, 3), (1, 1), (2, 2)),   # enc7
    (1024, 1024, (3, 4), (1, 1), (2, 2)),  # enc8
]
FC_CFG = [(16384, 1024), (1024, 1024)]     # fc1, fc2


def init_params(key):
    params = {"conv": [], "fc": []}
    for (cin, cout, (kh, kw), _, _) in CONV_CFG:
        key, k1, k2, k3, k4, k5, k6 = jax.random.split(key, 7)
        fan_in = kh * kw * cin
        w = jax.random.normal(k1, (kh, kw, cin, cout), jnp.float32) / np.sqrt(fan_in)
        b_conv = 0.01 * jax.random.normal(k2, (cout,), jnp.float32)
        gamma = 1.0 + 0.1 * jax.random.normal(k3, (cout,), jnp.float32)
        beta = 0.1 * jax.random.normal(k4, (cout,), jnp.float32)
        r_mean = 0.1 * jax.random.normal(k5, (cout,), jnp.float32)
        r_var = 1.0 + 0.1 * jnp.abs(jax.random.normal(k6, (cout,), jnp.float32))
        scale = gamma / jnp.sqrt(r_var + BN_EPS)
        shift = (b_conv - r_mean) * scale + beta
        params["conv"].append(
            (w.reshape(kh * kw * cin, cout).astype(jnp.bfloat16), scale, shift))
    for (cin, cout) in FC_CFG:
        key, k1, k2 = jax.random.split(key, 3)
        w = jax.random.normal(k1, (cin, cout), jnp.float32) / np.sqrt(cin)
        b = 0.01 * jax.random.normal(k2, (cout,), jnp.float32)
        params["fc"].append((w.astype(jnp.bfloat16),
                             jnp.ones((cout,), jnp.float32), b))
    return params


def spectrogram_encoder_forward(params, x_nchw):
    # NCHW -> NHWC, bf16 activations throughout (f32 accumulation in-kernel).
    x = jnp.transpose(x_nchw, (0, 2, 3, 1)).astype(jnp.bfloat16)
    for idx, ((cin, cout, ksize, pad, stride), (w, scale, shift)) in enumerate(
            zip(CONV_CFG, params["conv"])):
        if (idx < 4 and ksize == (3, 3) and pad == (1, 1)
                and stride[0] == 2 and stride[1] in (1, 2)
                and x.shape[1] % 2 == 0 and x.shape[2] % stride[1] == 0):
            x = conv3x3_down_bn_lrelu(x, w, scale, shift, stride[1])
        else:
            cols, (n, oh, ow) = im2col(x, ksize, stride, pad)
            y = matmul_affine_lrelu(cols, w, scale, shift, out_dtype=jnp.bfloat16)
            x = y.reshape(n, oh, ow, cout)
    # torch.flatten(x, 1) flattens in NCHW order (C, H, W)
    flat = jnp.transpose(x, (0, 3, 1, 2)).reshape(x.shape[0], -1)   # (N, 16384)
    (w1, s1, b1), (w2, s2, b2) = params["fc"]
    flat = matmul_affine_lrelu(flat, w1, s1, b1, out_dtype=jnp.bfloat16)
    flat = matmul_affine_lrelu(flat, w2, s2, b2, out_dtype=jnp.float32)
    return flat                                                     # (N, 1024)


# ----------------------------------------------------------------------------
# Small-shape correctness checks (run before the full model).
# ----------------------------------------------------------------------------
def _conv_reference(x, w4, scale, shift, stride):
    ref = jax.lax.conv_general_dilated(
        x.astype(jnp.float32), w4.astype(jnp.float32),
        window_strides=stride, padding=((1, 1), (1, 1)),
        dimension_numbers=("NHWC", "HWIO", "NHWC"))
    ref = ref * scale + shift
    return jnp.where(ref >= 0, ref, LEAKY_SLOPE * ref)


def _verify_fused_conv():
    key = jax.random.PRNGKey(42)
    for (stride_w, cin, cout) in [(1, 16, 64), (2, 16, 128)]:
        key, kx, kw = jax.random.split(key, 3)
        N, H, W = 1, 32, 16
        x = jax.random.normal(kx, (N, H, W, cin), jnp.float32).astype(jnp.bfloat16)
        w4 = (0.2 * jax.random.normal(kw, (3, 3, cin, cout), jnp.float32)
              ).astype(jnp.bfloat16)
        scale = jnp.full((cout,), 1.1, jnp.float32)
        shift = jnp.full((cout,), 0.05, jnp.float32)
        got = conv3x3_down_bn_lrelu(x, w4.reshape(9 * cin, cout), scale, shift,
                                    stride_w)
        ref = _conv_reference(x, w4, scale, shift, (2, stride_w))
        err = (jnp.max(jnp.abs(got.astype(jnp.float32) - ref))
               / (jnp.max(jnp.abs(ref)) + 1e-6))
        assert float(err) < 3e-2, f"fused conv (sw={stride_w}) rel err {float(err)}"


def _verify_matmul():
    # Forces the K-split accumulator path with a tiny weight-tile cap.
    key = jax.random.PRNGKey(7)
    kx, kw, kb = jax.random.split(key, 3)
    M, K, N = 64, 1024, 256
    x = jax.random.normal(kx, (M, K), jnp.float32).astype(jnp.bfloat16)
    w = (jax.random.normal(kw, (K, N), jnp.float32) / np.sqrt(K)).astype(jnp.bfloat16)
    s = jnp.ones((N,), jnp.float32)
    b = 0.1 * jax.random.normal(kb, (N,), jnp.float32)
    got = matmul_affine_lrelu(x, w, s, b, out_dtype=jnp.float32,
                              max_w_tile_bytes=256 * 256 * 2)
    ref = x.astype(jnp.float32) @ w.astype(jnp.float32) * s + b
    ref = jnp.where(ref >= 0, ref, LEAKY_SLOPE * ref)
    err = jnp.max(jnp.abs(got - ref)) / (jnp.max(jnp.abs(ref)) + 1e-6)
    assert float(err) < 3e-2, f"matmul rel err {float(err)}"


if __name__ == "__main__":
    _verify_fused_conv()
    _verify_matmul()

    key = jax.random.PRNGKey(0)
    kp, kx = jax.random.split(key)
    params = init_params(kp)

    # Smallest input consistent with fc1 (flatten must equal 16384):
    # (N, C, H, W) = (1, 64, 1024, 128)  ->  enc8 output (1, 1024, 4, 4).
    x = jax.random.normal(kx, (1, 64, 1024, 128), jnp.float32)

    fwd = jax.jit(functools.partial(spectrogram_encoder_forward, params))
    out = jax.block_until_ready(fwd(x))

    assert out.shape == (1, 1024), out.shape
    assert bool(jnp.all(jnp.isfinite(out)))
    print("KERNEL_OK")
</pallas_src>

<mosaic_0001>
module attributes {stable_mosaic.version = 11 : i64} {
  func.func @_conv_down_kernel(%arg0: i32, %arg1: i32, %arg2: memref<1x8x2x18x16xbf16, #tpu.memory_space<vmem>>, %arg3: memref<1x1x2x18x16xbf16, #tpu.memory_space<vmem>>, %arg4: memref<144x64xbf16, #tpu.memory_space<vmem>>, %arg5: memref<1x64xf32, #tpu.memory_space<vmem>>, %arg6: memref<1x64xf32, #tpu.memory_space<vmem>>, %arg7: memref<1x128x64xbf16, #tpu.memory_space<vmem>>, %arg8: memref<128x64xf32, #tpu.memory_space<vmem>>) attributes {dimension_semantics = [#tpu.dimension_semantics<parallel>, #tpu.dimension_semantics<parallel>], iteration_bounds = array<i64: 1, 2>, scalar_prefetch = 0 : i64, scratch_operands = 1 : i64, tpu.core_type = #tpu.core_type<tc>, window_params = [{transform_indices = @transform_0, window_bounds = array<i64: 1, 8, 2, 18, 16>}, {transform_indices = @transform_1, window_bounds = array<i64: 1, 1, 2, 18, 16>}, {pipeline_mode = #tpu.pipeline_mode<synchronous>, transform_indices = @transform_2, window_bounds = array<i64: 144, 64>}, {pipeline_mode = #tpu.pipeline_mode<synchronous>, transform_indices = @transform_3, window_bounds = array<i64: 1, 64>}, {pipeline_mode = #tpu.pipeline_mode<synchronous>, transform_indices = @transform_4, window_bounds = array<i64: 1, 64>}, {transform_indices = @transform_5, window_bounds = array<i64: 1, 128, 64>}]} {
    %c0 = arith.constant 0 : index
    %c0_0 = arith.constant 0 : index
    %c0_1 = arith.constant 0 : index
    %c0_2 = arith.constant 0 : index
    %c0_3 = arith.constant 0 : index
    %0 = vector.load %arg2[%c0, %c0_0, %c0_1, %c0_2, %c0_3] : memref<1x8x2x18x16xbf16, #tpu.memory_space<vmem>>, vector<1x8x1x16x16xbf16>
    %1 = vector.shape_cast %0 : vector<1x8x1x16x16xbf16> to vector<8x16x16xbf16>
    %2 = vector.shape_cast %1 : vector<8x16x16xbf16> to vector<128x16xbf16>
    %c0_4 = arith.constant 0 : index
    %c0_5 = arith.constant 0 : index
    %3 = vector.load %arg4[%c0_4, %c0_5] : memref<144x64xbf16, #tpu.memory_space<vmem>>, vector<16x64xbf16>
    %cst = arith.constant dense<0.000000e+00> : vector<128x64xf32>
    %4 = tpu.matmul %2, %3, %cst {dimension_numbers = #tpu.dot_dimension_numbers<[1], [0], [0], [1], [0, 0, 1, 1], [], []>} : vector<128x16xbf16>, vector<16x64xbf16>, vector<128x64xf32> -> vector<128x64xf32>
    %c0_6 = arith.constant 0 : index
    %c0_7 = arith.constant 0 : index
    %c0_8 = arith.constant 0 : index
    %c1 = arith.constant 1 : index
    %c0_9 = arith.constant 0 : index
    %5 = vector.load %arg2[%c0_6, %c0_7, %c0_8, %c1, %c0_9] : memref<1x8x2x18x16xbf16, #tpu.memory_space<vmem>>, vector<1x8x1x16x16xbf16>
    %6 = vector.shape_cast %5 : vector<1x8x1x16x16xbf16> to vector<8x16x16xbf16>
    %7 = vector.shape_cast %6 : vector<8x16x16xbf16> to vector<128x16xbf16>
    %c16 = arith.constant 16 : index
    %c0_10 = arith.constant 0 : index
    %8 = vector.load %arg4[%c16, %c0_10] : memref<144x64xbf16, #tpu.memory_space<vmem>>, vector<16x64xbf16>
    %cst_11 = arith.constant dense<0.000000e+00> : vector<128x64xf32>
    %9 = tpu.matmul %7, %8, %cst_11 {dimension_numbers = #tpu.dot_dimension_numbers<[1], [0], [0], [1], [0, 0, 1, 1], [], []>} : vector<128x16xbf16>, vector<16x64xbf16>, vector<128x64xf32> -> vector<128x64xf32>
    %10 = arith.addf %4, %9 : vector<128x64xf32>
    %c0_12 = arith.constant 0 : index
    %c0_13 = arith.constant 0 : index
    %c0_14 = arith.constant 0 : index
    %c2 = arith.constant 2 : index
    %c0_15 = arith.constant 0 : index
    %11 = vector.load %arg2[%c0_12, %c0_13, %c0_14, %c2, %c0_15] : memref<1x8x2x18x16xbf16, #tpu.memory_space<vmem>>, vector<1x8x1x16x16xbf16>
    %12 = vector.shape_cast %11 : vector<1x8x1x16x16xbf16> to vector<8x16x16xbf16>
    %13 = vector.shape_cast %12 : vector<8x16x16xbf16> to vector<128x16xbf16>
    %c32 = arith.constant 32 : index
    %c0_16 = arith.constant 0 : index
    %14 = vector.load %arg4[%c32, %c0_16] : memref<144x64xbf16, #tpu.memory_space<vmem>>, vector<16x64xbf16>
    %cst_17 = arith.constant dense<0.000000e+00> : vector<128x64xf32>
    %15 = tpu.matmul %13, %14, %cst_17 {dimension_numbers = #tpu.dot_dimension_numbers<[1], [0], [0], [1], [0, 0, 1, 1], [], []>} : vector<128x16xbf16>, vector<16x64xbf16>, vector<128x64xf32> -> vector<128x64xf32>
    %16 = arith.addf %10, %15 : vector<128x64xf32>
    %c0_18 = arith.constant 0 : index
    %c0_19 = arith.constant 0 : index
    %17 = vector.load %arg8[%c0_18, %c0_19] : memref<128x64xf32, #tpu.memory_space<vmem>>, vector<128x64xf32>
    tpu.vector_store %arg8[%c0_18, %c0_19], %16 {strides = array<i32>} : memref<128x64xf32, #tpu.memory_space<vmem>>, vector<128x64xf32>,
    %c0_20 = arith.constant 0 : index
    %c0_21 = arith.constant 0 : index
    %c1_22 = arith.constant 1 : index
    %c0_23 = arith.constant 0 : index
    %c0_24 = arith.constant 0 : index
    %18 = vector.load %arg2[%c0_20, %c0_21, %c1_22, %c0_23, %c0_24] : memref<1x8x2x18x16xbf16, #tpu.memory_space<vmem>>, vector<1x8x1x16x16xbf16>
    %19 = vector.shape_cast %18 : vector<1x8x1x16x16xbf16> to vector<8x16x16xbf16>
    %20 = vector.shape_cast %19 : vector<8x16x16xbf16> to vector<128x16xbf16>
    %c48 = arith.constant 48 : index
    %c0_25 = arith.constant 0 : index
    %21 = vector.load %arg4[%c48, %c0_25] : memref<144x64xbf16, #tpu.memory_space<vmem>>, vector<16x64xbf16>
    %cst_26 = arith.constant dense<0.000000e+00> : vector<128x64xf32>
    %22 = tpu.matmul %20, %21, %cst_26 {dimension_numbers = #tpu.dot_dimension_numbers<[1], [0], [0], [1], [0, 0, 1, 1], [], []>} : vector<128x16xbf16>, vector<16x64xbf16>, vector<128x64xf32> -> vector<128x64xf32>
    %c0_27 = arith.constant 0 : index
    %c0_28 = arith.constant 0 : index
    %c1_29 = arith.constant 1 : index
    %c1_30 = arith.constant 1 : index
    %c0_31 = arith.constant 0 : index
    %23 = vector.load %arg2[%c0_27, %c0_28, %c1_29, %c1_30, %c0_31] : memref<1x8x2x18x16xbf16, #tpu.memory_space<vmem>>, vector<1x8x1x16x16xbf16>
    %24 = vector.shape_cast %23 : vector<1x8x1x16x16xbf16> to vector<8x16x16xbf16>
    %25 = vector.shape_cast %24 : vector<8x16x16xbf16> to vector<128x16xbf16>
    %c64 = arith.constant 64 : index
    %c0_32 = arith.constant 0 : index
    %26 = vector.load %arg4[%c64, %c0_32] : memref<144x64xbf16, #tpu.memory_space<vmem>>, vector<16x64xbf16>
    %cst_33 = arith.constant dense<0.000000e+00> : vector<128x64xf32>
    %27 = tpu.matmul %25, %26, %cst_33 {dimension_numbers = #tpu.dot_dimension_numbers<[1], [0], [0], [1], [0, 0, 1, 1], [], []>} : vector<128x16xbf16>, vector<16x64xbf16>, vector<128x64xf32> -> vector<128x64xf32>
    %28 = arith.addf %22, %27 : vector<128x64xf32>
    %c0_34 = arith.constant 0 : index
    %c0_35 = arith.constant 0 : index
    %c1_36 = arith.constant 1 : index
    %c2_37 = arith.constant 2 : index
    %c0_38 = arith.constant 0 : index
    %29 = vector.load %arg2[%c0_34, %c0_35, %c1_36, %c2_37, %c0_38] : memref<1x8x2x18x16xbf16, #tpu.memory_space<vmem>>, vector<1x8x1x16x16xbf16>
    %30 = vector.shape_cast %29 : vector<1x8x1x16x16xbf16> to vector<8x16x16xbf16>
    %31 = vector.shape_cast %30 : vector<8x16x16xbf16> to vector<128x16xbf16>
    %c80 = arith.constant 80 : index
    %c0_39 = arith.constant 0 : index
    %32 = vector.load %arg4[%c80, %c0_39] : memref<144x64xbf16, #tpu.memory_space<vmem>>, vector<16x64xbf16>
    %cst_40 = arith.constant dense<0.000000e+00> : vector<128x64xf32>
    %33 = tpu.matmul %31, %32, %cst_40 {dimension_numbers = #tpu.dot_dimension_numbers<[1], [0], [0], [1], [0, 0, 1, 1], [], []>} : vector<128x16xbf16>, vector<16x64xbf16>, vector<128x64xf32> -> vector<128x64xf32>
    %34 = arith.addf %28, %33 : vector<128x64xf32>
    %c0_41 = arith.constant 0 : index
    %c0_42 = arith.constant 0 : index
    %35 = vector.load %arg8[%c0_41, %c0_42] : memref<128x64xf32, #tpu.memory_space<vmem>>, vector<128x64xf32>
    %36 = arith.addf %35, %34 : vector<128x64xf32>
    %c0_43 = arith.constant 0 : index
    %c0_44 = arith.constant 0 : index
    %37 = vector.load %arg8[%c0_43, %c0_44] : memref<128x64xf32, #tpu.memory_space<vmem>>, vector<128x64xf32>
    tpu.vector_store %arg8[%c0_43, %c0_44], %36 {strides = array<i32>} : memref<128x64xf32, #tpu.memory_space<vmem>>, vector<128x64xf32>,
    %c0_45 = arith.constant 0 : index
    %c1_46 = arith.constant 1 : index
    %c0_47 = arith.constant 0 : index
    %c0_48 = arith.constant 0 : index
    %c0_49 = arith.constant 0 : index
    %38 = vector.load %arg2[%c0_45, %c1_46, %c0_47, %c0_48, %c0_49] : memref<1x8x2x18x16xbf16, #tpu.memory_space<vmem>>, vector<1x7x1x16x16xbf16>
    %39 = vector.shape_cast %38 : vector<1x7x1x16x16xbf16> to vector<7x16x16xbf16>
    %40 = vector.shape_cast %39 : vector<7x16x16xbf16> to vector<112x16xbf16>
    %c96 = arith.constant 96 : index
    %c0_50 = arith.constant 0 : index
    %41 = vector.load %arg4[%c96, %c0_50] : memref<144x64xbf16, #tpu.memory_space<vmem>>, vector<16x64xbf16>
    %cst_51 = arith.constant dense<0.000000e+00> : vector<112x64xf32>
    %42 = tpu.matmul %40, %41, %cst_51 {dimension_numbers = #tpu.dot_dimension_numbers<[1], [0], [0], [1], [0, 0, 1, 1], [], []>} : vector<112x16xbf16>, vector<16x64xbf16>, vector<112x64xf32> -> vector<112x64xf32>
    %c0_52 = arith.constant 0 : index
    %c1_53 = arith.constant 1 : index
    %c0_54 = arith.constant 0 : index
    %c1_55 = arith.constant 1 : index
    %c0_56 = arith.constant 0 : index
    %43 = vector.load %arg2[%c0_52, %c1_53, %c0_54, %c1_55, %c0_56] : memref<1x8x2x18x16xbf16, #tpu.memory_space<vmem>>, vector<1x7x1x16x16xbf16>
    %44 = vector.shape_cast %43 : vector<1x7x1x16x16xbf16> to vector<7x16x16xbf16>
    %45 = vector.shape_cast %44 : vector<7x16x16xbf16> to vector<112x16xbf16>
    %c112 = arith.constant 112 : index
    %c0_57 = arith.constant 0 : index
    %46 = vector.load %arg4[%c112, %c0_57] : memref<144x64xbf16, #tpu.memory_space<vmem>>, vector<16x64xbf16>
    %cst_58 = arith.constant dense<0.000000e+00> : vector<112x64xf32>
    %47 = tpu.matmul %45, %46, %cst_58 {dimension_numbers = #tpu.dot_dimension_numbers<[1], [0], [0], [1], [0, 0, 1, 1], [], []>} : vector<112x16xbf16>, vector<16x64xbf16>, vector<112x64xf32> -> vector<112x64xf32>
    %48 = arith.addf %42, %47 : vector<112x64xf32>
    %c0_59 = arith.constant 0 : index
    %c1_60 = arith.constant 1 : index
    %c0_61 = arith.constant 0 : index
    %c2_62 = arith.constant 2 : index
    %c0_63 = arith.constant 0 : index
    %49 = vector.load %arg2[%c0_59, %c1_60, %c0_61, %c2_62, %c0_63] : memref<1x8x2x18x16xbf16, #tpu.memory_space<vmem>>, vector<1x7x1x16x16xbf16>
    %50 = vector.shape_cast %49 : vector<1x7x1x16x16xbf16> to vector<7x16x16xbf16>
    %51 = vector.shape_cast %50 : vector<7x16x16xbf16> to vector<112x16xbf16>
    %c128 = arith.constant 128 : index
    %c0_64 = arith.constant 0 : index
    %52 = vector.load %arg4[%c128, %c0_64] : memref<144x64xbf16, #tpu.memory_space<vmem>>, vector<16x64xbf16>
    %cst_65 = arith.constant dense<0.000000e+00> : vector<112x64xf32>
    %53 = tpu.matmul %51, %52, %cst_65 {dimension_numbers = #tpu.dot_dimension_numbers<[1], [0], [0], [1], [0, 0, 1, 1], [], []>} : vector<112x16xbf16>, vector<16x64xbf16>, vector<112x64xf32> -> vector<112x64xf32>
    %54 = arith.addf %48, %53 : vector<112x64xf32>
    %c0_66 = arith.constant 0 : index
    %c0_67 = arith.constant 0 : index
    %55 = vector.load %arg8[%c0_66, %c0_67] : memref<128x64xf32, #tpu.memory_space<vmem>>, vector<112x64xf32>
    %56 = arith.addf %55, %54 : vector<112x64xf32>
    %c0_68 = arith.constant 0 : index
    %c0_69 = arith.constant 0 : index
    %57 = vector.load %arg8[%c0_68, %c0_69] : memref<128x64xf32, #tpu.memory_space<vmem>>, vector<112x64xf32>
    tpu.vector_store %arg8[%c0_68, %c0_69], %56 {strides = array<i32>} : memref<128x64xf32, #tpu.memory_space<vmem>>, vector<112x64xf32>,
    %c0_70 = arith.constant 0 : index
    %c0_71 = arith.constant 0 : index
    %c0_72 = arith.constant 0 : index
    %c0_73 = arith.constant 0 : index
    %c0_74 = arith.constant 0 : index
    %58 = vector.load %arg3[%c0_70, %c0_71, %c0_72, %c0_73, %c0_74] : memref<1x1x2x18x16xbf16, #tpu.memory_space<vmem>>, vector<1x1x1x16x16xbf16>
    %59 = vector.shape_cast %58 : vector<1x1x1x16x16xbf16> to vector<16x16xbf16>
    %c96_75 = arith.constant 96 : index
    %c0_76 = arith.constant 0 : index
    %60 = vector.load %arg4[%c96_75, %c0_76] : memref<144x64xbf16, #tpu.memory_space<vmem>>, vector<16x64xbf16>
    %cst_77 = arith.constant dense<0.000000e+00> : vector<16x64xf32>
    %61 = tpu.matmul %59, %60, %cst_77 {dimension_numbers = #tpu.dot_dimension_numbers<[1], [0], [0], [1], [0, 0, 1, 1], [], []>} : vector<16x16xbf16>, vector<16x64xbf16>, vector<16x64xf32> -> vector<16x64xf32>
    %c0_78 = arith.constant 0 : index
    %c0_79 = arith.constant 0 : index
    %c0_80 = arith.constant 0 : index
    %c1_81 = arith.constant 1 : index
    %c0_82 = arith.constant 0 : index
    %62 = vector.load %arg3[%c0_78, %c0_79, %c0_80, %c1_81, %c0_82] : memref<1x1x2x18x16xbf16, #tpu.memory_space<vmem>>, vector<1x1x1x16x16xbf16>
    %63 = vector.shape_cast %62 : vector<1x1x1x16x16xbf16> to vector<16x16xbf16>
    %c112_83 = arith.constant 112 : index
    %c0_84 = arith.constant 0 : index
    %64 = vector.load %arg4[%c112_83, %c0_84] : memref<144x64xbf16, #tpu.memory_space<vmem>>, vector<16x64xbf16>
    %cst_85 = arith.constant dense<0.000000e+00> : vector<16x64xf32>
    %65 = tpu.matmul %63, %64, %cst_85 {dimension_numbers = #tpu.dot_dimension_numbers<[1], [0], [0], [1], [0, 0, 1, 1], [], []>} : vector<16x16xbf16>, vector<16x64xbf16>, vector<16x64xf32> -> vector<16x64xf32>
    %66 = arith.addf %61, %65 : vector<16x64xf32>
    %c0_86 = arith.constant 0 : index
    %c0_87 = arith.constant 0 : index
    %c0_88 = arith.constant 0 : index
    %c2_89 = arith.constant 2 : index
    %c0_90 = arith.constant 0 : index
    %67 = vector.load %arg3[%c0_86, %c0_87, %c0_88, %c2_89, %c0_90] : memref<1x1x2x18x16xbf16, #tpu.memory_space<vmem>>, vector<1x1x1x16x16xbf16>
    %68 = vector.shape_cast %67 : vector<1x1x1x16x16xbf16> to vector<16x16xbf16>
    %c128_91 = arith.constant 128 : index
    %c0_92 = arith.constant 0 : index
    %69 = vector.load %arg4[%c128_91, %c0_92] : memref<144x64xbf16, #tpu.memory_space<vmem>>, vector<16x64xbf16>
    %cst_93 = arith.constant dense<0.000000e+00> : vector<16x64xf32>
    %70 = tpu.matmul %68, %69, %cst_93 {dimension_numbers = #tpu.dot_dimension_numbers<[1], [0], [0], [1], [0, 0, 1, 1], [], []>} : vector<16x16xbf16>, vector<16x64xbf16>, vector<16x64xf32> -> vector<16x64xf32>
    %71 = arith.addf %66, %70 : vector<16x64xf32>
    %c112_94 = arith.constant 112 : index
    %c0_95 = arith.constant 0 : index
    %72 = vector.load %arg8[%c112_94, %c0_95] : memref<128x64xf32, #tpu.memory_space<vmem>>, vector<16x64xf32>
    %73 = arith.addf %72, %71 : vector<16x64xf32>
    %c112_96 = arith.constant 112 : index
    %c0_97 = arith.constant 0 : index
    %74 = vector.load %arg8[%c112_96, %c0_97] : memref<128x64xf32, #tpu.memory_space<vmem>>, vector<16x64xf32>
    tpu.vector_store %arg8[%c112_96, %c0_97], %73 {strides = array<i32>} : memref<128x64xf32, #tpu.memory_space<vmem>>, vector<16x64xf32>,
    %c0_98 = arith.constant 0 : index
    %c0_99 = arith.constant 0 : index
    %75 = vector.load %arg8[%c0_98, %c0_99] : memref<128x64xf32, #tpu.memory_space<vmem>>, vector<128x64xf32>
    %c0_100 = arith.constant 0 : index
    %c0_101 = arith.constant 0 : index
    %76 = vector.load %arg5[%c0_100, %c0_101] : memref<1x64xf32, #tpu.memory_space<vmem>>, vector<1x64xf32>
    %77 = vector.broadcast %76 : vector<1x64xf32> to vector<128x64xf32>
    %78 = arith.mulf %75, %77 : vector<128x64xf32>
    %c0_102 = arith.constant 0 : index
    %c0_103 = arith.constant 0 : index
    %79 = vector.load %arg6[%c0_102, %c0_103] : memref<1x64xf32, #tpu.memory_space<vmem>>, vector<1x64xf32>
    %80 = vector.broadcast %79 : vector<1x64xf32> to vector<128x64xf32>
    %81 = arith.addf %78, %80 : vector<128x64xf32>
    %cst_104 = arith.constant 0.000000e+00 : f32
    %82 = vector.broadcast %cst_104 : f32 to vector<128x64xf32>
    %83 = arith.cmpf oge, %81, %82 : vector<128x64xf32>
    %cst_105 = arith.constant 2.000000e-01 : f32
    %84 = vector.broadcast %cst_105 : f32 to vector<128x64xf32>
    %85 = arith.mulf %84, %81 : vector<128x64xf32>
    %86 = arith.select %83, %81, %85 : vector<128x64xi1>, vector<128x64xf32>
    %87 = arith.truncf %86 : vector<128x64xf32> to vector<128x64xbf16>
    %c0_106 = arith.constant 0 : index
    %c0_107 = arith.constant 0 : index
    %c0_108 = arith.constant 0 : index
    %88 = vector.load %arg7[%c0_106, %c0_107, %c0_108] : memref<1x128x64xbf16, #tpu.memory_space<vmem>>, vector<1x128x64xbf16>
    %89 = vector.shape_cast %88 : vector<1x128x64xbf16> to vector<128x64xbf16>
    %90 = vector.shape_cast %87 : vector<128x64xbf16> to vector<1x128x64xbf16>
    tpu.vector_store %arg7[%c0_106, %c0_107, %c0_108], %90 {strides = array<i32>} : memref<1x128x64xbf16, #tpu.memory_space<vmem>>, vector<1x128x64xbf16>,
    return
  }
  func.func @transform_0(%arg0: i32, %arg1: i32) -> (i32, i32, i32, i32, i32) {
    %c0_i32 = arith.constant 0 : i32
    %c0_i32_0 = arith.constant 0 : i32
    %c0_i32_1 = arith.constant 0 : i32
    %c0_i32_2 = arith.constant 0 : i32
    return %arg0, %arg1, %c0_i32, %c0_i32_0, %c0_i32_1 : i32, i32, i32, i32, i32
  }
  func.func @transform_1(%arg0: i32, %arg1: i32) -> (i32, i32, i32, i32, i32) {
    %c1_i32 = arith.constant 1 : i32
    %0 = arith.addi %arg1, %c1_i32 : i32
    %c8_i32 = arith.constant 8 : i32
    %1 = arith.muli %c8_i32, %0 : i32
    %c0_i32 = arith.constant 0 : i32
    %c0_i32_0 = arith.constant 0 : i32
    %c0_i32_1 = arith.constant 0 : i32
    %c0_i32_2 = arith.constant 0 : i32
    return %arg0, %1, %c0_i32, %c0_i32_0, %c0_i32_1 : i32, i32, i32, i32, i32
  }
  func.func @transform_2(%arg0: i32, %arg1: i32) -> (i32, i32) {
    %c0_i32 = arith.constant 0 : i32
    %c0_i32_0 = arith.constant 0 : i32
    %c0_i32_1 = arith.constant 0 : i32
    return %c0_i32, %c0_i32_0 : i32, i32
  }
  func.func @transform_3(%arg0: i32, %arg1: i32) -> (i32, i32) {
    %c0_i32 = arith.constant 0 : i32
    %c0_i32_0 = arith.constant 0 : i32
    %c0_i32_1 = arith.constant 0 : i32
    return %c0_i32, %c0_i32_0 : i32, i32
  }
  func.func @transform_4(%arg0: i32, %arg1: i32) -> (i32, i32) {
    %c0_i32 = arith.constant 0 : i32
    %c0_i32_0 = arith.constant 0 : i32
    %c0_i32_1 = arith.constant 0 : i32
    return %c0_i32, %c0_i32_0 : i32, i32
  }
  func.func @transform_5(%arg0: i32, %arg1: i32) -> (i32, i32, i32) {
    %c2_i32 = arith.constant 2 : i32
    %0 = arith.muli %arg0, %c2_i32 : i32
    %1 = arith.addi %0, %arg1 : i32
    %c0_i32 = arith.constant 0 : i32
    %c0_i32_0 = arith.constant 0 : i32
    %c0_i32_1 = arith.constant 0 : i32
    return %1, %c0_i32, %c0_i32_0 : i32, i32, i32
  }
}

</mosaic_0001>

<llo_original>
// kernel: tpu_custom_call.1
$region0: #{tpu_custom_call.1}
  #allocation0 [shape = 'u32[]', space=smem, size = 0x4, offset = 0x4, fixed_abs, tag = 'smem constant byte address 0x4 - core index']
  #allocation1 [shape = 'u32[144,128]{1,0:T(1,128)}', space=vmem, size = 0x12000, scoped, tag = 'internal scratch']
  #allocation2 [shape = 'f32[128,64]{1,0:T(8,128)}', space=vmem, size = 0x10000, scoped, tag = 'scratch operand']
  %s0 = inlined_call_operand.vmem [shape: bf16[1,17,2,18,16], index: 0, kind: input, shape index: {}]
  %s1 = inlined_call_operand.vmem [shape: bf16[1,17,2,18,16], index: 1, kind: input, shape index: {}]
  %s2 = inlined_call_operand.vmem [shape: bf16[144,64], index: 2, kind: input, shape index: {}]
  %s3 = inlined_call_operand.vmem [shape: f32[1,64], index: 3, kind: input, shape index: {}]
  %s4 = inlined_call_operand.vmem [shape: f32[1,64], index: 4, kind: input, shape index: {}]
  %s5 = inlined_call_operand.vmem [shape: bf16[2,128,64], index: 5, kind: output, shape index: {}]
  %s6 = sld [smem:[#allocation0]]
  $region53: #{tpu_custom_call.1} parent=0
    _
  %s8 = ssub.s32 1, %s6
  %s9 = scalar_select 0, %s8, %s6
  loop: start=0, step=1, limit=4
  $region2: #{tpu_custom_call.1} parent=0 // loop_pre_header
    _
  $region3: #{tpu_custom_call.1} parent=0 // loop_header
    %s11 = sphi 0, %s15
    %p12 = scmp.ge.s32.totalorder %s11, 4
    %s18 = sphi 0, %s30
    %s19 = sphi 0, %s26
    %s20 = sphi 0, %s18
    %s21 = sphi 0, %s19
    %s22 = sphi 0, %s20
    %s23 = sphi 0, %s21
    %s35 = sphi 0, %s37
    %s38 = sphi 0, %s35
    %s39 = sphi 0, %s38
    %s55 = sphi 0, %s39
    %s67 = sphi 0, %s69
    %s70 = sphi 0, %s67
    %s71 = sphi 0, %s70
    %s87 = sphi 0, %s71
    %s91 = sphi 0, %s91
    %s93 = sphi 0, %s91
    %s94 = sphi 0, %s93
    %s108 = sphi 0, %s94
    %s112 = sphi 0, %s112
    %s114 = sphi 0, %s112
    %s115 = sphi 0, %s114
    %s129 = sphi 0, %s115
    %s133 = sphi 0, %s133
    %s135 = sphi 0, %s133
    %s136 = sphi 0, %s135
    %s150 = sphi 0, %s136
    %s160 = sphi 0, %s162
    %s163 = sphi 0, %s160
    %s164 = sphi 0, %s163
    %s180 = sphi 0, %s164
  $region4: #{tpu_custom_call.1} parent=0 // loop_header_branch
    %14 = sbr.rel (%p12) target = $region8
  $region5: #{tpu_custom_call.1} parent=0 // loop_body
    %s16 = ssub.s32 %s11, 1
    %s17 = ssub.s32 %s11, 2
    %s24 = sadd.s32 1, %s19
    %p25 = scmp.ge.s32.totalorder %s24, 2
    %s26 = scalar_select %p25, 0, %s24
    %s27 = sadd.s32 1, %s18
    %s28 = scalar_select %p25, %s27, %s18
    %p29 = scmp.ge.s32.totalorder %s28, 1
    %s30 = scalar_select %p29, 0, %s28
    %s31 = ssub.s32 %s18, %s30
    %s32 = ssub.s32 %s19, %s26
    %s33 = sor.u32 %s31, %s32
    %p34 = scmp.eq.s32.totalorder %s33, 0
    %s36 = sadd.s32 %s35, 1
    %s37 = scalar_select %p34, %s35, %s36
    %p40 = pneg %p34
    %p41 = scmp.eq.s32.totalorder %s11, 1
    %p42 = por %p40, %p41
    %p43 = scmp.ne.s32.totalorder %s35, %s38
    %p44 = scmp.eq.s32.totalorder %s11, 0
    %p45 = por %p43, %p44
    %p46 = scmp.ne.s32.totalorder %s35, %s38
    %p47 = scmp.eq.s32.totalorder %s16, 1
    %p48 = por %p46, %p47
    %p49 = scmp.ne.s32.totalorder %s38, %s39
    %p50 = scmp.eq.s32.totalorder %s16, 0
    %p51 = por %p49, %p50
    %p52 = scmp.ne.s32.totalorder %s38, %s39
    %p53 = scmp.eq.s32.totalorder %s17, 1
    %p54 = por %p52, %p53
    %p56 = scmp.ne.s32.totalorder %s39, %s55
    %p57 = scmp.eq.s32.totalorder %s17, 0
    %p58 = por %p56, %p57
    %s59 = sadd.s32 %s19, 1
    %s60 = smul.u32 %s59, 8
    %s61 = sadd.s32 %s26, 1
    %s62 = smul.u32 %s61, 8
    %s63 = ssub.s32 %s18, %s30
    %s64 = ssub.s32 %s60, %s62
    %s65 = sor.u32 %s63, %s64
    %p66 = scmp.eq.s32.totalorder %s65, 0
    %s68 = sadd.s32 %s67, 1
    %s69 = scalar_select %p66, %s67, %s68
    %p72 = pneg %p66
    %p73 = scmp.eq.s32.totalorder %s11, 1
    %p74 = por %p72, %p73
    %p75 = scmp.ne.s32.totalorder %s67, %s70
    %p76 = scmp.eq.s32.totalorder %s11, 0
    %p77 = por %p75, %p76
    %p78 = scmp.ne.s32.totalorder %s67, %s70
    %p79 = scmp.eq.s32.totalorder %s16, 1
    %p80 = por %p78, %p79
    %p81 = scmp.ne.s32.totalorder %s70, %s71
    %p82 = scmp.eq.s32.totalorder %s16, 0
    %p83 = por %p81, %p82
    %p84 = scmp.ne.s32.totalorder %s70, %s71
    %p85 = scmp.eq.s32.totalorder %s17, 1
    %p86 = por %p84, %p85
    %p88 = scmp.ne.s32.totalorder %s71, %s87
    %p89 = scmp.eq.s32.totalorder %s17, 0
    %p90 = por %p88, %p89
    %s92 = sadd.s32 %s91, 1
    %p95 = scmp.eq.s32.totalorder %s11, 1
    %p96 = scmp.ne.s32.totalorder %s91, %s93
    %p97 = scmp.eq.s32.totalorder %s11, 0
    %p98 = por %p96, %p97
    %p99 = scmp.ne.s32.totalorder %s91, %s93
    %p100 = scmp.eq.s32.totalorder %s16, 1
    %p101 = por %p99, %p100
    %p102 = scmp.ne.s32.totalorder %s93, %s94
    %p103 = scmp.eq.s32.totalorder %s16, 0
    %p104 = por %p102, %p103
    %p105 = scmp.ne.s32.totalorder %s93, %s94
    %p106 = scmp.eq.s32.totalorder %s17, 1
    %p107 = por %p105, %p106
    %p109 = scmp.ne.s32.totalorder %s94, %s108
    %p110 = scmp.eq.s32.totalorder %s17, 0
    %p111 = por %p109, %p110
    %s113 = sadd.s32 %s112, 1
    %p116 = scmp.eq.s32.totalorder %s11, 1
    %p117 = scmp.ne.s32.totalorder %s112, %s114
    %p118 = scmp.eq.s32.totalorder %s11, 0
    %p119 = por %p117, %p118
    %p120 = scmp.ne.s32.totalorder %s112, %s114
    %p121 = scmp.eq.s32.totalorder %s16, 1
    %p122 = por %p120, %p121
    %p123 = scmp.ne.s32.totalorder %s114, %s115
    %p124 = scmp.eq.s32.totalorder %s16, 0
    %p125 = por %p123, %p124
    %p126 = scmp.ne.s32.totalorder %s114, %s115
    %p127 = scmp.eq.s32.totalorder %s17, 1
    %p128 = por %p126, %p127
    %p130 = scmp.ne.s32.totalorder %s115, %s129
    %p131 = scmp.eq.s32.totalorder %s17, 0
    %p132 = por %p130, %p131
    %s134 = sadd.s32 %s133, 1
    %p137 = scmp.eq.s32.totalorder %s11, 1
    %p138 = scmp.ne.s32.totalorder %s133, %s135
    %p139 = scmp.eq.s32.totalorder %s11, 0
    %p140 = por %p138, %p139
    %p141 = scmp.ne.s32.totalorder %s133, %s135
    %p142 = scmp.eq.s32.totalorder %s16, 1
    %p143 = por %p141, %p142
    %p144 = scmp.ne.s32.totalorder %s135, %s136
    %p145 = scmp.eq.s32.totalorder %s16, 0
    %p146 = por %p144, %p145
    %p147 = scmp.ne.s32.totalorder %s135, %s136
    %p148 = scmp.eq.s32.totalorder %s17, 1
    %p149 = por %p147, %p148
    %p151 = scmp.ne.s32.totalorder %s136, %s150
    %p152 = scmp.eq.s32.totalorder %s17, 0
    %p153 = por %p151, %p152
    %s154 = smul.u32 %s18, 2
    %s155 = sadd.s32 %s154, %s19
    %s156 = smul.u32 %s30, 2
    %s157 = sadd.s32 %s156, %s26
    %s158 = ssub.s32 %s155, %s157
    %p159 = scmp.eq.s32.totalorder %s158, 0
    %s161 = sadd.s32 %s160, 1
    %s162 = scalar_select %p159, %s160, %s161
    %p165 = pneg %p159
    %p166 = scmp.eq.s32.totalorder %s11, 1
    %p167 = por %p165, %p166
    %p168 = scmp.ne.s32.totalorder %s160, %s163
    %p169 = scmp.eq.s32.totalorder %s11, 0
    %p170 = por %p168, %p169
    %p171 = scmp.ne.s32.totalorder %s160, %s163
    %p172 = scmp.eq.s32.totalorder %s16, 1
    %p173 = por %p171, %p172
    %p174 = scmp.ne.s32.totalorder %s163, %s164
    %p175 = scmp.eq.s32.totalorder %s16, 0
    %p176 = por %p174, %p175
    %p177 = scmp.ne.s32.totalorder %s163, %s164
    %p178 = scmp.eq.s32.totalorder %s17, 1
    %p179 = por %p177, %p178
    %p181 = scmp.ne.s32.totalorder %s164, %s180
    %p182 = scmp.eq.s32.totalorder %s17, 0
    %p183 = por %p181, %p182
    %p184 = scmp.le.s32.totalorder 1, %s11
    %p185 = scmp.lt.s32.totalorder %s11, 3
    %p186 = pnand %p184, %p185
    %p187 = pneg %p186
    // Predicated region
    $region9: #{tpu_custom_call.1} parent=5 // pred_check
      _
    $region10: #{tpu_custom_call.1} parent=5 // pred_check_branch
      %189 = sbr.rel (%p186) target = $region12
    $region11: #{tpu_custom_call.1} parent=5 // pred_region
      %s190 = ssub.s32 %s11, 1
      // Predicated region
      $region13: #{tpu_custom_call.1} parent=11 // pred_check
        %p191 = pneg %p104
      $region14: #{tpu_custom_call.1} parent=11 // pred_check_branch
        %193 = sbr.rel (%p191) target = $region16
      $region15: #{tpu_custom_call.1} parent=11 // pred_region
        _
      $region16: #{tpu_custom_call.1} parent=11 // pred_fallthru
        _
      // Predicated region
      $region17: #{tpu_custom_call.1} parent=11 // pred_check
        %p194 = pneg %p125
      $region18: #{tpu_custom_call.1} parent=11 // pred_check_branch
        %196 = sbr.rel (%p194) target = $region20
      $region19: #{tpu_custom_call.1} parent=11 // pred_region
        _
      $region20: #{tpu_custom_call.1} parent=11 // pred_fallthru
        _
      // Predicated region
      $region21: #{tpu_custom_call.1} parent=11 // pred_check
        %p197 = pneg %p146
      $region22: #{tpu_custom_call.1} parent=11 // pred_check_branch
        %199 = sbr.rel (%p197) target = $region24
      $region23: #{tpu_custom_call.1} parent=11 // pred_region
        _
      $region24: #{tpu_custom_call.1} parent=11 // pred_fallthru
        _
    $region12: #{tpu_custom_call.1} parent=5 // pred_fallthru
      _
    %p200 = scmp.lt.s32.totalorder %s11, 2
    // Predicated region
    $region25: #{tpu_custom_call.1} parent=5 // pred_check
      %p201 = pneg %p200
    $region26: #{tpu_custom_call.1} parent=5 // pred_check_branch
      %203 = sbr.rel (%p201) target = $region28
    $region27: #{tpu_custom_call.1} parent=5 // pred_region
      // Predicated region
      $region29: #{tpu_custom_call.1} parent=27 // pred_check
        %p204 = pneg %p45
      $region30: #{tpu_custom_call.1} parent=27 // pred_check_branch
        %206 = sbr.rel (%p204) target = $region32
      $region31: #{tpu_custom_call.1} parent=27 // pred_region
        %s207 = smul.u32 8, %s19
        %s208 = ssub.s32 17, %s207
        %p209 = scmp.lt.s32.totalorder %s208, 8
        %s210 = scalar_select %p209, %s208, 8
        %s211 = smul.u32 64, %s210
        %s212 = smul.u32 %s211, 2
        %s213 = smul.u32 %s212, 3
        %p214 = scmp.lt.s32.totalorder %s18, 0
        %s215 = scalar_select %p214, %s18, 0
        %p216 = scmp.lt.s32.totalorder %s207, 16
        %s217 = scalar_select %p216, %s207, 16
        %s218 = smul.addr %s217, 6
        %s219 = smul.addr %s215, 102
        %s220 = sadd.s32 %s218, %s219
        %s221 = smul.addr %s220, 4
        %s222 = scalar_lea.vmem %s0, %s221
        %s223 = smul.u32 8, %s19
        %s224 = ssub.s32 17, %s223
        %p225 = scmp.lt.s32.totalorder %s224, 8
        %s226 = scalar_select %p225, %s224, 8
        %s227 = smul.u32 64, %s226
        %s228 = smul.u32 %s227, 2
        %s229 = smul.u32 %s228, 3
      $region32: #{tpu_custom_call.1} parent=27 // pred_fallthru
        _
      // Predicated region
      $region33: #{tpu_custom_call.1} parent=27 // pred_check
        %p230 = pneg %p77
      $region34: #{tpu_custom_call.1} parent=27 // pred_check_branch
        %232 = sbr.rel (%p230) target = $region36
      $region35: #{tpu_custom_call.1} parent=27 // pred_region
        %s233 = sadd.s32 %s19, 1
        %s234 = smul.u32 %s233, 8
        %p235 = scmp.lt.s32.totalorder %s18, 0
        %s236 = scalar_select %p235, %s18, 0
        %p237 = scmp.lt.s32.totalorder %s234, 16
        %s238 = scalar_select %p237, %s234, 16
        %s239 = smul.addr %s238, 6
        %s240 = smul.addr %s236, 102
        %s241 = sadd.s32 %s239, %s240
        %s242 = smul.addr %s241, 4
        %s243 = scalar_lea.vmem %s1, %s242
        %s244 = sadd.s32 %s19, 1
        %s245 = smul.u32 %s244, 8
      $region36: #{tpu_custom_call.1} parent=27 // pred_fallthru
        _
    $region28: #{tpu_custom_call.1} parent=5 // pred_fallthru
      _
    %p246 = scmp.le.s32.totalorder 1, %s11
    %p247 = scmp.lt.s32.totalorder %s11, 3
    %p248 = pnand %p246, %p247
    %p249 = pneg %p248
    // Predicated region
    $region37: #{tpu_custom_call.1} parent=5 // pred_check
      _
    $region38: #{tpu_custom_call.1} parent=5 // pred_check_branch
      %251 = sbr.rel (%p248) target = $region40
    $region39: #{tpu_custom_call.1} parent=5 // pred_region
      %s252 = ssub.s32 %s11, 1
      %s253 = smul.u32 8, %s21
      %s254 = ssub.s32 17, %s253
      %p255 = scmp.lt.s32.totalorder %s254, 8
      %s256 = scalar_select %p255, %s254, 8
      %s257 = smul.u32 64, %s256
      %s258 = smul.u32 %s257, 2
      %s259 = smul.u32 %s258, 3
      %p260 = scmp.lt.s32.totalorder %s20, 0
      %s261 = scalar_select %p260, %s20, 0
      %p262 = scmp.lt.s32.totalorder %s253, 16
      %s263 = scalar_select %p262, %s253, 16
      %s264 = smul.addr %s263, 6
      %s265 = smul.addr %s261, 102
      %s266 = sadd.s32 %s264, %s265
      %s267 = smul.addr %s266, 4
      %s268 = scalar_lea.vmem %s0, %s267
      %p269 = pneg %p51
      %p270 = pneg %p48
      %s271 = sadd.s32 %s21, 1
      %s272 = smul.u32 %s271, 8
      %p273 = scmp.lt.s32.totalorder %s20, 0
      %s274 = scalar_select %p273, %s20, 0
      %p275 = scmp.lt.s32.totalorder %s272, 16
      %s276 = scalar_select %p275, %s272, 16
      %s277 = smul.addr %s276, 6
      %s278 = smul.addr %s274, 102
      %s279 = sadd.s32 %s277, %s278
      %s280 = smul.addr %s279, 4
      %s281 = scalar_lea.vmem %s1, %s280
      %p282 = pneg %p83
      %p283 = pneg %p80
      %p284 = pneg %p104
      %p285 = pneg %p101
      %p286 = pneg %p125
      %p287 = pneg %p122
      %p288 = pneg %p146
      %p289 = pneg %p143
      %p290 = pneg %p176
      %p291 = pneg %p173
      %s292 = smul.u32 %s20, 2
      %s293 = sadd.s32 %s292, %s21
      %p294 = scmp.lt.s32.totalorder %s293, 1
      %s295 = scalar_select %p294, %s293, 1
      %s296 = smul.addr %s295, 16
      %s297 = smul.addr %s296, 4
      %s298 = scalar_lea.vmem %s5, %s297
      %s299 = smul.u32 8, %s21
      %s300 = ssub.s32 17, %s299
      %p301 = scmp.lt.s32.totalorder %s300, 8
      %s302 = scalar_select %p301, %s300, 8
      %s303 = smul.u32 64, %s302
      %s304 = smul.u32 %s303, 2
      %s305 = smul.u32 %s304, 3
      %p306 = scmp.lt.s32.totalorder %s20, 0
      %s307 = scalar_select %p306, %s20, 0
      %p308 = scmp.lt.s32.totalorder %s299, 16
      %s309 = scalar_select %p308, %s299, 16
      %s310 = smul.addr %s309, 6
      %s311 = smul.addr %s307, 102
      %s312 = sadd.s32 %s310, %s311
      %s313 = smul.addr %s312, 4
      %s314 = scalar_lea.vmem %s0, %s313
      %s315 = smul.u32 8, %s21
      %s316 = ssub.s32 17, %s315
      %p317 = scmp.lt.s32.totalorder %s316, 8
      %s318 = scalar_select %p317, %s316, 8
      %s319 = smul.u32 64, %s318
      %s320 = smul.u32 %s319, 2
      %s321 = smul.u32 %s320, 3
      %s322 = sadd.s32 %s21, 1
      %s323 = smul.u32 %s322, 8
      %p324 = scmp.lt.s32.totalorder %s20, 0
      %s325 = scalar_select %p324, %s20, 0
      %p326 = scmp.lt.s32.totalorder %s323, 16
      %s327 = scalar_select %p326, %s323, 16
      %s328 = smul.addr %s327, 6
      %s329 = smul.addr %s325, 102
      %s330 = sadd.s32 %s328, %s329
      %s331 = smul.addr %s330, 4
      %s332 = scalar_lea.vmem %s1, %s331
      %s333 = sadd.s32 %s21, 1
      %s334 = smul.u32 %s333, 8
      %s335 = smul.u32 %s20, 2
      %s336 = sadd.s32 %s335, %s21
      %p337 = scmp.lt.s32.totalorder %s336, 1
      %s338 = scalar_select %p337, %s336, 1
      %s339 = smul.addr %s338, 16
      %s340 = smul.addr %s339, 4
      %s341 = scalar_lea.vmem %s5, %s340
      %s342 = smul.u32 %s20, 2
      %s343 = sadd.s32 %s342, %s21
      %v345 = vld [vmem:[%s314] sm:$0xf]
      %v346 = vld [vmem:[%s314 + $0x4] sm:$0xf]
      %v347 = vld [vmem:[%s314 + $0x18] sm:$0xf]
      %v348 = vld [vmem:[%s314 + $0x1c] sm:$0xf]
      %v349 = vld [vmem:[%s314 + $0x30] sm:$0xf]
      %v350 = vld [vmem:[%s314 + $0x34] sm:$0xf]
      %v351 = vld [vmem:[%s314 + $0x48] sm:$0xf]
      %v352 = vld [vmem:[%s314 + $0x4c] sm:$0xf]
      %v353 = vld [vmem:[%s314 + $0x60] sm:$0xf]
      %v354 = vld [vmem:[%s314 + $0x64] sm:$0xf]
      %v355 = vld [vmem:[%s314 + $0x78] sm:$0xf]
      %v356 = vld [vmem:[%s314 + $0x7c] sm:$0xf]
      %v357 = vld [vmem:[%s314 + $0x90] sm:$0xf]
      %v358 = vld [vmem:[%s314 + $0x94] sm:$0xf]
      %v359 = vld [vmem:[%s314 + $0xa8] sm:$0xf]
      %v360 = vld [vmem:[%s314 + $0xac] sm:$0xf]
      %v361 = vld [vmem:[%s2] sm:$0xf]
      %v362 = vld [vmem:[%s2 + $0x4] sm:$0xf]
      %v363 = vld [vmem:[%s314 + $0x8] sm:$0x1]
      %v364 = vld [vmem:[%s314 + $0x20] sm:$0x1]
      %v365 = vld [vmem:[%s314 + $0x38] sm:$0x1]
      %v366 = vld [vmem:[%s314 + $0x50] sm:$0x1]
      %v367 = vld [vmem:[%s314 + $0x68] sm:$0x1]
      %v368 = vld [vmem:[%s314 + $0x80] sm:$0x1]
      %v369 = vld [vmem:[%s314 + $0x98] sm:$0x1]
      %v370 = vld [vmem:[%s314 + $0xb0] sm:$0x1]
      %vm371 = vsmask.f32 3328
      %vm372 = vsmask.f32 7440
      %vm373 = vmor %vm371, %vm372
      %v375 = vshrl.u32 %v345, 16
      %v377 = vrot.slane %v375, 4
      %v378 = vshll.u32 %v345, 16
      %v380 = vrot.slane %v378, 5
      %v381 = vor.u32 %v377, %v380
      %v382 = vrot.slane %v381, 4
      %v384 = vshll.u32 %v346, 16
      %v386 = vrot.slane %v384, 5
      %v387 = vsel %vm373, %v382, %v386
      %v388 = vshrl.u32 %v346, 16
      %v390 = vrot.slane %v388, 4
      %v391 = vor.u32 %v390, %v386
      %v392 = vrot.slane %v391, 4
      %v394 = vshll.u32 %v363, 16
      %v396 = vrot.slane %v394, 5
      %v397 = vsel %vm373, %v392, %v396
      %v399 = vshrl.u32 %v347, 16
      %v401 = vrot.slane %v399, 4
      %v402 = vshll.u32 %v347, 16
      %v404 = vrot.slane %v402, 5
      %v405 = vor.u32 %v401, %v404
      %v406 = vrot.slane %v405, 4
      %v408 = vshll.u32 %v348, 16
      %v410 = vrot.slane %v408, 5
      %v411 = vsel %vm373, %v406, %v410
      %v412 = vshrl.u32 %v348, 16
      %v414 = vrot.slane %v412, 4
      %v415 = vor.u32 %v414, %v410
      %v416 = vrot.slane %v415, 4
      %v418 = vshll.u32 %v364, 16
      %v420 = vrot.slane %v418, 5
      %v421 = vsel %vm373, %v416, %v420
      %v423 = vshrl.u32 %v349, 16
      %v425 = vrot.slane %v423, 4
      %v426 = vshll.u32 %v349, 16
      %v428 = vrot.slane %v426, 5
      %v429 = vor.u32 %v425, %v428
      %v430 = vrot.slane %v429, 4
      %v432 = vshll.u32 %v350, 16
      %v434 = vrot.slane %v432, 5
      %v435 = vsel %vm373, %v430, %v434
      %v436 = vshrl.u32 %v350, 16
      %v438 = vrot.slane %v436, 4
      %v439 = vor.u32 %v438, %v434
      %v440 = vrot.slane %v439, 4
      %v442 = vshll.u32 %v365, 16
      %v444 = vrot.slane %v442, 5
      %v445 = vsel %vm373, %v440, %v444
      %v447 = vshrl.u32 %v351, 16
      %v449 = vrot.slane %v447, 4
      %v450 = vshll.u32 %v351, 16
      %v452 = vrot.slane %v450, 5
      %v453 = vor.u32 %v449, %v452
      %v454 = vrot.slane %v453, 4
      %v456 = vshll.u32 %v352, 16
      %v458 = vrot.slane %v456, 5
      %v459 = vsel %vm373, %v454, %v458
      %v460 = vshrl.u32 %v352, 16
      %v462 = vrot.slane %v460, 4
      %v463 = vor.u32 %v462, %v458
      %v464 = vrot.slane %v463, 4
      %v466 = vshll.u32 %v366, 16
      %v468 = vrot.slane %v466, 5
      %v469 = vsel %vm373, %v464, %v468
      %v471 = vshrl.u32 %v353, 16
      %v473 = vrot.slane %v471, 4
      %v474 = vshll.u32 %v353, 16
      %v476 = vrot.slane %v474, 5
      %v477 = vor.u32 %v473, %v476
      %v478 = vrot.slane %v477, 4
      %v480 = vshll.u32 %v354, 16
      %v482 = vrot.slane %v480, 5
      %v483 = vsel %vm373, %v478, %v482
      %v484 = vshrl.u32 %v354, 16
      %v486 = vrot.slane %v484, 4
      %v487 = vor.u32 %v486, %v482
      %v488 = vrot.slane %v487, 4
      %v490 = vshll.u32 %v367, 16
      %v492 = vrot.slane %v490, 5
      %v493 = vsel %vm373, %v488, %v492
      %v495 = vshrl.u32 %v355, 16
      %v497 = vrot.slane %v495, 4
      %v498 = vshll.u32 %v355, 16
      %v500 = vrot.slane %v498, 5
      %v501 = vor.u32 %v497, %v500
      %v502 = vrot.slane %v501, 4
      %v504 = vshll.u32 %v356, 16
      %v506 = vrot.slane %v504, 5
      %v507 = vsel %vm373, %v502, %v506
      %v508 = vshrl.u32 %v356, 16
      %v510 = vrot.slane %v508, 4
      %v511 = vor.u32 %v510, %v506
      %v512 = vrot.slane %v511, 4
      %v514 = vshll.u32 %v368, 16
      %v516 = vrot.slane %v514, 5
      %v517 = vsel %vm373, %v512, %v516
      %v519 = vshrl.u32 %v357, 16
      %v521 = vrot.slane %v519, 4
      %v522 = vshll.u32 %v357, 16
      %v524 = vrot.slane %v522, 5
      %v525 = vor.u32 %v521, %v524
      %v526 = vrot.slane %v525, 4
      %v528 = vshll.u32 %v358, 16
      %v530 = vrot.slane %v528, 5
      %v531 = vsel %vm373, %v526, %v530
      %v532 = vshrl.u32 %v358, 16
      %v534 = vrot.slane %v532, 4
      %v535 = vor.u32 %v534, %v530
      %v536 = vrot.slane %v535, 4
      %v538 = vshll.u32 %v369, 16
      %v540 = vrot.slane %v538, 5
      %v541 = vsel %vm373, %v536, %v540
      %v543 = vshrl.u32 %v359, 16
      %v545 = vrot.slane %v543, 4
      %v546 = vshll.u32 %v359, 16
      %v548 = vrot.slane %v546, 5
      %v549 = vor.u32 %v545, %v548
      %v550 = vrot.slane %v549, 4
      %v552 = vshll.u32 %v360, 16
      %v554 = vrot.slane %v552, 5
      %v555 = vsel %vm373, %v550, %v554
      %v556 = vshrl.u32 %v360, 16
      %v558 = vrot.slane %v556, 4
      %v559 = vor.u32 %v558, %v554
      %v560 = vrot.slane %v559, 4
      %v562 = vshll.u32 %v370, 16
      %v564 = vrot.slane %v562, 5
      %v565 = vsel %vm373, %v560, %v564
      %v566 = vld [vmem:[%s2 + $0x8] sm:$0xf]
      %v567 = vld [vmem:[%s2 + $0xc] sm:$0xf]
      %v568 = vunpack.c.l.b16 %v387
      %v569 = vunpack.c.l.b16 %v397
      %v570 = vunpack.c.l.b16 %v411
      %v571 = vunpack.c.l.b16 %v421
      %v572 = vunpack.c.l.b16 %v435
      %v573 = vunpack.c.l.b16 %v445
      %v574 = vunpack.c.l.b16 %v459
      %v575 = vunpack.c.l.b16 %v469
      %v576 = vunpack.c.l.b16 %v483
      %v577 = vunpack.c.l.b16 %v493
      %v578 = vunpack.c.l.b16 %v507
      %v579 = vunpack.c.l.b16 %v517
      %v580 = vunpack.c.l.b16 %v531
      %v581 = vunpack.c.l.b16 %v541
      %v582 = vunpack.c.l.b16 %v555
      %v583 = vunpack.c.l.b16 %v565
      %v584 = vpack.c.b16 %v569, %v568
      %v585 = vpack.c.b16 %v571, %v570
      %v586 = vpack.c.b16 %v573, %v572
      %v587 = vpack.c.b16 %v575, %v574
      %v588 = vpack.c.b16 %v577, %v576
      %v589 = vpack.c.b16 %v579, %v578
      %v590 = vpack.c.b16 %v581, %v580
      %v591 = vpack.c.b16 %v583, %v582
      %v594 = vunpack.c.l.b16 %v566
      %v595 = vunpack.c.l.b16 %v567
      %v596 = vpack.c.b16 %v595, %v594
      %vm598 = vcmask 130048
      %v600 = vsel %vm598, %v584, 0
      %v603 = vsel %vm598, %v585, 0
      %v606 = vsel %vm598, %v586, 0
      %v609 = vsel %vm598, %v587, 0
      %v612 = vsel %vm598, %v588, 0
      %v615 = vsel %vm598, %v589, 0
      %v618 = vsel %vm598, %v590, 0
      %v621 = vsel %vm598, %v591, 0
      %623 = vmatprep.subr.bf16.mxu0 0
      %624 = vmatpush1.bf16.msra.mxu0 %v596
      %625 = vmatprep.subr.bf16.mxu0 0
      %626 = vmatpush1.bf16.msra.mxu0 0
      %627 = vmatprep.subr.bf16.mxu0 0
      %628 = vmatpush1.bf16.msra.mxu0 0
      %629 = vmatprep.subr.bf16.mxu0 0
      %630 = vmatpush1.bf16.msra.mxu0 0
      %631 = vmatprep.subr.bf16.mxu0 0
      %632 = vmatpush1.bf16.msra.mxu0 0
      %633 = vmatprep.subr.bf16.mxu0 0
      %634 = vmatpush1.bf16.msra.mxu0 0
      %635 = vmatprep.subr.bf16.mxu0 0
      %636 = vmatpush1.bf16.msra.mxu0 0
      %637 = vmatprep.subr.bf16.mxu0 0
      %638 = vmatpush1.bf16.msra.mxu0 0
      %639 = vmatprep.subr.bf16.mxu0 0
      %640 = vmatpush1.bf16.msra.mxu0 0
      %641 = vmatprep.subr.bf16.mxu0 0
      %642 = vmatpush1.bf16.msra.mxu0 0
      %643 = vmatprep.subr.bf16.mxu0 0
      %644 = vmatpush1.bf16.msra.mxu0 0
      %645 = vmatprep.subr.bf16.mxu0 0
      %646 = vmatpush1.bf16.msra.mxu0 0
      %647 = vmatprep.subr.bf16.mxu0 0
      %648 = vmatpush1.bf16.msra.mxu0 0
      %649 = vmatprep.subr.bf16.mxu0 0
      %650 = vmatpush1.bf16.msra.mxu0 0
      %651 = vmatprep.subr.bf16.mxu0 0
      %652 = vmatpush1.bf16.msra.mxu0 0
      %653 = vmatprep.subr.bf16.mxu0 0
      %654 = vmatpush1.bf16.msra.mxu0 0
      %655 = vmatprep.mubr.bf16.mxu0 0
      %656 = vmatmul.mubr.bf16.gmra.mrb[0].mxu0 %v600
      %v657 = vpop.f32.mrb[0].mxu0
      %v658 = vadd.f32 0.0, %v657
      %v659 = vpop.f32.mrb[0].mxu0
      %v660 = vpop.f32.mrb[0].mxu0
      %v661 = vadd.f32 0.0, %v660
      %v662 = vpop.f32.mrb[0].mxu0
      %663 = vmatprep.mubr.bf16.mxu0 0
      %664 = vmatmul.mubr.bf16.gmra.mrb[0].mxu0 %v603
      %v665 = vpop.f32.mrb[0].mxu0
      %v666 = vadd.f32 0.0, %v665
      %v667 = vpop.f32.mrb[0].mxu0
      %v668 = vpop.f32.mrb[0].mxu0
      %v669 = vadd.f32 0.0, %v668
      %v670 = vpop.f32.mrb[0].mxu0
      %671 = vmatprep.mubr.bf16.mxu0 0
      %672 = vmatmul.mubr.bf16.gmra.mrb[0].mxu0 %v606
      %v673 = vpop.f32.mrb[0].mxu0
      %v674 = vadd.f32 0.0, %v673
      %v675 = vpop.f32.mrb[0].mxu0
      %v676 = vpop.f32.mrb[0].mxu0
      %v677 = vadd.f32 0.0, %v676
      %v678 = vpop.f32.mrb[0].mxu0
      %679 = vmatprep.mubr.bf16.mxu0 0
      %680 = vmatmul.mubr.bf16.gmra.mrb[0].mxu0 %v609
      %v681 = vpop.f32.mrb[0].mxu0
      %v682 = vadd.f32 0.0, %v681
      %v683 = vpop.f32.mrb[0].mxu0
      %v684 = vpop.f32.mrb[0].mxu0
      %v685 = vadd.f32 0.0, %v684
      %v686 = vpop.f32.mrb[0].mxu0
      %687 = vmatprep.mubr.bf16.mxu0 0
      %688 = vmatmul.mubr.bf16.gmra.mrb[0].mxu0 %v612
      %v689 = vpop.f32.mrb[0].mxu0
      %v690 = vadd.f32 0.0, %v689
      %v691 = vpop.f32.mrb[0].mxu0
      %v692 = vpop.f32.mrb[0].mxu0
      %v693 = vadd.f32 0.0, %v692
      %v694 = vpop.f32.mrb[0].mxu0
      %695 = vmatprep.mubr.bf16.mxu0 0
      %696 = vmatmul.mubr.bf16.gmra.mrb[0].mxu0 %v615
      %v697 = vpop.f32.mrb[0].mxu0
      %v698 = vadd.f32 0.0, %v697
      %v699 = vpop.f32.mrb[0].mxu0
      %v700 = vpop.f32.mrb[0].mxu0
      %v701 = vadd.f32 0.0, %v700
      %v702 = vpop.f32.mrb[0].mxu0
      %703 = vmatprep.mubr.bf16.mxu0 0
      %704 = vmatmul.mubr.bf16.gmra.mrb[0].mxu0 %v618
      %v705 = vpop.f32.mrb[0].mxu0
      %v706 = vadd.f32 0.0, %v705
      %v707 = vpop.f32.mrb[0].mxu0
      %v708 = vpop.f32.mrb[0].mxu0
      %v709 = vadd.f32 0.0, %v708
      %v710 = vpop.f32.mrb[0].mxu0
      %711 = vmatprep.mubr.bf16.mxu0 0
      %712 = vmatmul.mubr.bf16.gmra.mrb[0].mxu0 %v621
      %v713 = vpop.f32.mrb[0].mxu0
      %v714 = vadd.f32 0.0, %v713
      %v715 = vpop.f32.mrb[0].mxu0
      %v716 = vpop.f32.mrb[0].mxu0
      %v717 = vadd.f32 0.0, %v716
      %v718 = vpop.f32.mrb[0].mxu0
      %719 = vdwg.mxu0
      %v736 = vunpack.c.l.b16 %v345
      %v737 = vunpack.c.l.b16 %v346
      %v738 = vunpack.c.l.b16 %v347
      %v739 = vunpack.c.l.b16 %v348
      %v740 = vunpack.c.l.b16 %v349
      %v741 = vunpack.c.l.b16 %v350
      %v742 = vunpack.c.l.b16 %v351
      %v743 = vunpack.c.l.b16 %v352
      %v744 = vunpack.c.l.b16 %v353
      %v745 = vunpack.c.l.b16 %v354
      %v746 = vunpack.c.l.b16 %v355
      %v747 = vunpack.c.l.b16 %v356
      %v748 = vunpack.c.l.b16 %v357
      %v749 = vunpack.c.l.b16 %v358
      %v750 = vunpack.c.l.b16 %v359
      %v751 = vunpack.c.l.b16 %v360
      %v752 = vpack.c.b16 %v737, %v736
      %v753 = vpack.c.b16 %v739, %v738
      %v754 = vpack.c.b16 %v741, %v740
      %v755 = vpack.c.b16 %v743, %v742
      %v756 = vpack.c.b16 %v745, %v744
      %v757 = vpack.c.b16 %v747, %v746
      %v758 = vpack.c.b16 %v749, %v748
      %v759 = vpack.c.b16 %v751, %v750
      %v762 = vunpack.c.l.b16 %v361
      %v763 = vunpack.c.l.b16 %v362
      %v764 = vpack.c.b16 %v763, %v762
      %v767 = vsel %vm598, %v752, 0
      %v770 = vsel %vm598, %v753, 0
      %v773 = vsel %vm598, %v754, 0
      %v776 = vsel %vm598, %v755, 0
      %v779 = vsel %vm598, %v756, 0
      %v782 = vsel %vm598, %v757, 0
      %v785 = vsel %vm598, %v758, 0
      %v788 = vsel %vm598, %v759, 0
      %790 = vmatprep.subr.bf16.mxu0 0
      %791 = vmatpush1.bf16.msra.mxu0 %v764
      %792 = vmatprep.subr.bf16.mxu0 0
      %793 = vmatpush1.bf16.msra.mxu0 0
      %794 = vmatprep.subr.bf16.mxu0 0
      %795 = vmatpush1.bf16.msra.mxu0 0
      %796 = vmatprep.subr.bf16.mxu0 0
      %797 = vmatpush1.bf16.msra.mxu0 0
      %798 = vmatprep.subr.bf16.mxu0 0
      %799 = vmatpush1.bf16.msra.mxu0 0
      %800 = vmatprep.subr.bf16.mxu0 0
      %801 = vmatpush1.bf16.msra.mxu0 0
      %802 = vmatprep.subr.bf16.mxu0 0
      %803 = vmatpush1.bf16.msra.mxu0 0
      %804 = vmatprep.subr.bf16.mxu0 0
      %805 = vmatpush1.bf16.msra.mxu0 0
      %806 = vmatprep.subr.bf16.mxu0 0
      %807 = vmatpush1.bf16.msra.mxu0 0
      %808 = vmatprep.subr.bf16.mxu0 0
      %809 = vmatpush1.bf16.msra.mxu0 0
      %810 = vmatprep.subr.bf16.mxu0 0
      %811 = vmatpush1.bf16.msra.mxu0 0
      %812 = vmatprep.subr.bf16.mxu0 0
      %813 = vmatpush1.bf16.msra.mxu0 0
      %814 = vmatprep.subr.bf16.mxu0 0
      %815 = vmatpush1.bf16.msra.mxu0 0
      %816 = vmatprep.subr.bf16.mxu0 0
      %817 = vmatpush1.bf16.msra.mxu0 0
      %818 = vmatprep.subr.bf16.mxu0 0
      %819 = vmatpush1.bf16.msra.mxu0 0
      %820 = vmatprep.subr.bf16.mxu0 0
      %821 = vmatpush1.bf16.msra.mxu0 0
      %822 = vmatprep.mubr.bf16.mxu0 0
      %823 = vmatmul.mubr.bf16.gmra.mrb[0].mxu0 %v767
      %v824 = vpop.f32.mrb[0].mxu0
      %v825 = vadd.f32 %v658, %v824
      %v826 = vpop.f32.mrb[0].mxu0
      %v827 = vpop.f32.mrb[0].mxu0
      %v828 = vadd.f32 %v661, %v827
      %v829 = vpop.f32.mrb[0].mxu0
      %830 = vmatprep.mubr.bf16.mxu0 0
      %831 = vmatmul.mubr.bf16.gmra.mrb[0].mxu0 %v770
      %v832 = vpop.f32.mrb[0].mxu0
      %v833 = vadd.f32 %v666, %v832
      %v834 = vpop.f32.mrb[0].mxu0
      %v835 = vpop.f32.mrb[0].mxu0
      %v836 = vadd.f32 %v669, %v835
      %v837 = vpop.f32.mrb[0].mxu0
      %838 = vmatprep.mubr.bf16.mxu0 0
      %839 = vmatmul.mubr.bf16.gmra.mrb[0].mxu0 %v773
      %v840 = vpop.f32.mrb[0].mxu0
      %v841 = vadd.f32 %v674, %v840
      %v842 = vpop.f32.mrb[0].mxu0
      %v843 = vpop.f32.mrb[0].mxu0
      %v844 = vadd.f32 %v677, %v843
      %v845 = vpop.f32.mrb[0].mxu0
      %846 = vmatprep.mubr.bf16.mxu0 0
      %847 = vmatmul.mubr.bf16.gmra.mrb[0].mxu0 %v776
      %v848 = vpop.f32.mrb[0].mxu0
      %v849 = vadd.f32 %v682, %v848
      %v850 = vpop.f32.mrb[0].mxu0
      %v851 = vpop.f32.mrb[0].mxu0
      %v852 = vadd.f32 %v685, %v851
      %v853 = vpop.f32.mrb[0].mxu0
      %854 = vmatprep.mubr.bf16.mxu0 0
      %855 = vmatmul.mubr.bf16.gmra.mrb[0].mxu0 %v779
      %v856 = vpop.f32.mrb[0].mxu0
      %v857 = vadd.f32 %v690, %v856
      %v858 = vpop.f32.mrb[0].mxu0
      %v859 = vpop.f32.mrb[0].mxu0
      %v860 = vadd.f32 %v693, %v859
      %v861 = vpop.f32.mrb[0].mxu0
      %862 = vmatprep.mubr.bf16.mxu0 0
      %863 = vmatmul.mubr.bf16.gmra.mrb[0].mxu0 %v782
      %v864 = vpop.f32.mrb[0].mxu0
      %v865 = vadd.f32 %v698, %v864
      %v866 = vpop.f32.mrb[0].mxu0
      %v867 = vpop.f32.mrb[0].mxu0
      %v868 = vadd.f32 %v701, %v867
      %v869 = vpop.f32.mrb[0].mxu0
      %870 = vmatprep.mubr.bf16.mxu0 0
      %871 = vmatmul.mubr.bf16.gmra.mrb[0].mxu0 %v785
      %v872 = vpop.f32.mrb[0].mxu0
      %v873 = vadd.f32 %v706, %v872
      %v874 = vpop.f32.mrb[0].mxu0
      %v875 = vpop.f32.mrb[0].mxu0
      %v876 = vadd.f32 %v709, %v875
      %v877 = vpop.f32.mrb[0].mxu0
      %878 = vmatprep.mubr.bf16.mxu0 0
      %879 = vmatmul.mubr.bf16.gmra.mrb[0].mxu0 %v788
      %v880 = vpop.f32.mrb[0].mxu0
      %v881 = vadd.f32 %v714, %v880
      %v882 = vpop.f32.mrb[0].mxu0
      %v883 = vpop.f32.mrb[0].mxu0
      %v884 = vadd.f32 %v717, %v883
      %v885 = vpop.f32.mrb[0].mxu0
      %886 = vdwg.mxu0
      %v887 = vld [vmem:[%s314] sm:$0xe]
      %v888 = vld [vmem:[%s314 + $0x18] sm:$0xe]
      %v889 = vld [vmem:[%s314 + $0x30] sm:$0xe]
      %v890 = vld [vmem:[%s314 + $0x48] sm:$0xe]
      %v891 = vld [vmem:[%s314 + $0x60] sm:$0xe]
      %v892 = vld [vmem:[%s314 + $0x78] sm:$0xe]
      %v893 = vld [vmem:[%s314 + $0x90] sm:$0xe]
      %v894 = vld [vmem:[%s314 + $0xa8] sm:$0xe]
      %vm911 = vcmask 1042432
      %vm912 = vcmask 1046532
      %vm913 = vmor %vm911, %vm912
      %v914 = vrot.slane %v887, 5
      %v915 = vrot.slane %v914, 4
      %v916 = vrot.slane %v346, 5
      %v917 = vsel %vm913, %v915, %v916
      %v918 = vrot.slane %v916, 4
      %v919 = vrot.slane %v363, 5
      %v920 = vsel %vm913, %v918, %v919
      %v921 = vrot.slane %v888, 5
      %v922 = vrot.slane %v921, 4
      %v923 = vrot.slane %v348, 5
      %v924 = vsel %vm913, %v922, %v923
      %v925 = vrot.slane %v923, 4
      %v926 = vrot.slane %v364, 5
      %v927 = vsel %vm913, %v925, %v926
      %v928 = vrot.slane %v889, 5
      %v929 = vrot.slane %v928, 4
      %v930 = vrot.slane %v350, 5
      %v931 = vsel %vm913, %v929, %v930
      %v932 = vrot.slane %v930, 4
      %v933 = vrot.slane %v365, 5
      %v934 = vsel %vm913, %v932, %v933
      %v935 = vrot.slane %v890, 5
      %v936 = vrot.slane %v935, 4
      %v937 = vrot.slane %v352, 5
      %v938 = vsel %vm913, %v936, %v937
      %v939 = vrot.slane %v937, 4
      %v940 = vrot.slane %v366, 5
      %v941 = vsel %vm913, %v939, %v940
      %v942 = vrot.slane %v891, 5
      %v943 = vrot.slane %v942, 4
      %v944 = vrot.slane %v354, 5
      %v945 = vsel %vm913, %v943, %v944
      %v946 = vrot.slane %v944, 4
      %v947 = vrot.slane %v367, 5
      %v948 = vsel %vm913, %v946, %v947
      %v949 = vrot.slane %v892, 5
      %v950 = vrot.slane %v949, 4
      %v951 = vrot.slane %v356, 5
      %v952 = vsel %vm913, %v950, %v951
      %v953 = vrot.slane %v951, 4
      %v954 = vrot.slane %v368, 5
      %v955 = vsel %vm913, %v953, %v954
      %v956 = vrot.slane %v893, 5
      %v957 = vrot.slane %v956, 4
      %v958 = vrot.slane %v358, 5
      %v959 = vsel %vm913, %v957, %v958
      %v960 = vrot.slane %v958, 4
      %v961 = vrot.slane %v369, 5
      %v962 = vsel %vm913, %v960, %v961
      %v963 = vrot.slane %v894, 5
      %v964 = vrot.slane %v963, 4
      %v965 = vrot.slane %v360, 5
      %v966 = vsel %vm913, %v964, %v965
      %v967 = vrot.slane %v965, 4
      %v968 = vrot.slane %v370, 5
      %v969 = vsel %vm913, %v967, %v968
      %v970 = vld [vmem:[%s2 + $0x10] sm:$0xf]
      %v971 = vld [vmem:[%s2 + $0x14] sm:$0xf]
      %v972 = vunpack.c.l.b16 %v917
      %v973 = vunpack.c.l.b16 %v920
      %v974 = vunpack.c.l.b16 %v924
      %v975 = vunpack.c.l.b16 %v927
      %v976 = vunpack.c.l.b16 %v931
      %v977 = vunpack.c.l.b16 %v934
      %v978 = vunpack.c.l.b16 %v938
      %v979 = vunpack.c.l.b16 %v941
      %v980 = vunpack.c.l.b16 %v945
      %v981 = vunpack.c.l.b16 %v948
      %v982 = vunpack.c.l.b16 %v952
      %v983 = vunpack.c.l.b16 %v955
      %v984 = vunpack.c.l.b16 %v959
      %v985 = vunpack.c.l.b16 %v962
      %v986 = vunpack.c.l.b16 %v966
      %v987 = vunpack.c.l.b16 %v969
      %v988 = vpack.c.b16 %v973, %v972
      %v989 = vpack.c.b16 %v975, %v974
      %v990 = vpack.c.b16 %v977, %v976
      %v991 = vpack.c.b16 %v979, %v978
      %v992 = vpack.c.b16 %v981, %v980
      %v993 = vpack.c.b16 %v983, %v982
      %v994 = vpack.c.b16 %v985, %v984
      %v995 = vpack.c.b16 %v987, %v986
      %v998 = vunpack.c.l.b16 %v970
      %v999 = vunpack.c.l.b16 %v971
      %v1000 = vpack.c.b16 %v999, %v998
      %v1003 = vsel %vm598, %v988, 0
      %v1006 = vsel %vm598, %v989, 0
      %v1009 = vsel %vm598, %v990, 0
      %v1012 = vsel %vm598, %v991, 0
      %v1015 = vsel %vm598, %v992, 0
      %v1018 = vsel %vm598, %v993, 0
      %v1021 = vsel %vm598, %v994, 0
      %v1024 = vsel %vm598, %v995, 0
      %1026 = vmatprep.subr.bf16.mxu0 0
      %1027 = vmatpush1.bf16.msra.mxu0 %v1000
      %1028 = vmatprep.subr.bf16.mxu0 0
      %1029 = vmatpush1.bf16.msra.mxu0 0
      %1030 = vmatprep.subr.bf16.mxu0 0
      %1031 = vmatpush1.bf16.msra.mxu0 0
      %1032 = vmatprep.subr.bf16.mxu0 0
      %1033 = vmatpush1.bf16.msra.mxu0 0
      %1034 = vmatprep.subr.bf16.mxu0 0
      %1035 = vmatpush1.bf16.msra.mxu0 0
      %1036 = vmatprep.subr.bf16.mxu0 0
      %1037 = vmatpush1.bf16.msra.mxu0 0
      %1038 = vmatprep.subr.bf16.mxu0 0
      %1039 = vmatpush1.bf16.msra.mxu0 0
      %1040 = vmatprep.subr.bf16.mxu0 0
      %1041 = vmatpush1.bf16.msra.mxu0 0
      %1042 = vmatprep.subr.bf16.mxu0 0
      %1043 = vmatpush1.bf16.msra.mxu0 0
      %1044 = vmatprep.subr.bf16.mxu0 0
      %1045 = vmatpush1.bf16.msra.mxu0 0
      %1046 = vmatprep.subr.bf16.mxu0 0
      %1047 = vmatpush1.bf16.msra.mxu0 0
      %1048 = vmatprep.subr.bf16.mxu0 0
      %1049 = vmatpush1.bf16.msra.mxu0 0
      %1050 = vmatprep.subr.bf16.mxu0 0
      %1051 = vmatpush1.bf16.msra.mxu0 0
      %1052 = vmatprep.subr.bf16.mxu0 0
      %1053 = vmatpush1.bf16.msra.mxu0 0
      %1054 = vmatprep.subr.bf16.mxu0 0
      %1055 = vmatpush1.bf16.msra.mxu0 0
      %1056 = vmatprep.subr.bf16.mxu0 0
      %1057 = vmatpush1.bf16.msra.mxu0 0
      %1058 = vmatprep.mubr.bf16.mxu0 0
      %1059 = vmatmul.mubr.bf16.gmra.mrb[0].mxu0 %v1003
      %v1060 = vpop.f32.mrb[0].mxu0
      %v1061 = vadd.f32 0.0, %v1060
      %v1062 = vpop.f32.mrb[0].mxu0
      %v1063 = vpop.f32.mrb[0].mxu0
      %v1064 = vadd.f32 0.0, %v1063
      %v1065 = vpop.f32.mrb[0].mxu0
      %1066 = vmatprep.mubr.bf16.mxu0 0
      %1067 = vmatmul.mubr.bf16.gmra.mrb[0].mxu0 %v1006
      %v1068 = vpop.f32.mrb[0].mxu0
      %v1069 = vadd.f32 0.0, %v1068
      %v1070 = vpop.f32.mrb[0].mxu0
      %v1071 = vpop.f32.mrb[0].mxu0
      %v1072 = vadd.f32 0.0, %v1071
      %v1073 = vpop.f32.mrb[0].mxu0
      %1074 = vmatprep.mubr.bf16.mxu0 0
      %1075 = vmatmul.mubr.bf16.gmra.mrb[0].mxu0 %v1009
      %v1076 = vpop.f32.mrb[0].mxu0
      %v1077 = vadd.f32 0.0, %v1076
      %v1078 = vpop.f32.mrb[0].mxu0
      %v1079 = vpop.f32.mrb[0].mxu0
      %v1080 = vadd.f32 0.0, %v1079
      %v1081 = vpop.f32.mrb[0].mxu0
      %1082 = vmatprep.mubr.bf16.mxu0 0
      %1083 = vmatmul.mubr.bf16.gmra.mrb[0].mxu0 %v1012
      %v1084 = vpop.f32.mrb[0].mxu0
      %v1085 = vadd.f32 0.0, %v1084
      %v1086 = vpop.f32.mrb[0].mxu0
      %v1087 = vpop.f32.mrb[0].mxu0
      %v1088 = vadd.f32 0.0, %v1087
      %v1089 = vpop.f32.mrb[0].mxu0
      %1090 = vmatprep.mubr.bf16.mxu0 0
      %1091 = vmatmul.mubr.bf16.gmra.mrb[0].mxu0 %v1015
      %v1092 = vpop.f32.mrb[0].mxu0
      %v1093 = vadd.f32 0.0, %v1092
      %v1094 = vpop.f32.mrb[0].mxu0
      %v1095 = vpop.f32.mrb[0].mxu0
      %v1096 = vadd.f32 0.0, %v1095
      %v1097 = vpop.f32.mrb[0].mxu0
      %1098 = vmatprep.mubr.bf16.mxu0 0
      %1099 = vmatmul.mubr.bf16.gmra.mrb[0].mxu0 %v1018
      %v1100 = vpop.f32.mrb[0].mxu0
      %v1101 = vadd.f32 0.0, %v1100
      %v1102 = vpop.f32.mrb[0].mxu0
      %v1103 = vpop.f32.mrb[0].mxu0
      %v1104 = vadd.f32 0.0, %v1103
      %v1105 = vpop.f32.mrb[0].mxu0
      %1106 = vmatprep.mubr.bf16.mxu0 0
      %1107 = vmatmul.mubr.bf16.gmra.mrb[0].mxu0 %v1021
      %v1108 = vpop.f32.mrb[0].mxu0
      %v1109 = vadd.f32 0.0, %v1108
      %v1110 = vpop.f32.mrb[0].mxu0
      %v1111 = vpop.f32.mrb[0].mxu0
      %v1112 = vadd.f32 0.0, %v1111
      %v1113 = vpop.f32.mrb[0].mxu0
      %1114 = vmatprep.mubr.bf16.mxu0 0
      %1115 = vmatmul.mubr.bf16.gmra.mrb[0].mxu0 %v1024
      %v1116 = vpop.f32.mrb[0].mxu0
      %v1117 = vadd.f32 0.0, %v1116
      %v1118 = vpop.f32.mrb[0].mxu0
      %v1119 = vpop.f32.mrb[0].mxu0
      %v1120 = vadd.f32 0.0, %v1119
      %v1121 = vpop.f32.mrb[0].mxu0
      %1122 = vdwg.mxu0
      %v1123 = vadd.f32 %v825, %v1061
      %v1124 = vadd.f32 %v828, %v1064
      %v1125 = vadd.f32 %v833, %v1069
      %v1126 = vadd.f32 %v836, %v1072
      %v1127 = vadd.f32 %v841, %v1077
      %v1128 = vadd.f32 %v844, %v1080
      %v1129 = vadd.f32 %v849, %v1085
      %v1130 = vadd.f32 %v852, %v1088
      %v1131 = vadd.f32 %v857, %v1093
      %v1132 = vadd.f32 %v860, %v1096
      %v1133 = vadd.f32 %v865, %v1101
      %v1134 = vadd.f32 %v868, %v1104
      %v1135 = vadd.f32 %v873, %v1109
      %v1136 = vadd.f32 %v876, %v1112
      %v1137 = vadd.f32 %v881, %v1117
      %v1138 = vadd.f32 %v884, %v1120
      %vm1139 = vcmask 523264
      %1140 = vst.msk [vmem:[#allocation2] sm:$0xff] %vm1139, %v1123
      %1141 = vst.msk [vmem:[#allocation2 + $0x8] sm:$0xff] %vm1139, %v1124
      %1142 = vst.msk [vmem:[#allocation2 + $0x10] sm:$0xff] %vm1139, %v1125
      %1143 = vst.msk [vmem:[#allocation2 + $0x18] sm:$0xff] %vm1139, %v1126
      %1144 = vst.msk [vmem:[#allocation2 + $0x20] sm:$0xff] %vm1139, %v1127
      %1145 = vst.msk [vmem:[#allocation2 + $0x28] sm:$0xff] %vm1139, %v1128
      %1146 = vst.msk [vmem:[#allocation2 + $0x30] sm:$0xff] %vm1139, %v1129
      %1147 = vst.msk [vmem:[#allocation2 + $0x38] sm:$0xff] %vm1139, %v1130
      %1148 = vst.msk [vmem:[#allocation2 + $0x40] sm:$0xff] %vm1139, %v1131
      %1149 = vst.msk [vmem:[#allocation2 + $0x48] sm:$0xff] %vm1139, %v1132
      %1150 = vst.msk [vmem:[#allocation2 + $0x50] sm:$0xff] %vm1139, %v1133
      %1151 = vst.msk [vmem:[#allocation2 + $0x58] sm:$0xff] %vm1139, %v1134
      %1152 = vst.msk [vmem:[#allocation2 + $0x60] sm:$0xff] %vm1139, %v1135
      %1153 = vst.msk [vmem:[#allocation2 + $0x68] sm:$0xff] %vm1139, %v1136
      %1154 = vst.msk [vmem:[#allocation2 + $0x70] sm:$0xff] %vm1139, %v1137
      %1155 = vst.msk [vmem:[#allocation2 + $0x78] sm:$0xff] %vm1139, %v1138
      %s1156 = scalar_lea.vmem %s314, 12
      %v1157 = vld [vmem:[%s1156] sm:$0xf]
      %v1158 = vld [vmem:[%s1156 + $0x4] sm:$0xf]
      %v1159 = vld [vmem:[%s1156 + $0x18] sm:$0xf]
      %v1160 = vld [vmem:[%s1156 + $0x1c] sm:$0xf]
      %v1161 = vld [vmem:[%s1156 + $0x30] sm:$0xf]
      %v1162 = vld [vmem:[%s1156 + $0x34] sm:$0xf]
      %v1163 = vld [vmem:[%s1156 + $0x48] sm:$0xf]
      %v1164 = vld [vmem:[%s1156 + $0x4c] sm:$0xf]
      %v1165 = vld [vmem:[%s1156 + $0x60] sm:$0xf]
      %v1166 = vld [vmem:[%s1156 + $0x64] sm:$0xf]
      %v1167 = vld [vmem:[%s1156 + $0x78] sm:$0xf]
      %v1168 = vld [vmem:[%s1156 + $0x7c] sm:$0xf]
      %v1169 = vld [vmem:[%s1156 + $0x90] sm:$0xf]
      %v1170 = vld [vmem:[%s1156 + $0x94] sm:$0xf]
      %v1171 = vld [vmem:[%s1156 + $0xa8] sm:$0xf]
      %v1172 = vld [vmem:[%s1156 + $0xac] sm:$0xf]
      %v1173 = vld [vmem:[%s2 + $0x18] sm:$0xf]
      %v1174 = vld [vmem:[%s2 + $0x1c] sm:$0xf]
      %v1175 = vld [vmem:[%s1156 + $0x8] sm:$0x1]
      %v1176 = vld [vmem:[%s1156 + $0x20] sm:$0x1]
      %v1177 = vld [vmem:[%s1156 + $0x38] sm:$0x1]
      %v1178 = vld [vmem:[%s1156 + $0x50] sm:$0x1]
      %v1179 = vld [vmem:[%s1156 + $0x68] sm:$0x1]
      %v1180 = vld [vmem:[%s1156 + $0x80] sm:$0x1]
      %v1181 = vld [vmem:[%s1156 + $0x98] sm:$0x1]
      %v1182 = vld [vmem:[%s1156 + $0xb0] sm:$0x1]
      %v1184 = vshrl.u32 %v1157, 16
      %v1186 = vrot.slane %v1184, 4
      %v1187 = vshll.u32 %v1157, 16
      %v1189 = vrot.slane %v1187, 5
      %v1190 = vor.u32 %v1186, %v1189
      %v1191 = vrot.slane %v1190, 4
      %v1193 = vshll.u32 %v1158, 16
      %v1195 = vrot.slane %v1193, 5
      %v1196 = vsel %vm373, %v1191, %v1195
      %v1197 = vshrl.u32 %v1158, 16
      %v1199 = vrot.slane %v1197, 4
      %v1200 = vor.u32 %v1199, %v1195
      %v1201 = vrot.slane %v1200, 4
      %v1203 = vshll.u32 %v1175, 16
      %v1205 = vrot.slane %v1203, 5
      %v1206 = vsel %vm373, %v1201, %v1205
      %v1208 = vshrl.u32 %v1159, 16
      %v1210 = vrot.slane %v1208, 4
      %v1211 = vshll.u32 %v1159, 16
      %v1213 = vrot.slane %v1211, 5
      %v1214 = vor.u32 %v1210, %v1213
      %v1215 = vrot.slane %v1214, 4
      %v1217 = vshll.u32 %v1160, 16
      %v1219 = vrot.slane %v1217, 5
      %v1220 = vsel %vm373, %v1215, %v1219
      %v1221 = vshrl.u32 %v1160, 16
      %v1223 = vrot.slane %v1221, 4
      %v1224 = vor.u32 %v1223, %v1219
      %v1225 = vrot.slane %v1224, 4
      %v1227 = vshll.u32 %v1176, 16
      %v1229 = vrot.slane %v1227, 5
      %v1230 = vsel %vm373, %v1225, %v1229
      %v1232 = vshrl.u32 %v1161, 16
      %v1234 = vrot.slane %v1232, 4
      %v1235 = vshll.u32 %v1161, 16
      %v1237 = vrot.slane %v1235, 5
      %v1238 = vor.u32 %v1234, %v1237
      %v1239 = vrot.slane %v1238, 4
      %v1241 = vshll.u32 %v1162, 16
      %v1243 = vrot.slane %v1241, 5
      %v1244 = vsel %vm373, %v1239, %v1243
      %v1245 = vshrl.u32 %v1162, 16
      %v1247 = vrot.slane %v1245, 4
      %v1248 = vor.u32 %v1247, %v1243
      %v1249 = vrot.slane %v1248, 4
      %v1251 = vshll.u32 %v1177, 16
      %v1253 = vrot.slane %v1251, 5
      %v1254 = vsel %vm373, %v1249, %v1253
      %v1256 = vshrl.u32 %v1163, 16
      %v1258 = vrot.slane %v1256, 4
      %v1259 = vshll.u32 %v1163, 16
      %v1261 = vrot.slane %v1259, 5
      %v1262 = vor.u32 %v1258, %v1261
      %v1263 = vrot.slane %v1262, 4
      %v1265 = vshll.u32 %v1164, 16
      %v1267 = vrot.slane %v1265, 5
      %v1268 = vsel %vm373, %v1263, %v1267
      %v1269 = vshrl.u32 %v1164, 16
      %v1271 = vrot.slane %v1269, 4
      %v1272 = vor.u32 %v1271, %v1267
      %v1273 = vrot.slane %v1272, 4
      %v1275 = vshll.u32 %v1178, 16
      %v1277 = vrot.slane %v1275, 5
      %v1278 = vsel %vm373, %v1273, %v1277
      %v1280 = vshrl.u32 %v1165, 16
      %v1282 = vrot.slane %v1280, 4
      %v1283 = vshll.u32 %v1165, 16
      %v1285 = vrot.slane %v1283, 5
      %v1286 = vor.u32 %v1282, %v1285
      %v1287 = vrot.slane %v1286, 4
      %v1289 = vshll.u32 %v1166, 16
      %v1291 = vrot.slane %v1289, 5
      %v1292 = vsel %vm373, %v1287, %v1291
      %v1293 = vshrl.u32 %v1166, 16
      %v1295 = vrot.slane %v1293, 4
      %v1296 = vor.u32 %v1295, %v1291
      %v1297 = vrot.slane %v1296, 4
      %v1299 = vshll.u32 %v1179, 16
      %v1301 = vrot.slane %v1299, 5
      %v1302 = vsel %vm373, %v1297, %v1301
      %v1304 = vshrl.u32 %v1167, 16
      %v1306 = vrot.slane %v1304, 4
      %v1307 = vshll.u32 %v1167, 16
      %v1309 = vrot.slane %v1307, 5
      %v1310 = vor.u32 %v1306, %v1309
      %v1311 = vrot.slane %v1310, 4
      %v1313 = vshll.u32 %v1168, 16
      %v1315 = vrot.slane %v1313, 5
      %v1316 = vsel %vm373, %v1311, %v1315
      %v1317 = vshrl.u32 %v1168, 16
      %v1319 = vrot.slane %v1317, 4
      %v1320 = vor.u32 %v1319, %v1315
      %v1321 = vrot.slane %v1320, 4
      %v1323 = vshll.u32 %v1180, 16
      %v1325 = vrot.slane %v1323, 5
      %v1326 = vsel %vm373, %v1321, %v1325
      %v1328 = vshrl.u32 %v1169, 16
      %v1330 = vrot.slane %v1328, 4
      %v1331 = vshll.u32 %v1169, 16
      %v1333 = vrot.slane %v1331, 5
      %v1334 = vor.u32 %v1330, %v1333
      %v1335 = vrot.slane %v1334, 4
      %v1337 = vshll.u32 %v1170, 16
      %v1339 = vrot.slane %v1337, 5
      %v1340 = vsel %vm373, %v1335, %v1339
      %v1341 = vshrl.u32 %v1170, 16
      %v1343 = vrot.slane %v1341, 4
      %v1344 = vor.u32 %v1343, %v1339
      %v1345 = vrot.slane %v1344, 4
      %v1347 = vshll.u32 %v1181, 16
      %v1349 = vrot.slane %v1347, 5
      %v1350 = vsel %vm373, %v1345, %v1349
      %v1352 = vshrl.u32 %v1171, 16
      %v1354 = vrot.slane %v1352, 4
      %v1355 = vshll.u32 %v1171, 16
      %v1357 = vrot.slane %v1355, 5
      %v1358 = vor.u32 %v1354, %v1357
      %v1359 = vrot.slane %v1358, 4
      %v1361 = vshll.u32 %v1172, 16
      %v1363 = vrot.slane %v1361, 5
      %v1364 = vsel %vm373, %v1359, %v1363
      %v1365 = vshrl.u32 %v1172, 16
      %v1367 = vrot.slane %v1365, 4
      %v1368 = vor.u32 %v1367, %v1363
      %v1369 = vrot.slane %v1368, 4
      %v1371 = vshll.u32 %v1182, 16
      %v1373 = vrot.slane %v1371, 5
      %v1374 = vsel %vm373, %v1369, %v1373
      %v1375 = vld [vmem:[%s2 + $0x20] sm:$0xf]
      %v1376 = vld [vmem:[%s2 + $0x24] sm:$0xf]
      %v1377 = vunpack.c.l.b16 %v1196
      %v1378 = vunpack.c.l.b16 %v1206
      %v1379 = vunpack.c.l.b16 %v1220
      %v1380 = vunpack.c.l.b16 %v1230
      %v1381 = vunpack.c.l.b16 %v1244
      %v1382 = vunpack.c.l.b16 %v1254
      %v1383 = vunpack.c.l.b16 %v1268
      %v1384 = vunpack.c.l.b16 %v1278
      %v1385 = vunpack.c.l.b16 %v1292
      %v1386 = vunpack.c.l.b16 %v1302
      %v1387 = vunpack.c.l.b16 %v1316
      %v1388 = vunpack.c.l.b16 %v1326
      %v1389 = vunpack.c.l.b16 %v1340
      %v1390 = vunpack.c.l.b16 %v1350
      %v1391 = vunpack.c.l.b16 %v1364
      %v1392 = vunpack.c.l.b16 %v1374
      %v1393 = vpack.c.b16 %v1378, %v1377
      %v1394 = vpack.c.b16 %v1380, %v1379
      %v1395 = vpack.c.b16 %v1382, %v1381
      %v1396 = vpack.c.b16 %v1384, %v1383
      %v1397 = vpack.c.b16 %v1386, %v1385
      %v1398 = vpack.c.b16 %v1388, %v1387
      %v1399 = vpack.c.b16 %v1390, %v1389
      %v1400 = vpack.c.b16 %v1392, %v1391
      %v1403 = vunpack.c.l.b16 %v1375
      %v1404 = vunpack.c.l.b16 %v1376
      %v1405 = vpack.c.b16 %v1404, %v1403
      %v1408 = vsel %vm598, %v1393, 0
      %v1411 = vsel %vm598, %v1394, 0
      %v1414 = vsel %vm598, %v1395, 0
      %v1417 = vsel %vm598, %v1396, 0
      %v1420 = vsel %vm598, %v1397, 0
      %v1423 = vsel %vm598, %v1398, 0
      %v1426 = vsel %vm598, %v1399, 0
      %v1429 = vsel %vm598, %v1400, 0
      %1431 = vmatprep.subr.bf16.mxu0 0
      %1432 = vmatpush1.bf16.msra.mxu0 %v1405
      %1433 = vmatprep.subr.bf16.mxu0 0
      %1434 = vmatpush1.bf16.msra.mxu0 0
      %1435 = vmatprep.subr.bf16.mxu0 0
      %1436 = vmatpush1.bf16.msra.mxu0 0
      %1437 = vmatprep.subr.bf16.mxu0 0
      %1438 = vmatpush1.bf16.msra.mxu0 0
      %1439 = vmatprep.subr.bf16.mxu0 0
      %1440 = vmatpush1.bf16.msra.mxu0 0
      %1441 = vmatprep.subr.bf16.mxu0 0
      %1442 = vmatpush1.bf16.msra.mxu0 0
      %1443 = vmatprep.subr.bf16.mxu0 0
      %1444 = vmatpush1.bf16.msra.mxu0 0
      %1445 = vmatprep.subr.bf16.mxu0 0
      %1446 = vmatpush1.bf16.msra.mxu0 0
      %1447 = vmatprep.subr.bf16.mxu0 0
      %1448 = vmatpush1.bf16.msra.mxu0 0
      %1449 = vmatprep.subr.bf16.mxu0 0
      %1450 = vmatpush1.bf16.msra.mxu0 0
      %1451 = vmatprep.subr.bf16.mxu0 0
      %1452 = vmatpush1.bf16.msra.mxu0 0
      %1453 = vmatprep.subr.bf16.mxu0 0
      %1454 = vmatpush1.bf16.msra.mxu0 0
      %1455 = vmatprep.subr.bf16.mxu0 0
      %1456 = vmatpush1.bf16.msra.mxu0 0
      %1457 = vmatprep.subr.bf16.mxu0 0
      %1458 = vmatpush1.bf16.msra.mxu0 0
      %1459 = vmatprep.subr.bf16.mxu0 0
      %1460 = vmatpush1.bf16.msra.mxu0 0
      %1461 = vmatprep.subr.bf16.mxu0 0
      %1462 = vmatpush1.bf16.msra.mxu0 0
      %1463 = vmatprep.mubr.bf16.mxu0 0
      %1464 = vmatmul.mubr.bf16.gmra.mrb[0].mxu0 %v1408
      %v1465 = vpop.f32.mrb[0].mxu0
      %v1466 = vadd.f32 0.0, %v1465
      %v1467 = vpop.f32.mrb[0].mxu0
      %v1468 = vpop.f32.mrb[0].mxu0
      %v1469 = vadd.f32 0.0, %v1468
      %v1470 = vpop.f32.mrb[0].mxu0
      %1471 = vmatprep.mubr.bf16.mxu0 0
      %1472 = vmatmul.mubr.bf16.gmra.mrb[0].mxu0 %v1411
      %v1473 = vpop.f32.mrb[0].mxu0
      %v1474 = vadd.f32 0.0, %v1473
      %v1475 = vpop.f32.mrb[0].mxu0
      %v1476 = vpop.f32.mrb[0].mxu0
      %v1477 = vadd.f32 0.0, %v1476
      %v1478 = vpop.f32.mrb[0].mxu0
      %1479 = vmatprep.mubr.bf16.mxu0 0
      %1480 = vmatmul.mubr.bf16.gmra.mrb[0].mxu0 %v1414
      %v1481 = vpop.f32.mrb[0].mxu0
      %v1482 = vadd.f32 0.0, %v1481
      %v1483 = vpop.f32.mrb[0].mxu0
      %v1484 = vpop.f32.mrb[0].mxu0
      %v1485 = vadd.f32 0.0, %v1484
      %v1486 = vpop.f32.mrb[0].mxu0
      %1487 = vmatprep.mubr.bf16.mxu0 0
      %1488 = vmatmul.mubr.bf16.gmra.mrb[0].mxu0 %v1417
      %v1489 = vpop.f32.mrb[0].mxu0
      %v1490 = vadd.f32 0.0, %v1489
      %v1491 = vpop.f32.mrb[0].mxu0
      %v1492 = vpop.f32.mrb[0].mxu0
      %v1493 = vadd.f32 0.0, %v1492
      %v1494 = vpop.f32.mrb[0].mxu0
      %1495 = vmatprep.mubr.bf16.mxu0 0
      %1496 = vmatmul.mubr.bf16.gmra.mrb[0].mxu0 %v1420
      %v1497 = vpop.f32.mrb[0].mxu0
      %v1498 = vadd.f32 0.0, %v1497
      %v1499 = vpop.f32.mrb[0].mxu0
      %v1500 = vpop.f32.mrb[0].mxu0
      %v1501 = vadd.f32 0.0, %v1500
      %v1502 = vpop.f32.mrb[0].mxu0
      %1503 = vmatprep.mubr.bf16.mxu0 0
      %1504 = vmatmul.mubr.bf16.gmra.mrb[0].mxu0 %v1423
      %v1505 = vpop.f32.mrb[0].mxu0
      %v1506 = vadd.f32 0.0, %v1505
      %v1507 = vpop.f32.mrb[0].mxu0
      %v1508 = vpop.f32.mrb[0].mxu0
      %v1509 = vadd.f32 0.0, %v1508
      %v1510 = vpop.f32.mrb[0].mxu0
      %1511 = vmatprep.mubr.bf16.mxu0 0
      %1512 = vmatmul.mubr.bf16.gmra.mrb[0].mxu0 %v1426
      %v1513 = vpop.f32.mrb[0].mxu0
      %v1514 = vadd.f32 0.0, %v1513
      %v1515 = vpop.f32.mrb[0].mxu0
      %v1516 = vpop.f32.mrb[0].mxu0
      %v1517 = vadd.f32 0.0, %v1516
      %v1518 = vpop.f32.mrb[0].mxu0
      %1519 = vmatprep.mubr.bf16.mxu0 0
      %1520 = vmatmul.mubr.bf16.gmra.mrb[0].mxu0 %v1429
      %v1521 = vpop.f32.mrb[0].mxu0
      %v1522 = vadd.f32 0.0, %v1521
      %v1523 = vpop.f32.mrb[0].mxu0
      %v1524 = vpop.f32.mrb[0].mxu0
      %v1525 = vadd.f32 0.0, %v1524
      %v1526 = vpop.f32.mrb[0].mxu0
      %1527 = vdwg.mxu0
      %v1544 = vunpack.c.l.b16 %v1157
      %v1545 = vunpack.c.l.b16 %v1158
      %v1546 = vunpack.c.l.b16 %v1159
      %v1547 = vunpack.c.l.b16 %v1160
      %v1548 = vunpack.c.l.b16 %v1161
      %v1549 = vunpack.c.l.b16 %v1162
      %v1550 = vunpack.c.l.b16 %v1163
      %v1551 = vunpack.c.l.b16 %v1164
      %v1552 = vunpack.c.l.b16 %v1165
      %v1553 = vunpack.c.l.b16 %v1166
      %v1554 = vunpack.c.l.b16 %v1167
      %v1555 = vunpack.c.l.b16 %v1168
      %v1556 = vunpack.c.l.b16 %v1169
      %v1557 = vunpack.c.l.b16 %v1170
      %v1558 = vunpack.c.l.b16 %v1171
      %v1559 = vunpack.c.l.b16 %v1172
      %v1560 = vpack.c.b16 %v1545, %v1544
      %v1561 = vpack.c.b16 %v1547, %v1546
      %v1562 = vpack.c.b16 %v1549, %v1548
      %v1563 = vpack.c.b16 %v1551, %v1550
      %v1564 = vpack.c.b16 %v1553, %v1552
      %v1565 = vpack.c.b16 %v1555, %v1554
      %v1566 = vpack.c.b16 %v1557, %v1556
      %v1567 = vpack.c.b16 %v1559, %v1558
      %v1570 = vunpack.c.l.b16 %v1173
      %v1571 = vunpack.c.l.b16 %v1174
      %v1572 = vpack.c.b16 %v1571, %v1570
      %v1575 = vsel %vm598, %v1560, 0
      %v1578 = vsel %vm598, %v1561, 0
      %v1581 = vsel %vm598, %v1562, 0
      %v1584 = vsel %vm598, %v1563, 0
      %v1587 = vsel %vm598, %v1564, 0
      %v1590 = vsel %vm598, %v1565, 0
      %v1593 = vsel %vm598, %v1566, 0
      %v1596 = vsel %vm598, %v1567, 0
      %1598 = vmatprep.subr.bf16.mxu0 0
      %1599 = vmatpush1.bf16.msra.mxu0 %v1572
      %1600 = vmatprep.subr.bf16.mxu0 0
      %1601 = vmatpush1.bf16.msra.mxu0 0
      %1602 = vmatprep.subr.bf16.mxu0 0
      %1603 = vmatpush1.bf16.msra.mxu0 0
      %1604 = vmatprep.subr.bf16.mxu0 0
      %1605 = vmatpush1.bf16.msra.mxu0 0
      %1606 = vmatprep.subr.bf16.mxu0 0
      %1607 = vmatpush1.bf16.msra.mxu0 0
      %1608 = vmatprep.subr.bf16.mxu0 0
      %1609 = vmatpush1.bf16.msra.mxu0 0
      %1610 = vmatprep.subr.bf16.mxu0 0
      %1611 = vmatpush1.bf16.msra.mxu0 0
      %1612 = vmatprep.subr.bf16.mxu0 0
      %1613 = vmatpush1.bf16.msra.mxu0 0
      %1614 = vmatprep.subr.bf16.mxu0 0
      %1615 = vmatpush1.bf16.msra.mxu0 0
      %1616 = vmatprep.subr.bf16.mxu0 0
      %1617 = vmatpush1.bf16.msra.mxu0 0
      %1618 = vmatprep.subr.bf16.mxu0 0
      %1619 = vmatpush1.bf16.msra.mxu0 0
      %1620 = vmatprep.subr.bf16.mxu0 0
      %1621 = vmatpush1.bf16.msra.mxu0 0
      %1622 = vmatprep.subr.bf16.mxu0 0
      %1623 = vmatpush1.bf16.msra.mxu0 0
      %1624 = vmatprep.subr.bf16.mxu0 0
      %1625 = vmatpush1.bf16.msra.mxu0 0
      %1626 = vmatprep.subr.bf16.mxu0 0
      %1627 = vmatpush1.bf16.msra.mxu0 0
      %1628 = vmatprep.subr.bf16.mxu0 0
      %1629 = vmatpush1.bf16.msra.mxu0 0
      %1630 = vmatprep.mubr.bf16.mxu0 0
      %1631 = vmatmul.mubr.bf16.gmra.mrb[0].mxu0 %v1575
      %v1632 = vpop.f32.mrb[0].mxu0
      %v1633 = vadd.f32 %v1466, %v1632
      %v1634 = vpop.f32.mrb[0].mxu0
      %v1635 = vpop.f32.mrb[0].mxu0
      %v1636 = vadd.f32 %v1469, %v1635
      %v1637 = vpop.f32.mrb[0].mxu0
      %1638 = vmatprep.mubr.bf16.mxu0 0
      %1639 = vmatmul.mubr.bf16.gmra.mrb[0].mxu0 %v1578
      %v1640 = vpop.f32.mrb[0].mxu0
      %v1641 = vadd.f32 %v1474, %v1640
      %v1642 = vpop.f32.mrb[0].mxu0
      %v1643 = vpop.f32.mrb[0].mxu0
      %v1644 = vadd.f32 %v1477, %v1643
      %v1645 = vpop.f32.mrb[0].mxu0
      %1646 = vmatprep.mubr.bf16.mxu0 0
      %1647 = vmatmul.mubr.bf16.gmra.mrb[0].mxu0 %v1581
      %v1648 = vpop.f32.mrb[0].mxu0
      %v1649 = vadd.f32 %v1482, %v1648
      %v1650 = vpop.f32.mrb[0].mxu0
      %v1651 = vpop.f32.mrb[0].mxu0
      %v1652 = vadd.f32 %v1485, %v1651
      %v1653 = vpop.f32.mrb[0].mxu0
      %1654 = vmatprep.mubr.bf16.mxu0 0
      %1655 = vmatmul.mubr.bf16.gmra.mrb[0].mxu0 %v1584
      %v1656 = vpop.f32.mrb[0].mxu0
      %v1657 = vadd.f32 %v1490, %v1656
      %v1658 = vpop.f32.mrb[0].mxu0
      %v1659 = vpop.f32.mrb[0].mxu0
      %v1660 = vadd.f32 %v1493, %v1659
      %v1661 = vpop.f32.mrb[0].mxu0
      %1662 = vmatprep.mubr.bf16.mxu0 0
      %1663 = vmatmul.mubr.bf16.gmra.mrb[0].mxu0 %v1587
      %v1664 = vpop.f32.mrb[0].mxu0
      %v1665 = vadd.f32 %v1498, %v1664
      %v1666 = vpop.f32.mrb[0].mxu0
      %v1667 = vpop.f32.mrb[0].mxu0
      %v1668 = vadd.f32 %v1501, %v1667
      %v1669 = vpop.f32.mrb[0].mxu0
      %1670 = vmatprep.mubr.bf16.mxu0 0
      %1671 = vmatmul.mubr.bf16.gmra.mrb[0].mxu0 %v1590
      %v1672 = vpop.f32.mrb[0].mxu0
      %v1673 = vadd.f32 %v1506, %v1672
      %v1674 = vpop.f32.mrb[0].mxu0
      %v1675 = vpop.f32.mrb[0].mxu0
      %v1676 = vadd.f32 %v1509, %v1675
      %v1677 = vpop.f32.mrb[0].mxu0
      %1678 = vmatprep.mubr.bf16.mxu0 0
      %1679 = vmatmul.mubr.bf16.gmra.mrb[0].mxu0 %v1593
      %v1680 = vpop.f32.mrb[0].mxu0
      %v1681 = vadd.f32 %v1514, %v1680
      %v1682 = vpop.f32.mrb[0].mxu0
      %v1683 = vpop.f32.mrb[0].mxu0
      %v1684 = vadd.f32 %v1517, %v1683
      %v1685 = vpop.f32.mrb[0].mxu0
      %1686 = vmatprep.mubr.bf16.mxu0 0
      %1687 = vmatmul.mubr.bf16.gmra.mrb[0].mxu0 %v1596
      %v1688 = vpop.f32.mrb[0].mxu0
      %v1689 = vadd.f32 %v1522, %v1688
      %v1690 = vpop.f32.mrb[0].mxu0
      %v1691 = vpop.f32.mrb[0].mxu0
      %v1692 = vadd.f32 %v1525, %v1691
      %v1693 = vpop.f32.mrb[0].mxu0
      %1694 = vdwg.mxu0
      %v1695 = vld [vmem:[%s1156] sm:$0xe]
      %v1696 = vld [vmem:[%s1156 + $0x18] sm:$0xe]
      %v1697 = vld [vmem:[%s1156 + $0x30] sm:$0xe]
      %v1698 = vld [vmem:[%s1156 + $0x48] sm:$0xe]
      %v1699 = vld [vmem:[%s1156 + $0x60] sm:$0xe]
      %v1700 = vld [vmem:[%s1156 + $0x78] sm:$0xe]
      %v1701 = vld [vmem:[%s1156 + $0x90] sm:$0xe]
      %v1702 = vld [vmem:[%s1156 + $0xa8] sm:$0xe]
      %v1719 = vrot.slane %v1695, 5
      %v1720 = vrot.slane %v1719, 4
      %v1721 = vrot.slane %v1158, 5
      %v1722 = vsel %vm913, %v1720, %v1721
      %v1723 = vrot.slane %v1721, 4
      %v1724 = vrot.slane %v1175, 5
      %v1725 = vsel %vm913, %v1723, %v1724
      %v1726 = vrot.slane %v1696, 5
      %v1727 = vrot.slane %v1726, 4
      %v1728 = vrot.slane %v1160, 5
      %v1729 = vsel %vm913, %v1727, %v1728
      %v1730 = vrot.slane %v1728, 4
      %v1731 = vrot.slane %v1176, 5
      %v1732 = vsel %vm913, %v1730, %v1731
      %v1733 = vrot.slane %v1697, 5
      %v1734 = vrot.slane %v1733, 4
      %v1735 = vrot.slane %v1162, 5
      %v1736 = vsel %vm913, %v1734, %v1735
      %v1737 = vrot.slane %v1735, 4
      %v1738 = vrot.slane %v1177, 5
      %v1739 = vsel %vm913, %v1737, %v1738
      %v1740 = vrot.slane %v1698, 5
      %v1741 = vrot.slane %v1740, 4
      %v1742 = vrot.slane %v1164, 5
      %v1743 = vsel %vm913, %v1741, %v1742
      %v1744 = vrot.slane %v1742, 4
      %v1745 = vrot.slane %v1178, 5
      %v1746 = vsel %vm913, %v1744, %v1745
      %v1747 = vrot.slane %v1699, 5
      %v1748 = vrot.slane %v1747, 4
      %v1749 = vrot.slane %v1166, 5
      %v1750 = vsel %vm913, %v1748, %v1749
      %v1751 = vrot.slane %v1749, 4
      %v1752 = vrot.slane %v1179, 5
      %v1753 = vsel %vm913, %v1751, %v1752
      %v1754 = vrot.slane %v1700, 5
      %v1755 = vrot.slane %v1754, 4
      %v1756 = vrot.slane %v1168, 5
      %v1757 = vsel %vm913, %v1755, %v1756
      %v1758 = vrot.slane %v1756, 4
      %v1759 = vrot.slane %v1180, 5
      %v1760 = vsel %vm913, %v1758, %v1759
      %v1761 = vrot.slane %v1701, 5
      %v1762 = vrot.slane %v1761, 4
      %v1763 = vrot.slane %v1170, 5
      %v1764 = vsel %vm913, %v1762, %v1763
      %v1765 = vrot.slane %v1763, 4
      %v1766 = vrot.slane %v1181, 5
      %v1767 = vsel %vm913, %v1765, %v1766
      %v1768 = vrot.slane %v1702, 5
      %v1769 = vrot.slane %v1768, 4
      %v1770 = vrot.slane %v1172, 5
      %v1771 = vsel %vm913, %v1769, %v1770
      %v1772 = vrot.slane %v1770, 4
      %v1773 = vrot.slane %v1182, 5
      %v1774 = vsel %vm913, %v1772, %v1773
      %v1775 = vld [vmem:[%s2 + $0x28] sm:$0xf]
      %v1776 = vld [vmem:[%s2 + $0x2c] sm:$0xf]
      %v1777 = vunpack.c.l.b16 %v1722
      %v1778 = vunpack.c.l.b16 %v1725
      %v1779 = vunpack.c.l.b16 %v1729
      %v1780 = vunpack.c.l.b16 %v1732
      %v1781 = vunpack.c.l.b16 %v1736
      %v1782 = vunpack.c.l.b16 %v1739
      %v1783 = vunpack.c.l.b16 %v1743
      %v1784 = vunpack.c.l.b16 %v1746
      %v1785 = vunpack.c.l.b16 %v1750
      %v1786 = vunpack.c.l.b16 %v1753
      %v1787 = vunpack.c.l.b16 %v1757
      %v1788 = vunpack.c.l.b16 %v1760
      %v1789 = vunpack.c.l.b16 %v1764
      %v1790 = vunpack.c.l.b16 %v1767
      %v1791 = vunpack.c.l.b16 %v1771
      %v1792 = vunpack.c.l.b16 %v1774
      %v1793 = vpack.c.b16 %v1778, %v1777
      %v1794 = vpack.c.b16 %v1780, %v1779
      %v1795 = vpack.c.b16 %v1782, %v1781
      %v1796 = vpack.c.b16 %v1784, %v1783
      %v1797 = vpack.c.b16 %v1786, %v1785
      %v1798 = vpack.c.b16 %v1788, %v1787
      %v1799 = vpack.c.b16 %v1790, %v1789
      %v1800 = vpack.c.b16 %v1792, %v1791
      %v1803 = vunpack.c.l.b16 %v1775
      %v1804 = vunpack.c.l.b16 %v1776
      %v1805 = vpack.c.b16 %v1804, %v1803
      %v1808 = vsel %vm598, %v1793, 0
      %v1811 = vsel %vm598, %v1794, 0
      %v1814 = vsel %vm598, %v1795, 0
      %v1817 = vsel %vm598, %v1796, 0
      %v1820 = vsel %vm598, %v1797, 0
      %v1823 = vsel %vm598, %v1798, 0
      %v1826 = vsel %vm598, %v1799, 0
      %v1829 = vsel %vm598, %v1800, 0
      %1831 = vmatprep.subr.bf16.mxu0 0
      %1832 = vmatpush1.bf16.msra.mxu0 %v1805
      %1833 = vmatprep.subr.bf16.mxu0 0
      %1834 = vmatpush1.bf16.msra.mxu0 0
      %1835 = vmatprep.subr.bf16.mxu0 0
      %1836 = vmatpush1.bf16.msra.mxu0 0
      %1837 = vmatprep.subr.bf16.mxu0 0
      %1838 = vmatpush1.bf16.msra.mxu0 0
      %1839 = vmatprep.subr.bf16.mxu0 0
      %1840 = vmatpush1.bf16.msra.mxu0 0
      %1841 = vmatprep.subr.bf16.mxu0 0
      %1842 = vmatpush1.bf16.msra.mxu0 0
      %1843 = vmatprep.subr.bf16.mxu0 0
      %1844 = vmatpush1.bf16.msra.mxu0 0
      %1845 = vmatprep.subr.bf16.mxu0 0
      %1846 = vmatpush1.bf16.msra.mxu0 0
      %1847 = vmatprep.subr.bf16.mxu0 0
      %1848 = vmatpush1.bf16.msra.mxu0 0
      %1849 = vmatprep.subr.bf16.mxu0 0
      %1850 = vmatpush1.bf16.msra.mxu0 0
      %1851 = vmatprep.subr.bf16.mxu0 0
      %1852 = vmatpush1.bf16.msra.mxu0 0
      %1853 = vmatprep.subr.bf16.mxu0 0
      %1854 = vmatpush1.bf16.msra.mxu0 0
      %1855 = vmatprep.subr.bf16.mxu0 0
      %1856 = vmatpush1.bf16.msra.mxu0 0
      %1857 = vmatprep.subr.bf16.mxu0 0
      %1858 = vmatpush1.bf16.msra.mxu0 0
      %1859 = vmatprep.subr.bf16.mxu0 0
      %1860 = vmatpush1.bf16.msra.mxu0 0
      %1861 = vmatprep.subr.bf16.mxu0 0
      %1862 = vmatpush1.bf16.msra.mxu0 0
      %1863 = vmatprep.mubr.bf16.mxu0 0
      %1864 = vmatmul.mubr.bf16.gmra.mrb[0].mxu0 %v1808
      %v1865 = vpop.f32.mrb[0].mxu0
      %v1866 = vadd.f32 0.0, %v1865
      %v1867 = vpop.f32.mrb[0].mxu0
      %v1868 = vpop.f32.mrb[0].mxu0
      %v1869 = vadd.f32 0.0, %v1868
      %v1870 = vpop.f32.mrb[0].mxu0
      %1871 = vmatprep.mubr.bf16.mxu0 0
      %1872 = vmatmul.mubr.bf16.gmra.mrb[0].mxu0 %v1811
      %v1873 = vpop.f32.mrb[0].mxu0
      %v1874 = vadd.f32 0.0, %v1873
      %v1875 = vpop.f32.mrb[0].mxu0
      %v1876 = vpop.f32.mrb[0].mxu0
      %v1877 = vadd.f32 0.0, %v1876
      %v1878 = vpop.f32.mrb[0].mxu0
      %1879 = vmatprep.mubr.bf16.mxu0 0
      %1880 = vmatmul.mubr.bf16.gmra.mrb[0].mxu0 %v1814
      %v1881 = vpop.f32.mrb[0].mxu0
      %v1882 = vadd.f32 0.0, %v1881
      %v1883 = vpop.f32.mrb[0].mxu0
      %v1884 = vpop.f32.mrb[0].mxu0
      %v1885 = vadd.f32 0.0, %v1884
      %v1886 = vpop.f32.mrb[0].mxu0
      %1887 = vmatprep.mubr.bf16.mxu0 0
      %1888 = vmatmul.mubr.bf16.gmra.mrb[0].mxu0 %v1817
      %v1889 = vpop.f32.mrb[0].mxu0
      %v1890 = vadd.f32 0.0, %v1889
      %v1891 = vpop.f32.mrb[0].mxu0
      %v1892 = vpop.f32.mrb[0].mxu0
      %v1893 = vadd.f32 0.0, %v1892
      %v1894 = vpop.f32.mrb[0].mxu0
      %1895 = vmatprep.mubr.bf16.mxu0 0
      %1896 = vmatmul.mubr.bf16.gmra.mrb[0].mxu0 %v1820
      %v1897 = vpop.f32.mrb[0].mxu0
      %v1898 = vadd.f32 0.0, %v1897
      %v1899 = vpop.f32.mrb[0].mxu0
      %v1900 = vpop.f32.mrb[0].mxu0
      %v1901 = vadd.f32 0.0, %v1900
      %v1902 = vpop.f32.mrb[0].mxu0
      %1903 = vmatprep.mubr.bf16.mxu0 0
      %1904 = vmatmul.mubr.bf16.gmra.mrb[0].mxu0 %v1823
      %v1905 = vpop.f32.mrb[0].mxu0
      %v1906 = vadd.f32 0.0, %v1905
      %v1907 = vpop.f32.mrb[0].mxu0
      %v1908 = vpop.f32.mrb[0].mxu0
      %v1909 = vadd.f32 0.0, %v1908
      %v1910 = vpop.f32.mrb[0].mxu0
      %1911 = vmatprep.mubr.bf16.mxu0 0
      %1912 = vmatmul.mubr.bf16.gmra.mrb[0].mxu0 %v1826
      %v1913 = vpop.f32.mrb[0].mxu0
      %v1914 = vadd.f32 0.0, %v1913
      %v1915 = vpop.f32.mrb[0].mxu0
      %v1916 = vpop.f32.mrb[0].mxu0
      %v1917 = vadd.f32 0.0, %v1916
      %v1918 = vpop.f32.mrb[0].mxu0
      %1919 = vmatprep.mubr.bf16.mxu0 0
      %1920 = vmatmul.mubr.bf16.gmra.mrb[0].mxu0 %v1829
      %v1921 = vpop.f32.mrb[0].mxu0
      %v1922 = vadd.f32 0.0, %v1921
      %v1923 = vpop.f32.mrb[0].mxu0
      %v1924 = vpop.f32.mrb[0].mxu0
      %v1925 = vadd.f32 0.0, %v1924
      %v1926 = vpop.f32.mrb[0].mxu0
      %1927 = vdwg.mxu0
      %v1928 = vadd.f32 %v1633, %v1866
      %v1929 = vadd.f32 %v1636, %v1869
      %v1930 = vadd.f32 %v1641, %v1874
      %v1931 = vadd.f32 %v1644, %v1877
      %v1932 = vadd.f32 %v1649, %v1882
      %v1933 = vadd.f32 %v1652, %v1885
      %v1934 = vadd.f32 %v1657, %v1890
      %v1935 = vadd.f32 %v1660, %v1893
      %v1936 = vadd.f32 %v1665, %v1898
      %v1937 = vadd.f32 %v1668, %v1901
      %v1938 = vadd.f32 %v1673, %v1906
      %v1939 = vadd.f32 %v1676, %v1909
      %v1940 = vadd.f32 %v1681, %v1914
      %v1941 = vadd.f32 %v1684, %v1917
      %v1942 = vadd.f32 %v1689, %v1922
      %v1943 = vadd.f32 %v1692, %v1925
      %v1944 = vld [vmem:[#allocation2] sm:$0xff]
      %v1945 = vld [vmem:[#allocation2 + $0x8] sm:$0xff]
      %v1946 = vld [vmem:[#allocation2 + $0x10] sm:$0xff]
      %v1947 = vld [vmem:[#allocation2 + $0x18] sm:$0xff]
      %v1948 = vld [vmem:[#allocation2 + $0x20] sm:$0xff]
      %v1949 = vld [vmem:[#allocation2 + $0x28] sm:$0xff]
      %v1950 = vld [vmem:[#allocation2 + $0x30] sm:$0xff]
      %v1951 = vld [vmem:[#allocation2 + $0x38] sm:$0xff]
      %v1952 = vld [vmem:[#allocation2 + $0x40] sm:$0xff]
      %v1953 = vld [vmem:[#allocation2 + $0x48] sm:$0xff]
      %v1954 = vld [vmem:[#allocation2 + $0x50] sm:$0xff]
      %v1955 = vld [vmem:[#allocation2 + $0x58] sm:$0xff]
      %v1956 = vld [vmem:[#allocation2 + $0x60] sm:$0xff]
      %v1957 = vld [vmem:[#allocation2 + $0x68] sm:$0xff]
      %v1958 = vld [vmem:[#allocation2 + $0x70] sm:$0xff]
      %v1959 = vld [vmem:[#allocation2 + $0x78] sm:$0xff]
      %v1960 = vadd.f32 %v1944, %v1928
      %v1961 = vadd.f32 %v1945, %v1929
      %v1962 = vadd.f32 %v1946, %v1930
      %v1963 = vadd.f32 %v1947, %v1931
      %v1964 = vadd.f32 %v1948, %v1932
      %v1965 = vadd.f32 %v1949, %v1933
      %v1966 = vadd.f32 %v1950, %v1934
      %v1967 = vadd.f32 %v1951, %v1935
      %v1968 = vadd.f32 %v1952, %v1936
      %v1969 = vadd.f32 %v1953, %v1937
      %v1970 = vadd.f32 %v1954, %v1938
      %v1971 = vadd.f32 %v1955, %v1939
      %v1972 = vadd.f32 %v1956, %v1940
      %v1973 = vadd.f32 %v1957, %v1941
      %v1974 = vadd.f32 %v1958, %v1942
      %v1975 = vadd.f32 %v1959, %v1943
      %1976 = vst.msk [vmem:[#allocation2] sm:$0xff] %vm1139, %v1960
      %1977 = vst.msk [vmem:[#allocation2 + $0x8] sm:$0xff] %vm1139, %v1961
      %1978 = vst.msk [vmem:[#allocation2 + $0x10] sm:$0xff] %vm1139, %v1962
      %1979 = vst.msk [vmem:[#allocation2 + $0x18] sm:$0xff] %vm1139, %v1963
      %1980 = vst.msk [vmem:[#allocation2 + $0x20] sm:$0xff] %vm1139, %v1964
      %1981 = vst.msk [vmem:[#allocation2 + $0x28] sm:$0xff] %vm1139, %v1965
      %1982 = vst.msk [vmem:[#allocation2 + $0x30] sm:$0xff] %vm1139, %v1966
      %1983 = vst.msk [vmem:[#allocation2 + $0x38] sm:$0xff] %vm1139, %v1967
      %1984 = vst.msk [vmem:[#allocation2 + $0x40] sm:$0xff] %vm1139, %v1968
      %1985 = vst.msk [vmem:[#allocation2 + $0x48] sm:$0xff] %vm1139, %v1969
      %1986 = vst.msk [vmem:[#allocation2 + $0x50] sm:$0xff] %vm1139, %v1970
      %1987 = vst.msk [vmem:[#allocation2 + $0x58] sm:$0xff] %vm1139, %v1971
      %1988 = vst.msk [vmem:[#allocation2 + $0x60] sm:$0xff] %vm1139, %v1972
      %1989 = vst.msk [vmem:[#allocation2 + $0x68] sm:$0xff] %vm1139, %v1973
      %1990 = vst.msk [vmem:[#allocation2 + $0x70] sm:$0xff] %vm1139, %v1974
      %1991 = vst.msk [vmem:[#allocation2 + $0x78] sm:$0xff] %vm1139, %v1975
      %s1992 = scalar_lea.vmem %s314, 24
      %v1993 = vld [vmem:[%s1992] sm:$0xf]
      %v1994 = vld [vmem:[%s1992 + $0x4] sm:$0xf]
      %v1995 = vld [vmem:[%s1992 + $0x18] sm:$0xf]
      %v1996 = vld [vmem:[%s1992 + $0x1c] sm:$0xf]
      %v1997 = vld [vmem:[%s1992 + $0x30] sm:$0xf]
      %v1998 = vld [vmem:[%s1992 + $0x34] sm:$0xf]
      %v1999 = vld [vmem:[%s1992 + $0x48] sm:$0xf]
      %v2000 = vld [vmem:[%s1992 + $0x4c] sm:$0xf]
      %v2001 = vld [vmem:[%s1992 + $0x60] sm:$0xf]
      %v2002 = vld [vmem:[%s1992 + $0x64] sm:$0xf]
      %v2003 = vld [vmem:[%s1992 + $0x78] sm:$0xf]
      %v2004 = vld [vmem:[%s1992 + $0x7c] sm:$0xf]
      %v2005 = vld [vmem:[%s1992 + $0x90] sm:$0xf]
      %v2006 = vld [vmem:[%s1992 + $0x94] sm:$0xf]
      %v2007 = vld [vmem:[%s2 + $0x30] sm:$0xf]
      %v2008 = vld [vmem:[%s2 + $0x34] sm:$0xf]
      %v2009 = vld [vmem:[%s1992 + $0x8] sm:$0x1]
      %v2010 = vld [vmem:[%s1992 + $0x20] sm:$0x1]
      %v2011 = vld [vmem:[%s1992 + $0x38] sm:$0x1]
      %v2012 = vld [vmem:[%s1992 + $0x50] sm:$0x1]
      %v2013 = vld [vmem:[%s1992 + $0x68] sm:$0x1]
      %v2014 = vld [vmem:[%s1992 + $0x80] sm:$0x1]
      %v2015 = vld [vmem:[%s1992 + $0x98] sm:$0x1]
      %v2017 = vshrl.u32 %v1993, 16
      %v2019 = vrot.slane %v2017, 4
      %v2020 = vshll.u32 %v1993, 16
      %v2022 = vrot.slane %v2020, 5
      %v2023 = vor.u32 %v2019, %v2022
      %v2024 = vrot.slane %v2023, 4
      %v2026 = vshll.u32 %v1994, 16
      %v2028 = vrot.slane %v2026, 5
      %v2029 = vsel %vm373, %v2024, %v2028
      %v2030 = vshrl.u32 %v1994, 16
      %v2032 = vrot.slane %v2030, 4
      %v2033 = vor.u32 %v2032, %v2028
      %v2034 = vrot.slane %v2033, 4
      %v2036 = vshll.u32 %v2009, 16
      %v2038 = vrot.slane %v2036, 5
      %v2039 = vsel %vm373, %v2034, %v2038
      %v2041 = vshrl.u32 %v1995, 16
      %v2043 = vrot.slane %v2041, 4
      %v2044 = vshll.u32 %v1995, 16
      %v2046 = vrot.slane %v2044, 5
      %v2047 = vor.u32 %v2043, %v2046
      %v2048 = vrot.slane %v2047, 4
      %v2050 = vshll.u32 %v1996, 16
      %v2052 = vrot.slane %v2050, 5
      %v2053 = vsel %vm373, %v2048, %v2052
      %v2054 = vshrl.u32 %v1996, 16
      %v2056 = vrot.slane %v2054, 4
      %v2057 = vor.u32 %v2056, %v2052
      %v2058 = vrot.slane %v2057, 4
      %v2060 = vshll.u32 %v2010, 16
      %v2062 = vrot.slane %v2060, 5
      %v2063 = vsel %vm373, %v2058, %v2062
      %v2065 = vshrl.u32 %v1997, 16
      %v2067 = vrot.slane %v2065, 4
      %v2068 = vshll.u32 %v1997, 16
      %v2070 = vrot.slane %v2068, 5
      %v2071 = vor.u32 %v2067, %v2070
      %v2072 = vrot.slane %v2071, 4
      %v2074 = vshll.u32 %v1998, 16
      %v2076 = vrot.slane %v2074, 5
      %v2077 = vsel %vm373, %v2072, %v2076
      %v2078 = vshrl.u32 %v1998, 16
      %v2080 = vrot.slane %v2078, 4
      %v2081 = vor.u32 %v2080, %v2076
      %v2082 = vrot.slane %v2081, 4
      %v2084 = vshll.u32 %v2011, 16
      %v2086 = vrot.slane %v2084, 5
      %v2087 = vsel %vm373, %v2082, %v2086
      %v2089 = vshrl.u32 %v1999, 16
      %v2091 = vrot.slane %v2089, 4
      %v2092 = vshll.u32 %v1999, 16
      %v2094 = vrot.slane %v2092, 5
      %v2095 = vor.u32 %v2091, %v2094
      %v2096 = vrot.slane %v2095, 4
      %v2098 = vshll.u32 %v2000, 16
      %v2100 = vrot.slane %v2098, 5
      %v2101 = vsel %vm373, %v2096, %v2100
      %v2102 = vshrl.u32 %v2000, 16
      %v2104 = vrot.slane %v2102, 4
      %v2105 = vor.u32 %v2104, %v2100
      %v2106 = vrot.slane %v2105, 4
      %v2108 = vshll.u32 %v2012, 16
      %v2110 = vrot.slane %v2108, 5
      %v2111 = vsel %vm373, %v2106, %v2110
      %v2113 = vshrl.u32 %v2001, 16
      %v2115 = vrot.slane %v2113, 4
      %v2116 = vshll.u32 %v2001, 16
      %v2118 = vrot.slane %v2116, 5
      %v2119 = vor.u32 %v2115, %v2118
      %v2120 = vrot.slane %v2119, 4
      %v2122 = vshll.u32 %v2002, 16
      %v2124 = vrot.slane %v2122, 5
      %v2125 = vsel %vm373, %v2120, %v2124
      %v2126 = vshrl.u32 %v2002, 16
      %v2128 = vrot.slane %v2126, 4
      %v2129 = vor.u32 %v2128, %v2124
      %v2130 = vrot.slane %v2129, 4
      %v2132 = vshll.u32 %v2013, 16
      %v2134 = vrot.slane %v2132, 5
      %v2135 = vsel %vm373, %v2130, %v2134
      %v2137 = vshrl.u32 %v2003, 16
      %v2139 = vrot.slane %v2137, 4
      %v2140 = vshll.u32 %v2003, 16
      %v2142 = vrot.slane %v2140, 5
      %v2143 = vor.u32 %v2139, %v2142
      %v2144 = vrot.slane %v2143, 4
      %v2146 = vshll.u32 %v2004, 16
      %v2148 = vrot.slane %v2146, 5
      %v2149 = vsel %vm373, %v2144, %v2148
      %v2150 = vshrl.u32 %v2004, 16
      %v2152 = vrot.slane %v2150, 4
      %v2153 = vor.u32 %v2152, %v2148
      %v2154 = vrot.slane %v2153, 4
      %v2156 = vshll.u32 %v2014, 16
      %v2158 = vrot.slane %v2156, 5
      %v2159 = vsel %vm373, %v2154, %v2158
      %v2161 = vshrl.u32 %v2005, 16
      %v2163 = vrot.slane %v2161, 4
      %v2164 = vshll.u32 %v2005, 16
      %v2166 = vrot.slane %v2164, 5
      %v2167 = vor.u32 %v2163, %v2166
      %v2168 = vrot.slane %v2167, 4
      %v2170 = vshll.u32 %v2006, 16
      %v2172 = vrot.slane %v2170, 5
      %v2173 = vsel %vm373, %v2168, %v2172
      %v2174 = vshrl.u32 %v2006, 16
      %v2176 = vrot.slane %v2174, 4
      %v2177 = vor.u32 %v2176, %v2172
      %v2178 = vrot.slane %v2177, 4
      %v2180 = vshll.u32 %v2015, 16
      %v2182 = vrot.slane %v2180, 5
      %v2183 = vsel %vm373, %v2178, %v2182
      %v2184 = vld [vmem:[%s2 + $0x38] sm:$0xf]
      %v2185 = vld [vmem:[%s2 + $0x3c] sm:$0xf]
      %v2186 = vunpack.c.l.b16 %v2029
      %v2187 = vunpack.c.l.b16 %v2039
      %v2188 = vunpack.c.l.b16 %v2053
      %v2189 = vunpack.c.l.b16 %v2063
      %v2190 = vunpack.c.l.b16 %v2077
      %v2191 = vunpack.c.l.b16 %v2087
      %v2192 = vunpack.c.l.b16 %v2101
      %v2193 = vunpack.c.l.b16 %v2111
      %v2194 = vunpack.c.l.b16 %v2125
      %v2195 = vunpack.c.l.b16 %v2135
      %v2196 = vunpack.c.l.b16 %v2149
      %v2197 = vunpack.c.l.b16 %v2159
      %v2198 = vunpack.c.l.b16 %v2173
      %v2199 = vunpack.c.l.b16 %v2183
      %v2200 = vpack.c.b16 %v2187, %v2186
      %v2201 = vpack.c.b16 %v2189, %v2188
      %v2202 = vpack.c.b16 %v2191, %v2190
      %v2203 = vpack.c.b16 %v2193, %v2192
      %v2204 = vpack.c.b16 %v2195, %v2194
      %v2205 = vpack.c.b16 %v2197, %v2196
      %v2206 = vpack.c.b16 %v2199, %v2198
      %v2209 = vunpack.c.l.b16 %v2184
      %v2210 = vunpack.c.l.b16 %v2185
      %v2211 = vpack.c.b16 %v2210, %v2209
      %v2214 = vsel %vm598, %v2200, 0
      %v2217 = vsel %vm598, %v2201, 0
      %v2220 = vsel %vm598, %v2202, 0
      %v2223 = vsel %vm598, %v2203, 0
      %v2226 = vsel %vm598, %v2204, 0
      %v2229 = vsel %vm598, %v2205, 0
      %v2232 = vsel %vm598, %v2206, 0
      %2234 = vmatprep.subr.bf16.mxu0 0
      %2235 = vmatpush1.bf16.msra.mxu0 %v2211
      %2236 = vmatprep.subr.bf16.mxu0 0
      %2237 = vmatpush1.bf16.msra.mxu0 0
      %2238 = vmatprep.subr.bf16.mxu0 0
      %2239 = vmatpush1.bf16.msra.mxu0 0
      %2240 = vmatprep.subr.bf16.mxu0 0
      %2241 = vmatpush1.bf16.msra.mxu0 0
      %2242 = vmatprep.subr.bf16.mxu0 0
      %2243 = vmatpush1.bf16.msra.mxu0 0
      %2244 = vmatprep.subr.bf16.mxu0 0
      %2245 = vmatpush1.bf16.msra.mxu0 0
      %2246 = vmatprep.subr.bf16.mxu0 0
      %2247 = vmatpush1.bf16.msra.mxu0 0
      %2248 = vmatprep.subr.bf16.mxu0 0
      %2249 = vmatpush1.bf16.msra.mxu0 0
      %2250 = vmatprep.subr.bf16.mxu0 0
      %2251 = vmatpush1.bf16.msra.mxu0 0
      %2252 = vmatprep.subr.bf16.mxu0 0
      %2253 = vmatpush1.bf16.msra.mxu0 0
      %2254 = vmatprep.subr.bf16.mxu0 0
      %2255 = vmatpush1.bf16.msra.mxu0 0
      %2256 = vmatprep.subr.bf16.mxu0 0
      %2257 = vmatpush1.bf16.msra.mxu0 0
      %2258 = vmatprep.subr.bf16.mxu0 0
      %2259 = vmatpush1.bf16.msra.mxu0 0
      %2260 = vmatprep.subr.bf16.mxu0 0
      %2261 = vmatpush1.bf16.msra.mxu0 0
      %2262 = vmatprep.subr.bf16.mxu0 0
      %2263 = vmatpush1.bf16.msra.mxu0 0
      %2264 = vmatprep.subr.bf16.mxu0 0
      %2265 = vmatpush1.bf16.msra.mxu0 0
      %2266 = vmatprep.mubr.bf16.mxu0 0
      %2267 = vmatmul.mubr.bf16.gmra.mrb[0].mxu0 %v2214
      %v2268 = vpop.f32.mrb[0].mxu0
      %v2269 = vadd.f32 0.0, %v2268
      %v2270 = vpop.f32.mrb[0].mxu0
      %v2271 = vpop.f32.mrb[0].mxu0
      %v2272 = vadd.f32 0.0, %v2271
      %v2273 = vpop.f32.mrb[0].mxu0
      %2274 = vmatprep.mubr.bf16.mxu0 0
      %2275 = vmatmul.mubr.bf16.gmra.mrb[0].mxu0 %v2217
      %v2276 = vpop.f32.mrb[0].mxu0
      %v2277 = vadd.f32 0.0, %v2276
      %v2278 = vpop.f32.mrb[0].mxu0
      %v2279 = vpop.f32.mrb[0].mxu0
      %v2280 = vadd.f32 0.0, %v2279
      %v2281 = vpop.f32.mrb[0].mxu0
      %2282 = vmatprep.mubr.bf16.mxu0 0
      %2283 = vmatmul.mubr.bf16.gmra.mrb[0].mxu0 %v2220
      %v2284 = vpop.f32.mrb[0].mxu0
      %v2285 = vadd.f32 0.0, %v2284
      %v2286 = vpop.f32.mrb[0].mxu0
      %v2287 = vpop.f32.mrb[0].mxu0
      %v2288 = vadd.f32 0.0, %v2287
      %v2289 = vpop.f32.mrb[0].mxu0
      %2290 = vmatprep.mubr.bf16.mxu0 0
      %2291 = vmatmul.mubr.bf16.gmra.mrb[0].mxu0 %v2223
      %v2292 = vpop.f32.mrb[0].mxu0
      %v2293 = vadd.f32 0.0, %v2292
      %v2294 = vpop.f32.mrb[0].mxu0
      %v2295 = vpop.f32.mrb[0].mxu0
      %v2296 = vadd.f32 0.0, %v2295
      %v2297 = vpop.f32.mrb[0].mxu0
      %2298 = vmatprep.mubr.bf16.mxu0 0
      %2299 = vmatmul.mubr.bf16.gmra.mrb[0].mxu0 %v2226
      %v2300 = vpop.f32.mrb[0].mxu0
      %v2301 = vadd.f32 0.0, %v2300
      %v2302 = vpop.f32.mrb[0].mxu0
      %v2303 = vpop.f32.mrb[0].mxu0
      %v2304 = vadd.f32 0.0, %v2303
      %v2305 = vpop.f32.mrb[0].mxu0
      %2306 = vmatprep.mubr.bf16.mxu0 0
      %2307 = vmatmul.mubr.bf16.gmra.mrb[0].mxu0 %v2229
      %v2308 = vpop.f32.mrb[0].mxu0
      %v2309 = vadd.f32 0.0, %v2308
      %v2310 = vpop.f32.mrb[0].mxu0
      %v2311 = vpop.f32.mrb[0].mxu0
      %v2312 = vadd.f32 0.0, %v2311
      %v2313 = vpop.f32.mrb[0].mxu0
      %2314 = vmatprep.mubr.bf16.mxu0 0
      %2315 = vmatmul.mubr.bf16.gmra.mrb[0].mxu0 %v2232
      %v2316 = vpop.f32.mrb[0].mxu0
      %v2317 = vadd.f32 0.0, %v2316
      %v2318 = vpop.f32.mrb[0].mxu0
      %v2319 = vpop.f32.mrb[0].mxu0
      %v2320 = vadd.f32 0.0, %v2319
      %v2321 = vpop.f32.mrb[0].mxu0
      %2322 = vdwg.mxu0
      %v2337 = vunpack.c.l.b16 %v1993
      %v2338 = vunpack.c.l.b16 %v1994
      %v2339 = vunpack.c.l.b16 %v1995
      %v2340 = vunpack.c.l.b16 %v1996
      %v2341 = vunpack.c.l.b16 %v1997
      %v2342 = vunpack.c.l.b16 %v1998
      %v2343 = vunpack.c.l.b16 %v1999
      %v2344 = vunpack.c.l.b16 %v2000
      %v2345 = vunpack.c.l.b16 %v2001
      %v2346 = vunpack.c.l.b16 %v2002
      %v2347 = vunpack.c.l.b16 %v2003
      %v2348 = vunpack.c.l.b16 %v2004
      %v2349 = vunpack.c.l.b16 %v2005
      %v2350 = vunpack.c.l.b16 %v2006
      %v2351 = vpack.c.b16 %v2338, %v2337
      %v2352 = vpack.c.b16 %v2340, %v2339
      %v2353 = vpack.c.b16 %v2342, %v2341
      %v2354 = vpack.c.b16 %v2344, %v2343
      %v2355 = vpack.c.b16 %v2346, %v2345
      %v2356 = vpack.c.b16 %v2348, %v2347
      %v2357 = vpack.c.b16 %v2350, %v2349
      %v2360 = vunpack.c.l.b16 %v2007
      %v2361 = vunpack.c.l.b16 %v2008
      %v2362 = vpack.c.b16 %v2361, %v2360
      %v2365 = vsel %vm598, %v2351, 0
      %v2368 = vsel %vm598, %v2352, 0
      %v2371 = vsel %vm598, %v2353, 0
      %v2374 = vsel %vm598, %v2354, 0
      %v2377 = vsel %vm598, %v2355, 0
      %v2380 = vsel %vm598, %v2356, 0
      %v2383 = vsel %vm598, %v2357, 0
      %2385 = vmatprep.subr.bf16.mxu0 0
      %2386 = vmatpush1.bf16.msra.mxu0 %v2362
      %2387 = vmatprep.subr.bf16.mxu0 0
      %2388 = vmatpush1.bf16.msra.mxu0 0
      %2389 = vmatprep.subr.bf16.mxu0 0
      %2390 = vmatpush1.bf16.msra.mxu0 0
      %2391 = vmatprep.subr.bf16.mxu0 0
      %2392 = vmatpush1.bf16.msra.mxu0 0
      %2393 = vmatprep.subr.bf16.mxu0 0
      %2394 = vmatpush1.bf16.msra.mxu0 0
      %2395 = vmatprep.subr.bf16.mxu0 0
      %2396 = vmatpush1.bf16.msra.mxu0 0
      %2397 = vmatprep.subr.bf16.mxu0 0
      %2398 = vmatpush1.bf16.msra.mxu0 0
      %2399 = vmatprep.subr.bf16.mxu0 0
      %2400 = vmatpush1.bf16.msra.mxu0 0
      %2401 = vmatprep.subr.bf16.mxu0 0
      %2402 = vmatpush1.bf16.msra.mxu0 0
      %2403 = vmatprep.subr.bf16.mxu0 0
      %2404 = vmatpush1.bf16.msra.mxu0 0
      %2405 = vmatprep.subr.bf16.mxu0 0
      %2406 = vmatpush1.bf16.msra.mxu0 0
      %2407 = vmatprep.subr.bf16.mxu0 0
      %2408 = vmatpush1.bf16.msra.mxu0 0
      %2409 = vmatprep.subr.bf16.mxu0 0
      %2410 = vmatpush1.bf16.msra.mxu0 0
      %2411 = vmatprep.subr.bf16.mxu0 0
      %2412 = vmatpush1.bf16.msra.mxu0 0
      %2413 = vmatprep.subr.bf16.mxu0 0
      %2414 = vmatpush1.bf16.msra.mxu0 0
      %2415 = vmatprep.subr.bf16.mxu0 0
      %2416 = vmatpush1.bf16.msra.mxu0 0
      %2417 = vmatprep.mubr.bf16.mxu0 0
      %2418 = vmatmul.mubr.bf16.gmra.mrb[0].mxu0 %v2365
      %v2419 = vpop.f32.mrb[0].mxu0
      %v2420 = vadd.f32 %v2269, %v2419
      %v2421 = vpop.f32.mrb[0].mxu0
      %v2422 = vpop.f32.mrb[0].mxu0
      %v2423 = vadd.f32 %v2272, %v2422
      %v2424 = vpop.f32.mrb[0].mxu0
      %2425 = vmatprep.mubr.bf16.mxu0 0
      %2426 = vmatmul.mubr.bf16.gmra.mrb[0].mxu0 %v2368
      %v2427 = vpop.f32.mrb[0].mxu0
      %v2428 = vadd.f32 %v2277, %v2427
      %v2429 = vpop.f32.mrb[0].mxu0
      %v2430 = vpop.f32.mrb[0].mxu0
      %v2431 = vadd.f32 %v2280, %v2430
      %v2432 = vpop.f32.mrb[0].mxu0
      %2433 = vmatprep.mubr.bf16.mxu0 0
      %2434 = vmatmul.mubr.bf16.gmra.mrb[0].mxu0 %v2371
      %v2435 = vpop.f32.mrb[0].mxu0
      %v2436 = vadd.f32 %v2285, %v2435
      %v2437 = vpop.f32.mrb[0].mxu0
      %v2438 = vpop.f32.mrb[0].mxu0
      %v2439 = vadd.f32 %v2288, %v2438
      %v2440 = vpop.f32.mrb[0].mxu0
      %2441 = vmatprep.mubr.bf16.mxu0 0
      %2442 = vmatmul.mubr.bf16.gmra.mrb[0].mxu0 %v2374
      %v2443 = vpop.f32.mrb[0].mxu0
      %v2444 = vadd.f32 %v2293, %v2443
      %v2445 = vpop.f32.mrb[0].mxu0
      %v2446 = vpop.f32.mrb[0].mxu0
      %v2447 = vadd.f32 %v2296, %v2446
      %v2448 = vpop.f32.mrb[0].mxu0
      %2449 = vmatprep.mubr.bf16.mxu0 0
      %2450 = vmatmul.mubr.bf16.gmra.mrb[0].mxu0 %v2377
      %v2451 = vpop.f32.mrb[0].mxu0
      %v2452 = vadd.f32 %v2301, %v2451
      %v2453 = vpop.f32.mrb[0].mxu0
      %v2454 = vpop.f32.mrb[0].mxu0
      %v2455 = vadd.f32 %v2304, %v2454
      %v2456 = vpop.f32.mrb[0].mxu0
      %2457 = vmatprep.mubr.bf16.mxu0 0
      %2458 = vmatmul.mubr.bf16.gmra.mrb[0].mxu0 %v2380
      %v2459 = vpop.f32.mrb[0].mxu0
      %v2460 = vadd.f32 %v2309, %v2459
      %v2461 = vpop.f32.mrb[0].mxu0
      %v2462 = vpop.f32.mrb[0].mxu0
      %v2463 = vadd.f32 %v2312, %v2462
      %v2464 = vpop.f32.mrb[0].mxu0
      %2465 = vmatprep.mubr.bf16.mxu0 0
      %2466 = vmatmul.mubr.bf16.gmra.mrb[0].mxu0 %v2383
      %v2467 = vpop.f32.mrb[0].mxu0
      %v2468 = vadd.f32 %v2317, %v2467
      %v2469 = vpop.f32.mrb[0].mxu0
      %v2470 = vpop.f32.mrb[0].mxu0
      %v2471 = vadd.f32 %v2320, %v2470
      %v2472 = vpop.f32.mrb[0].mxu0
      %2473 = vdwg.mxu0
      %v2474 = vld [vmem:[%s1992] sm:$0xe]
      %v2475 = vld [vmem:[%s1992 + $0x18] sm:$0xe]
      %v2476 = vld [vmem:[%s1992 + $0x30] sm:$0xe]
      %v2477 = vld [vmem:[%s1992 + $0x48] sm:$0xe]
      %v2478 = vld [vmem:[%s1992 + $0x60] sm:$0xe]
      %v2479 = vld [vmem:[%s1992 + $0x78] sm:$0xe]
      %v2480 = vld [vmem:[%s1992 + $0x90] sm:$0xe]
      %v2495 = vrot.slane %v2474, 5
      %v2496 = vrot.slane %v2495, 4
      %v2497 = vrot.slane %v1994, 5
      %v2498 = vsel %vm913, %v2496, %v2497
      %v2499 = vrot.slane %v2497, 4
      %v2500 = vrot.slane %v2009, 5
      %v2501 = vsel %vm913, %v2499, %v2500
      %v2502 = vrot.slane %v2475, 5
      %v2503 = vrot.slane %v2502, 4
      %v2504 = vrot.slane %v1996, 5
      %v2505 = vsel %vm913, %v2503, %v2504
      %v2506 = vrot.slane %v2504, 4
      %v2507 = vrot.slane %v2010, 5
      %v2508 = vsel %vm913, %v2506, %v2507
      %v2509 = vrot.slane %v2476, 5
      %v2510 = vrot.slane %v2509, 4
      %v2511 = vrot.slane %v1998, 5
      %v2512 = vsel %vm913, %v2510, %v2511
      %v2513 = vrot.slane %v2511, 4
      %v2514 = vrot.slane %v2011, 5
      %v2515 = vsel %vm913, %v2513, %v2514
      %v2516 = vrot.slane %v2477, 5
      %v2517 = vrot.slane %v2516, 4
      %v2518 = vrot.slane %v2000, 5
      %v2519 = vsel %vm913, %v2517, %v2518
      %v2520 = vrot.slane %v2518, 4
      %v2521 = vrot.slane %v2012, 5
      %v2522 = vsel %vm913, %v2520, %v2521
      %v2523 = vrot.slane %v2478, 5
      %v2524 = vrot.slane %v2523, 4
      %v2525 = vrot.slane %v2002, 5
      %v2526 = vsel %vm913, %v2524, %v2525
      %v2527 = vrot.slane %v2525, 4
      %v2528 = vrot.slane %v2013, 5
      %v2529 = vsel %vm913, %v2527, %v2528
      %v2530 = vrot.slane %v2479, 5
      %v2531 = vrot.slane %v2530, 4
      %v2532 = vrot.slane %v2004, 5
      %v2533 = vsel %vm913, %v2531, %v2532
      %v2534 = vrot.slane %v2532, 4
      %v2535 = vrot.slane %v2014, 5
      %v2536 = vsel %vm913, %v2534, %v2535
      %v2537 = vrot.slane %v2480, 5
      %v2538 = vrot.slane %v2537, 4
      %v2539 = vrot.slane %v2006, 5
      %v2540 = vsel %vm913, %v2538, %v2539
      %v2541 = vrot.slane %v2539, 4
      %v2542 = vrot.slane %v2015, 5
      %v2543 = vsel %vm913, %v2541, %v2542
      %v2544 = vld [vmem:[%s2 + $0x40] sm:$0xf]
      %v2545 = vld [vmem:[%s2 + $0x44] sm:$0xf]
      %v2546 = vunpack.c.l.b16 %v2498
      %v2547 = vunpack.c.l.b16 %v2501
      %v2548 = vunpack.c.l.b16 %v2505
      %v2549 = vunpack.c.l.b16 %v2508
      %v2550 = vunpack.c.l.b16 %v2512
      %v2551 = vunpack.c.l.b16 %v2515
      %v2552 = vunpack.c.l.b16 %v2519
      %v2553 = vunpack.c.l.b16 %v2522
      %v2554 = vunpack.c.l.b16 %v2526
      %v2555 = vunpack.c.l.b16 %v2529
      %v2556 = vunpack.c.l.b16 %v2533
      %v2557 = vunpack.c.l.b16 %v2536
      %v2558 = vunpack.c.l.b16 %v2540
      %v2559 = vunpack.c.l.b16 %v2543
      %v2560 = vpack.c.b16 %v2547, %v2546
      %v2561 = vpack.c.b16 %v2549, %v2548
      %v2562 = vpack.c.b16 %v2551, %v2550
      %v2563 = vpack.c.b16 %v2553, %v2552
      %v2564 = vpack.c.b16 %v2555, %v2554
      %v2565 = vpack.c.b16 %v2557, %v2556
      %v2566 = vpack.c.b16 %v2559, %v2558
      %v2569 = vunpack.c.l.b16 %v2544
      %v2570 = vunpack.c.l.b16 %v2545
      %v2571 = vpack.c.b16 %v2570, %v2569
      %v2574 = vsel %vm598, %v2560, 0
      %v2577 = vsel %vm598, %v2561, 0
      %v2580 = vsel %vm598, %v2562, 0
      %v2583 = vsel %vm598, %v2563, 0
      %v2586 = vsel %vm598, %v2564, 0
      %v2589 = vsel %vm598, %v2565, 0
      %v2592 = vsel %vm598, %v2566, 0
      %2594 = vmatprep.subr.bf16.mxu0 0
      %2595 = vmatpush1.bf16.msra.mxu0 %v2571
      %2596 = vmatprep.subr.bf16.mxu0 0
      %2597 = vmatpush1.bf16.msra.mxu0 0
      %2598 = vmatprep.subr.bf16.mxu0 0
      %2599 = vmatpush1.bf16.msra.mxu0 0
      %2600 = vmatprep.subr.bf16.mxu0 0
      %2601 = vmatpush1.bf16.msra.mxu0 0
      %2602 = vmatprep.subr.bf16.mxu0 0
      %2603 = vmatpush1.bf16.msra.mxu0 0
      %2604 = vmatprep.subr.bf16.mxu0 0
      %2605 = vmatpush1.bf16.msra.mxu0 0
      %2606 = vmatprep.subr.bf16.mxu0 0
      %2607 = vmatpush1.bf16.msra.mxu0 0
      %2608 = vmatprep.subr.bf16.mxu0 0
      %2609 = vmatpush1.bf16.msra.mxu0 0
      %2610 = vmatprep.subr.bf16.mxu0 0
      %2611 = vmatpush1.bf16.msra.mxu0 0
      %2612 = vmatprep.subr.bf16.mxu0 0
      %2613 = vmatpush1.bf16.msra.mxu0 0
      %2614 = vmatprep.subr.bf16.mxu0 0
      %2615 = vmatpush1.bf16.msra.mxu0 0
      %2616 = vmatprep.subr.bf16.mxu0 0
      %2617 = vmatpush1.bf16.msra.mxu0 0
      %2618 = vmatprep.subr.bf16.mxu0 0
      %2619 = vmatpush1.bf16.msra.mxu0 0
      %2620 = vmatprep.subr.bf16.mxu0 0
      %2621 = vmatpush1.bf16.msra.mxu0 0
      %2622 = vmatprep.subr.bf16.mxu0 0
      %2623 = vmatpush1.bf16.msra.mxu0 0
      %2624 = vmatprep.subr.bf16.mxu0 0
      %2625 = vmatpush1.bf16.msra.mxu0 0
      %2626 = vmatprep.mubr.bf16.mxu0 0
      %2627 = vmatmul.mubr.bf16.gmra.mrb[0].mxu0 %v2574
      %v2628 = vpop.f32.mrb[0].mxu0
      %v2629 = vadd.f32 0.0, %v2628
      %v2630 = vpop.f32.mrb[0].mxu0
      %v2631 = vpop.f32.mrb[0].mxu0
      %v2632 = vadd.f32 0.0, %v2631
      %v2633 = vpop.f32.mrb[0].mxu0
      %2634 = vmatprep.mubr.bf16.mxu0 0
      %2635 = vmatmul.mubr.bf16.gmra.mrb[0].mxu0 %v2577
      %v2636 = vpop.f32.mrb[0].mxu0
      %v2637 = vadd.f32 0.0, %v2636
      %v2638 = vpop.f32.mrb[0].mxu0
      %v2639 = vpop.f32.mrb[0].mxu0
      %v2640 = vadd.f32 0.0, %v2639
      %v2641 = vpop.f32.mrb[0].mxu0
      %2642 = vmatprep.mubr.bf16.mxu0 0
      %2643 = vmatmul.mubr.bf16.gmra.mrb[0].mxu0 %v2580
      %v2644 = vpop.f32.mrb[0].mxu0
      %v2645 = vadd.f32 0.0, %v2644
      %v2646 = vpop.f32.mrb[0].mxu0
      %v2647 = vpop.f32.mrb[0].mxu0
      %v2648 = vadd.f32 0.0, %v2647
      %v2649 = vpop.f32.mrb[0].mxu0
      %2650 = vmatprep.mubr.bf16.mxu0 0
      %2651 = vmatmul.mubr.bf16.gmra.mrb[0].mxu0 %v2583
      %v2652 = vpop.f32.mrb[0].mxu0
      %v2653 = vadd.f32 0.0, %v2652
      %v2654 = vpop.f32.mrb[0].mxu0
      %v2655 = vpop.f32.mrb[0].mxu0
      %v2656 = vadd.f32 0.0, %v2655
      %v2657 = vpop.f32.mrb[0].mxu0
      %2658 = vmatprep.mubr.bf16.mxu0 0
      %2659 = vmatmul.mubr.bf16.gmra.mrb[0].mxu0 %v2586
      %v2660 = vpop.f32.mrb[0].mxu0
      %v2661 = vadd.f32 0.0, %v2660
      %v2662 = vpop.f32.mrb[0].mxu0
      %v2663 = vpop.f32.mrb[0].mxu0
      %v2664 = vadd.f32 0.0, %v2663
      %v2665 = vpop.f32.mrb[0].mxu0
      %2666 = vmatprep.mubr.bf16.mxu0 0
      %2667 = vmatmul.mubr.bf16.gmra.mrb[0].mxu0 %v2589
      %v2668 = vpop.f32.mrb[0].mxu0
      %v2669 = vadd.f32 0.0, %v2668
      %v2670 = vpop.f32.mrb[0].mxu0
      %v2671 = vpop.f32.mrb[0].mxu0
      %v2672 = vadd.f32 0.0, %v2671
      %v2673 = vpop.f32.mrb[0].mxu0
      %2674 = vmatprep.mubr.bf16.mxu0 0
      %2675 = vmatmul.mubr.bf16.gmra.mrb[0].mxu0 %v2592
      %v2676 = vpop.f32.mrb[0].mxu0
      %v2677 = vadd.f32 0.0, %v2676
      %v2678 = vpop.f32.mrb[0].mxu0
      %v2679 = vpop.f32.mrb[0].mxu0
      %v2680 = vadd.f32 0.0, %v2679
      %v2681 = vpop.f32.mrb[0].mxu0
      %2682 = vdwg.mxu0
      %v2683 = vadd.f32 %v2420, %v2629
      %v2684 = vadd.f32 %v2423, %v2632
      %v2685 = vadd.f32 %v2428, %v2637
      %v2686 = vadd.f32 %v2431, %v2640
      %v2687 = vadd.f32 %v2436, %v2645
      %v2688 = vadd.f32 %v2439, %v2648
      %v2689 = vadd.f32 %v2444, %v2653
      %v2690 = vadd.f32 %v2447, %v2656
      %v2691 = vadd.f32 %v2452, %v2661
      %v2692 = vadd.f32 %v2455, %v2664
      %v2693 = vadd.f32 %v2460, %v2669
      %v2694 = vadd.f32 %v2463, %v2672
      %v2695 = vadd.f32 %v2468, %v2677
      %v2696 = vadd.f32 %v2471, %v2680
      %v2697 = vld [vmem:[#allocation2] sm:$0xff]
      %v2698 = vld [vmem:[#allocation2 + $0x8] sm:$0xff]
      %v2699 = vld [vmem:[#allocation2 + $0x10] sm:$0xff]
      %v2700 = vld [vmem:[#allocation2 + $0x18] sm:$0xff]
      %v2701 = vld [vmem:[#allocation2 + $0x20] sm:$0xff]
      %v2702 = vld [vmem:[#allocation2 + $0x28] sm:$0xff]
      %v2703 = vld [vmem:[#allocation2 + $0x30] sm:$0xff]
      %v2704 = vld [vmem:[#allocation2 + $0x38] sm:$0xff]
      %v2705 = vld [vmem:[#allocation2 + $0x40] sm:$0xff]
      %v2706 = vld [vmem:[#allocation2 + $0x48] sm:$0xff]
      %v2707 = vld [vmem:[#allocation2 + $0x50] sm:$0xff]
      %v2708 = vld [vmem:[#allocation2 + $0x58] sm:$0xff]
      %v2709 = vld [vmem:[#allocation2 + $0x60] sm:$0xff]
      %v2710 = vld [vmem:[#allocation2 + $0x68] sm:$0xff]
      %v2711 = vadd.f32 %v2697, %v2683
      %v2712 = vadd.f32 %v2698, %v2684
      %v2713 = vadd.f32 %v2699, %v2685
      %v2714 = vadd.f32 %v2700, %v2686
      %v2715 = vadd.f32 %v2701, %v2687
      %v2716 = vadd.f32 %v2702, %v2688
      %v2717 = vadd.f32 %v2703, %v2689
      %v2718 = vadd.f32 %v2704, %v2690
      %v2719 = vadd.f32 %v2705, %v2691
      %v2720 = vadd.f32 %v2706, %v2692
      %v2721 = vadd.f32 %v2707, %v2693
      %v2722 = vadd.f32 %v2708, %v2694
      %v2723 = vadd.f32 %v2709, %v2695
      %v2724 = vadd.f32 %v2710, %v2696
      %2725 = vst.msk [vmem:[#allocation2] sm:$0xff] %vm1139, %v2711
      %2726 = vst.msk [vmem:[#allocation2 + $0x8] sm:$0xff] %vm1139, %v2712
      %2727 = vst.msk [vmem:[#allocation2 + $0x10] sm:$0xff] %vm1139, %v2713
      %2728 = vst.msk [vmem:[#allocation2 + $0x18] sm:$0xff] %vm1139, %v2714
      %2729 = vst.msk [vmem:[#allocation2 + $0x20] sm:$0xff] %vm1139, %v2715
      %2730 = vst.msk [vmem:[#allocation2 + $0x28] sm:$0xff] %vm1139, %v2716
      %2731 = vst.msk [vmem:[#allocation2 + $0x30] sm:$0xff] %vm1139, %v2717
      %2732 = vst.msk [vmem:[#allocation2 + $0x38] sm:$0xff] %vm1139, %v2718
      %2733 = vst.msk [vmem:[#allocation2 + $0x40] sm:$0xff] %vm1139, %v2719
      %2734 = vst.msk [vmem:[#allocation2 + $0x48] sm:$0xff] %vm1139, %v2720
      %2735 = vst.msk [vmem:[#allocation2 + $0x50] sm:$0xff] %vm1139, %v2721
      %2736 = vst.msk [vmem:[#allocation2 + $0x58] sm:$0xff] %vm1139, %v2722
      %2737 = vst.msk [vmem:[#allocation2 + $0x60] sm:$0xff] %vm1139, %v2723
      %2738 = vst.msk [vmem:[#allocation2 + $0x68] sm:$0xff] %vm1139, %v2724
      %v2739 = vld [vmem:[%s332] sm:$0xf]
      %v2740 = vld [vmem:[%s332 + $0x4] sm:$0xf]
      %v2741 = vld [vmem:[%s2 + $0x30] sm:$0xf]
      %v2742 = vld [vmem:[%s2 + $0x34] sm:$0xf]
      %v2743 = vld [vmem:[%s332 + $0x8] sm:$0x1]
      %v2744 = vld [vmem:[%s2 + $0x38] sm:$0xf]
      %v2745 = vld [vmem:[%s2 + $0x3c] sm:$0xf]
      %v2749 = vunpack.c.l.b16 %v2739
      %v2750 = vunpack.c.l.b16 %v2740
      %v2751 = vunpack.c.l.b16 %v2743
      %v2752 = vpack.c.b16 %v2750, %v2749
      %v2753 = vpack.c.b16 %v2751, %v2751
      %vm2754 = vsmask.f32 7424
      %v2756 = vshrl.u32 %v2752, 16
      %v2758 = vshll.u32 %v2752, 16
      %v2760 = vrot.slane %v2758, 1
      %v2761 = vor.u32 %v2756, %v2760
      %v2763 = vshll.u32 %v2753, 16
      %v2765 = vrot.slane %v2763, 1
      %v2766 = vsel %vm2754, %v2761, %v2765
      %v2769 = vunpack.c.l.b16 %v2744
      %v2770 = vunpack.c.l.b16 %v2745
      %v2771 = vpack.c.b16 %v2770, %v2769
      %v2774 = vsel %vm598, %v2766, 0
      %2776 = vmatprep.subr.bf16.mxu0 0
      %2777 = vmatpush1.bf16.msra.mxu0 %v2771
      %2778 = vmatprep.subr.bf16.mxu0 0
      %2779 = vmatpush1.bf16.msra.mxu0 0
      %2780 = vmatprep.subr.bf16.mxu0 0
      %2781 = vmatpush1.bf16.msra.mxu0 0
      %2782 = vmatprep.subr.bf16.mxu0 0
      %2783 = vmatpush1.bf16.msra.mxu0 0
      %2784 = vmatprep.subr.bf16.mxu0 0
      %2785 = vmatpush1.bf16.msra.mxu0 0
      %2786 = vmatprep.subr.bf16.mxu0 0
      %2787 = vmatpush1.bf16.msra.mxu0 0
      %2788 = vmatprep.subr.bf16.mxu0 0
      %2789 = vmatpush1.bf16.msra.mxu0 0
      %2790 = vmatprep.subr.bf16.mxu0 0
      %2791 = vmatpush1.bf16.msra.mxu0 0
      %2792 = vmatprep.subr.bf16.mxu0 0
      %2793 = vmatpush1.bf16.msra.mxu0 0
      %2794 = vmatprep.subr.bf16.mxu0 0
      %2795 = vmatpush1.bf16.msra.mxu0 0
      %2796 = vmatprep.subr.bf16.mxu0 0
      %2797 = vmatpush1.bf16.msra.mxu0 0
      %2798 = vmatprep.subr.bf16.mxu0 0
      %2799 = vmatpush1.bf16.msra.mxu0 0
      %2800 = vmatprep.subr.bf16.mxu0 0
      %2801 = vmatpush1.bf16.msra.mxu0 0
      %2802 = vmatprep.subr.bf16.mxu0 0
      %2803 = vmatpush1.bf16.msra.mxu0 0
      %2804 = vmatprep.subr.bf16.mxu0 0
      %2805 = vmatpush1.bf16.msra.mxu0 0
      %2806 = vmatprep.subr.bf16.mxu0 0
      %2807 = vmatpush1.bf16.msra.mxu0 0
      %2808 = vmatprep.mubr.bf16.mxu0 0
      %2809 = vmatmul.mubr.bf16.gmra.mrb[0].mxu0 %v2774
      %v2810 = vpop.f32.mrb[0].mxu0
      %v2811 = vadd.f32 0.0, %v2810
      %v2812 = vpop.f32.mrb[0].mxu0
      %v2813 = vpop.f32.mrb[0].mxu0
      %v2814 = vadd.f32 0.0, %v2813
      %v2815 = vpop.f32.mrb[0].mxu0
      %2816 = vdwg.mxu0
      %v2819 = vunpack.c.l.b16 %v2741
      %v2820 = vunpack.c.l.b16 %v2742
      %v2821 = vpack.c.b16 %v2820, %v2819
      %v2823 = vsel %vm598, %v2752, 0
      %2825 = vmatprep.subr.bf16.mxu0 0
      %2826 = vmatpush1.bf16.msra.mxu0 %v2821
      %2827 = vmatprep.subr.bf16.mxu0 0
      %2828 = vmatpush1.bf16.msra.mxu0 0
      %2829 = vmatprep.subr.bf16.mxu0 0
      %2830 = vmatpush1.bf16.msra.mxu0 0
      %2831 = vmatprep.subr.bf16.mxu0 0
      %2832 = vmatpush1.bf16.msra.mxu0 0
      %2833 = vmatprep.subr.bf16.mxu0 0
      %2834 = vmatpush1.bf16.msra.mxu0 0
      %2835 = vmatprep.subr.bf16.mxu0 0
      %2836 = vmatpush1.bf16.msra.mxu0 0
      %2837 = vmatprep.subr.bf16.mxu0 0
      %2838 = vmatpush1.bf16.msra.mxu0 0
      %2839 = vmatprep.subr.bf16.mxu0 0
      %2840 = vmatpush1.bf16.msra.mxu0 0
      %2841 = vmatprep.subr.bf16.mxu0 0
      %2842 = vmatpush1.bf16.msra.mxu0 0
      %2843 = vmatprep.subr.bf16.mxu0 0
      %2844 = vmatpush1.bf16.msra.mxu0 0
      %2845 = vmatprep.subr.bf16.mxu0 0
      %2846 = vmatpush1.bf16.msra.mxu0 0
      %2847 = vmatprep.subr.bf16.mxu0 0
      %2848 = vmatpush1.bf16.msra.mxu0 0
      %2849 = vmatprep.subr.bf16.mxu0 0
      %2850 = vmatpush1.bf16.msra.mxu0 0
      %2851 = vmatprep.subr.bf16.mxu0 0
      %2852 = vmatpush1.bf16.msra.mxu0 0
      %2853 = vmatprep.subr.bf16.mxu0 0
      %2854 = vmatpush1.bf16.msra.mxu0 0
      %2855 = vmatprep.subr.bf16.mxu0 0
      %2856 = vmatpush1.bf16.msra.mxu0 0
      %2857 = vmatprep.mubr.bf16.mxu0 0
      %2858 = vmatmul.mubr.bf16.gmra.mrb[0].mxu0 %v2823
      %v2859 = vpop.f32.mrb[0].mxu0
      %v2860 = vadd.f32 %v2811, %v2859
      %v2861 = vpop.f32.mrb[0].mxu0
      %v2862 = vpop.f32.mrb[0].mxu0
      %v2863 = vadd.f32 %v2814, %v2862
      %v2864 = vpop.f32.mrb[0].mxu0
      %2865 = vdwg.mxu0
      %v2866 = vld [vmem:[%s332] sm:$0xe]
      %v2867 = vld [vmem:[%s2 + $0x40] sm:$0xf]
      %v2868 = vld [vmem:[%s2 + $0x44] sm:$0xf]
      %v2870 = vunpack.c.l.b16 %v2866
      %v2871 = vpack.c.b16 %v2750, %v2870
      %vm2872 = vcmask 1046528
      %v2873 = vrot.slane %v2871, 1
      %v2874 = vrot.slane %v2753, 1
      %v2875 = vsel %vm2872, %v2873, %v2874
      %v2878 = vunpack.c.l.b16 %v2867
      %v2879 = vunpack.c.l.b16 %v2868
      %v2880 = vpack.c.b16 %v2879, %v2878
      %v2883 = vsel %vm598, %v2875, 0
      %2885 = vmatprep.subr.bf16.mxu0 0
      %2886 = vmatpush1.bf16.msra.mxu0 %v2880
      %2887 = vmatprep.subr.bf16.mxu0 0
      %2888 = vmatpush1.bf16.msra.mxu0 0
      %2889 = vmatprep.subr.bf16.mxu0 0
      %2890 = vmatpush1.bf16.msra.mxu0 0
      %2891 = vmatprep.subr.bf16.mxu0 0
      %2892 = vmatpush1.bf16.msra.mxu0 0
      %2893 = vmatprep.subr.bf16.mxu0 0
      %2894 = vmatpush1.bf16.msra.mxu0 0
      %2895 = vmatprep.subr.bf16.mxu0 0
      %2896 = vmatpush1.bf16.msra.mxu0 0
      %2897 = vmatprep.subr.bf16.mxu0 0
      %2898 = vmatpush1.bf16.msra.mxu0 0
      %2899 = vmatprep.subr.bf16.mxu0 0
      %2900 = vmatpush1.bf16.msra.mxu0 0
      %2901 = vmatprep.subr.bf16.mxu0 0
      %2902 = vmatpush1.bf16.msra.mxu0 0
      %2903 = vmatprep.subr.bf16.mxu0 0
      %2904 = vmatpush1.bf16.msra.mxu0 0
      %2905 = vmatprep.subr.bf16.mxu0 0
      %2906 = vmatpush1.bf16.msra.mxu0 0
      %2907 = vmatprep.subr.bf16.mxu0 0
      %2908 = vmatpush1.bf16.msra.mxu0 0
      %2909 = vmatprep.subr.bf16.mxu0 0
      %2910 = vmatpush1.bf16.msra.mxu0 0
      %2911 = vmatprep.subr.bf16.mxu0 0
      %2912 = vmatpush1.bf16.msra.mxu0 0
      %2913 = vmatprep.subr.bf16.mxu0 0
      %2914 = vmatpush1.bf16.msra.mxu0 0
      %2915 = vmatprep.subr.bf16.mxu0 0
      %2916 = vmatpush1.bf16.msra.mxu0 0
      %2917 = vmatprep.mubr.bf16.mxu0 0
      %2918 = vmatmul.mubr.bf16.gmra.mrb[0].mxu0 %v2883
      %v2919 = vpop.f32.mrb[0].mxu0
      %v2920 = vadd.f32 0.0, %v2919
      %v2921 = vpop.f32.mrb[0].mxu0
      %v2922 = vpop.f32.mrb[0].mxu0
      %v2923 = vadd.f32 0.0, %v2922
      %v2924 = vpop.f32.mrb[0].mxu0
      %2925 = vdwg.mxu0
      %v2926 = vadd.f32 %v2860, %v2920
      %v2927 = vadd.f32 %v2863, %v2923
      %v2928 = vld [vmem:[#allocation2 + $0x70] sm:$0xff]
      %v2929 = vld [vmem:[#allocation2 + $0x78] sm:$0xff]
      %v2930 = vadd.f32 %v2928, %v2926
      %v2931 = vadd.f32 %v2929, %v2927
      %2932 = vst.msk [vmem:[#allocation2 + $0x70] sm:$0xff] %vm1139, %v2930
      %2933 = vst.msk [vmem:[#allocation2 + $0x78] sm:$0xff] %vm1139, %v2931
      %v2934 = vld [vmem:[#allocation2] sm:$0xff]
      %v2935 = vld [vmem:[#allocation2 + $0x8] sm:$0xff]
      %v2936 = vld [vmem:[#allocation2 + $0x10] sm:$0xff]
      %v2937 = vld [vmem:[#allocation2 + $0x18] sm:$0xff]
      %v2938 = vld [vmem:[#allocation2 + $0x20] sm:$0xff]
      %v2939 = vld [vmem:[#allocation2 + $0x28] sm:$0xff]
      %v2940 = vld [vmem:[#allocation2 + $0x30] sm:$0xff]
      %v2941 = vld [vmem:[#allocation2 + $0x38] sm:$0xff]
      %v2942 = vld [vmem:[#allocation2 + $0x40] sm:$0xff]
      %v2943 = vld [vmem:[#allocation2 + $0x48] sm:$0xff]
      %v2944 = vld [vmem:[#allocation2 + $0x50] sm:$0xff]
      %v2945 = vld [vmem:[#allocation2 + $0x58] sm:$0xff]
      %v2946 = vld [vmem:[#allocation2 + $0x60] sm:$0xff]
      %v2947 = vld [vmem:[#allocation2 + $0x68] sm:$0xff]
      %v2948 = vld [vmem:[#allocation2 + $0x70] sm:$0xff]
      %v2949 = vld [vmem:[#allocation2 + $0x78] sm:$0xff]
      %v2950 = vld [vmem:[%s3] sm:$0x1]
      %v2952 = vlaneseq
      %v2953 = vshrl.u32 %v2952, 7
      %v2954 = vsub.s32 0, %v2953
      %v2955 = vrot.slane %v2950, %v2954
      %v2957 = vmul.f32 %v2934, %v2955
      %v2958 = vmul.f32 %v2935, %v2955
      %v2959 = vmul.f32 %v2936, %v2955
      %v2960 = vmul.f32 %v2937, %v2955
      %v2961 = vmul.f32 %v2938, %v2955
      %v2962 = vmul.f32 %v2939, %v2955
      %v2963 = vmul.f32 %v2940, %v2955
      %v2964 = vmul.f32 %v2941, %v2955
      %v2965 = vmul.f32 %v2942, %v2955
      %v2966 = vmul.f32 %v2943, %v2955
      %v2967 = vmul.f32 %v2944, %v2955
      %v2968 = vmul.f32 %v2945, %v2955
      %v2969 = vmul.f32 %v2946, %v2955
      %v2970 = vmul.f32 %v2947, %v2955
      %v2971 = vmul.f32 %v2948, %v2955
      %v2972 = vmul.f32 %v2949, %v2955
      %v2973 = vld [vmem:[%s4] sm:$0x1]
      %v2975 = vlaneseq
      %v2976 = vshrl.u32 %v2975, 7
      %v2977 = vsub.s32 0, %v2976
      %v2978 = vrot.slane %v2973, %v2977
      %v2980 = vadd.f32 %v2957, %v2978
      %v2981 = vadd.f32 %v2958, %v2978
      %v2982 = vadd.f32 %v2959, %v2978
      %v2983 = vadd.f32 %v2960, %v2978
      %v2984 = vadd.f32 %v2961, %v2978
      %v2985 = vadd.f32 %v2962, %v2978
      %v2986 = vadd.f32 %v2963, %v2978
      %v2987 = vadd.f32 %v2964, %v2978
      %v2988 = vadd.f32 %v2965, %v2978
      %v2989 = vadd.f32 %v2966, %v2978
      %v2990 = vadd.f32 %v2967, %v2978
      %v2991 = vadd.f32 %v2968, %v2978
      %v2992 = vadd.f32 %v2969, %v2978
      %v2993 = vadd.f32 %v2970, %v2978
      %v2994 = vadd.f32 %v2971, %v2978
      %v2995 = vadd.f32 %v2972, %v2978
      %vm2996 = vcmp.ge.f32.partialorder %v2980, 0.0
      %vm2997 = vcmp.ge.f32.partialorder %v2981, 0.0
      %vm2998 = vcmp.ge.f32.partialorder %v2982, 0.0
      %vm2999 = vcmp.ge.f32.partialorder %v2983, 0.0
      %vm3000 = vcmp.ge.f32.partialorder %v2984, 0.0
      %vm3001 = vcmp.ge.f32.partialorder %v2985, 0.0
      %vm3002 = vcmp.ge.f32.partialorder %v2986, 0.0
      %vm3003 = vcmp.ge.f32.partialorder %v2987, 0.0
      %vm3004 = vcmp.ge.f32.partialorder %v2988, 0.0
      %vm3005 = vcmp.ge.f32.partialorder %v2989, 0.0
      %vm3006 = vcmp.ge.f32.partialorder %v2990, 0.0
      %vm3007 = vcmp.ge.f32.partialorder %v2991, 0.0
      %vm3008 = vcmp.ge.f32.partialorder %v2992, 0.0
      %vm3009 = vcmp.ge.f32.partialorder %v2993, 0.0
      %vm3010 = vcmp.ge.f32.partialorder %v2994, 0.0
      %vm3011 = vcmp.ge.f32.partialorder %v2995, 0.0
      %v3012 = vmul.f32 %v2980, 0.2
      %v3013 = vmul.f32 %v2981, 0.2
      %v3014 = vmul.f32 %v2982, 0.2
      %v3015 = vmul.f32 %v2983, 0.2
      %v3016 = vmul.f32 %v2984, 0.2
      %v3017 = vmul.f32 %v2985, 0.2
      %v3018 = vmul.f32 %v2986, 0.2
      %v3019 = vmul.f32 %v2987, 0.2
      %v3020 = vmul.f32 %v2988, 0.2
      %v3021 = vmul.f32 %v2989, 0.2
      %v3022 = vmul.f32 %v2990, 0.2
      %v3023 = vmul.f32 %v2991, 0.2
      %v3024 = vmul.f32 %v2992, 0.2
      %v3025 = vmul.f32 %v2993, 0.2
      %v3026 = vmul.f32 %v2994, 0.2
      %v3027 = vmul.f32 %v2995, 0.2
      %v3028 = vsel %vm2996, %v2980, %v3012
      %v3029 = vsel %vm2997, %v2981, %v3013
      %v3030 = vsel %vm2998, %v2982, %v3014
      %v3031 = vsel %vm2999, %v2983, %v3015
      %v3032 = vsel %vm3000, %v2984, %v3016
      %v3033 = vsel %vm3001, %v2985, %v3017
      %v3034 = vsel %vm3002, %v2986, %v3018
      %v3035 = vsel %vm3003, %v2987, %v3019
      %v3036 = vsel %vm3004, %v2988, %v3020
      %v3037 = vsel %vm3005, %v2989, %v3021
      %v3038 = vsel %vm3006, %v2990, %v3022
      %v3039 = vsel %vm3007, %v2991, %v3023
      %v3040 = vsel %vm3008, %v2992, %v3024
      %v3041 = vsel %vm3009, %v2993, %v3025
      %v3042 = vsel %vm3010, %v2994, %v3026
      %v3043 = vsel %vm3011, %v2995, %v3027
      %v3044 = vpack.c.bf16 %v3029, %v3028
      %v3045 = vpack.c.bf16 %v3031, %v3030
      %v3046 = vpack.c.bf16 %v3033, %v3032
      %v3047 = vpack.c.bf16 %v3035, %v3034
      %v3048 = vpack.c.bf16 %v3037, %v3036
      %v3049 = vpack.c.bf16 %v3039, %v3038
      %v3050 = vpack.c.bf16 %v3041, %v3040
      %v3051 = vpack.c.bf16 %v3043, %v3042
      %v3060 = vunpack.c.l.b16 %v3044
      %v3061 = vunpack.c.h.b16 %v3044
      %v3062 = vunpack.c.l.b16 %v3045
      %v3063 = vunpack.c.h.b16 %v3045
      %v3064 = vunpack.c.l.b16 %v3046
      %v3065 = vunpack.c.h.b16 %v3046
      %v3066 = vunpack.c.l.b16 %v3047
      %v3067 = vunpack.c.h.b16 %v3047
      %v3068 = vunpack.c.l.b16 %v3048
      %v3069 = vunpack.c.h.b16 %v3048
      %v3070 = vunpack.c.l.b16 %v3049
      %v3071 = vunpack.c.h.b16 %v3049
      %v3072 = vunpack.c.l.b16 %v3050
      %v3073 = vunpack.c.h.b16 %v3050
      %v3074 = vunpack.c.l.b16 %v3051
      %v3075 = vunpack.c.h.b16 %v3051
      %v3076 = vpack.c.b16 %v3060, %v3060
      %v3077 = vpack.c.b16 %v3061, %v3061
      %v3078 = vpack.c.b16 %v3062, %v3062
      %v3079 = vpack.c.b16 %v3063, %v3063
      %v3080 = vpack.c.b16 %v3064, %v3064
      %v3081 = vpack.c.b16 %v3065, %v3065
      %v3082 = vpack.c.b16 %v3066, %v3066
      %v3083 = vpack.c.b16 %v3067, %v3067
      %v3084 = vpack.c.b16 %v3068, %v3068
      %v3085 = vpack.c.b16 %v3069, %v3069
      %v3086 = vpack.c.b16 %v3070, %v3070
      %v3087 = vpack.c.b16 %v3071, %v3071
      %v3088 = vpack.c.b16 %v3072, %v3072
      %v3089 = vpack.c.b16 %v3073, %v3073
      %v3090 = vpack.c.b16 %v3074, %v3074
      %v3091 = vpack.c.b16 %v3075, %v3075
      %vm3108 = vcmask 519168
      %3109 = vst.msk [vmem:[%s341] sm:$0xf] %vm3108, %v3076
      %3110 = vst.msk [vmem:[%s341 + $0x4] sm:$0xf] %vm3108, %v3077
      %3111 = vst.msk [vmem:[%s341 + $0x8] sm:$0xf] %vm3108, %v3078
      %3112 = vst.msk [vmem:[%s341 + $0xc] sm:$0xf] %vm3108, %v3079
      %3113 = vst.msk [vmem:[%s341 + $0x10] sm:$0xf] %vm3108, %v3080
      %3114 = vst.msk [vmem:[%s341 + $0x14] sm:$0xf] %vm3108, %v3081
      %3115 = vst.msk [vmem:[%s341 + $0x18] sm:$0xf] %vm3108, %v3082
      %3116 = vst.msk [vmem:[%s341 + $0x1c] sm:$0xf] %vm3108, %v3083
      %3117 = vst.msk [vmem:[%s341 + $0x20] sm:$0xf] %vm3108, %v3084
      %3118 = vst.msk [vmem:[%s341 + $0x24] sm:$0xf] %vm3108, %v3085
      %3119 = vst.msk [vmem:[%s341 + $0x28] sm:$0xf] %vm3108, %v3086
      %3120 = vst.msk [vmem:[%s341 + $0x2c] sm:$0xf] %vm3108, %v3087
      %3121 = vst.msk [vmem:[%s341 + $0x30] sm:$0xf] %vm3108, %v3088
      %3122 = vst.msk [vmem:[%s341 + $0x34] sm:$0xf] %vm3108, %v3089
      %3123 = vst.msk [vmem:[%s341 + $0x38] sm:$0xf] %vm3108, %v3090
      %3124 = vst.msk [vmem:[%s341 + $0x3c] sm:$0xf] %vm3108, %v3091
      %s3125 = smul.u32 %s20, 2
      %s3126 = sadd.s32 %s3125, %s21
      %p3127 = scmp.lt.s32.totalorder %s3126, 1
      %s3128 = scalar_select %p3127, %s3126, 1
      %s3129 = smul.addr %s3128, 16
      %s3130 = smul.addr %s3129, 4
      %s3131 = scalar_lea.vmem %s5, %s3130
      // Predicated region
      $region41: #{tpu_custom_call.1} parent=39 // pred_check
        %p3132 = pneg %p173
      $region42: #{tpu_custom_call.1} parent=39 // pred_check_branch
        %3134 = sbr.rel (%p3132) target = $region44
      $region43: #{tpu_custom_call.1} parent=39 // pred_region
        %s3135 = smul.u32 %s20, 2
        %s3136 = sadd.s32 %s3135, %s21
      $region44: #{tpu_custom_call.1} parent=39 // pred_fallthru
        _
    $region40: #{tpu_custom_call.1} parent=5 // pred_fallthru
      _
    %p3137 = scmp.le.s32.totalorder 2, %s11
    // Predicated region
    $region45: #{tpu_custom_call.1} parent=5 // pred_check
      %p3138 = pneg %p3137
    $region46: #{tpu_custom_call.1} parent=5 // pred_check_branch
      %3140 = sbr.rel (%p3138) target = $region48
    $region47: #{tpu_custom_call.1} parent=5 // pred_region
      %s3141 = ssub.s32 %s11, 2
      // Predicated region
      $region49: #{tpu_custom_call.1} parent=47 // pred_check
        %p3142 = pneg %p179
      $region50: #{tpu_custom_call.1} parent=47 // pred_check_branch
        %3144 = sbr.rel (%p3142) target = $region52
      $region51: #{tpu_custom_call.1} parent=47 // pred_region
        %s3145 = smul.u32 %s22, 2
        %s3146 = sadd.s32 %s3145, %s23
        %p3147 = scmp.lt.s32.totalorder %s3146, 1
        %s3148 = scalar_select %p3147, %s3146, 1
        %s3149 = smul.addr %s3148, 16
        %s3150 = smul.addr %s3149, 4
        %s3151 = scalar_lea.vmem %s5, %s3150
      $region52: #{tpu_custom_call.1} parent=47 // pred_fallthru
        _
    $region48: #{tpu_custom_call.1} parent=5 // pred_fallthru
      _
  $region6: #{tpu_custom_call.1} parent=0 // loop_footer
    %s15 = sadd.s32 1, %s11
  $region7: #{tpu_custom_call.1} parent=0 // loop_footer_branch
    %10 = sbr.rel target = $region3
  $region8: #{tpu_custom_call.1} parent=0 // loop_exit
    _

</llo_original>
